<compile_context>
chip_gen: v7x
topology: tpu7x:2x2x1
jax: 0.10.0
libtpu: 0.0.40
codegen_flags: <defaults>
</compile_context>

<pallas_src>
import functools
import math

import jax
import jax.numpy as jnp
from jax.experimental import pallas as pl
from jax.experimental.pallas import tpu as pltpu


# -----------------------------------------------------------------------------
# tiling / VMEM budget helpers
# -----------------------------------------------------------------------------
_VMEM_LIMIT = 48 * 1024 * 1024   # explicit budget: < v7x 64 MiB physical
_ROW_CAP = 512                   # sublane-axis tile cap (tm)
_LANE_CAP = 3072                 # lane-axis tile cap (tn / tk)


def _pick_tile(dim, granule, cap):
    """Largest multiple of `granule` that divides `dim` and is <= cap, else full dim."""
    best = 0
    for t in range(granule, min(dim, cap) + 1, granule):
        if dim % t == 0:
            best = t
    return best if best > 0 else dim


def _round_up(x, m):
    return ((x + m - 1) // m) * m


def _cparams(semantics):
    return pltpu.CompilerParams(dimension_semantics=semantics,
                                vmem_limit_bytes=_VMEM_LIMIT)


# -----------------------------------------------------------------------------
# Fused LayerNorm + Linear (+ optional tanh-GELU)
# -----------------------------------------------------------------------------
def _ln_linear_kernel(x_ref, g_ref, b_ref, w_ref, bias_ref, o_ref, *, activation):
    x = x_ref[...].astype(jnp.float32)
    mean = jnp.mean(x, axis=-1, keepdims=True)
    var = jnp.mean(jnp.square(x - mean), axis=-1, keepdims=True)
    xn = (x - mean) * jax.lax.rsqrt(var + 1e-5)
    xn = xn * g_ref[...].astype(jnp.float32) + b_ref[...].astype(jnp.float32)
    y = jnp.dot(xn.astype(w_ref.dtype), w_ref[...],
                preferred_element_type=jnp.float32)
    y = y + bias_ref[...].astype(jnp.float32)
    if activation == "gelu_tanh":
        c = math.sqrt(2.0 / math.pi)
        y = 0.5 * y * (1.0 + jnp.tanh(c * (y + 0.044715 * y * y * y)))
    o_ref[...] = y.astype(o_ref.dtype)


def ln_linear(x2d, gamma, beta, w, bias, *, activation=None, out_dtype=None):
    M, K = x2d.shape
    N = w.shape[1]
    tm = _pick_tile(M, 8, _ROW_CAP)
    tn = _pick_tile(N, 128, _LANE_CAP)       # usually full 3C / 4C -> 1 N step
    out_dtype = out_dtype or x2d.dtype
    kern = functools.partial(_ln_linear_kernel, activation=activation)
    return pl.pallas_call(
        kern,
        out_shape=jax.ShapeDtypeStruct((M, N), out_dtype),
        grid=(M // tm, N // tn),
        in_specs=[
            pl.BlockSpec((tm, K), lambda i, j: (i, 0)),
            pl.BlockSpec((1, K), lambda i, j: (0, 0)),
            pl.BlockSpec((1, K), lambda i, j: (0, 0)),
            pl.BlockSpec((K, tn), lambda i, j: (0, j)),
            pl.BlockSpec((1, tn), lambda i, j: (0, j)),
        ],
        out_specs=pl.BlockSpec((tm, tn), lambda i, j: (i, j)),
        compiler_params=_cparams(("parallel", "parallel")),
    )(x2d, gamma.reshape(1, K), beta.reshape(1, K), w, bias.reshape(1, N))


# -----------------------------------------------------------------------------
# K-tiled Linear with f32 accumulator, fused bias + residual add
# -----------------------------------------------------------------------------
def _linear_acc_kernel(*refs, has_bias, has_res):
    it = iter(refs)
    x_ref = next(it)
    w_ref = next(it)
    bias_ref = next(it) if has_bias else None
    res_ref = next(it) if has_res else None
    o_ref = next(it)
    acc_ref = next(it)

    k = pl.program_id(2)

    @pl.when(k == 0)
    def _():
        acc_ref[...] = jnp.zeros_like(acc_ref)

    acc_ref[...] += jnp.dot(x_ref[...], w_ref[...],
                            preferred_element_type=jnp.float32)

    @pl.when(k == pl.num_programs(2) - 1)
    def _():
        y = acc_ref[...]
        if has_bias:
            y = y + bias_ref[...].astype(jnp.float32)
        if has_res:
            y = y + res_ref[...].astype(jnp.float32)
        o_ref[...] = y.astype(o_ref.dtype)


def linear_residual(x2d, w, bias=None, residual=None, *, out_dtype=None):
    M, K = x2d.shape
    N = w.shape[1]
    tm = _pick_tile(M, 8, _ROW_CAP)
    tn = _pick_tile(N, 128, _LANE_CAP)
    tk = _pick_tile(K, 128, _LANE_CAP)
    out_dtype = out_dtype or x2d.dtype
    has_bias = bias is not None
    has_res = residual is not None

    in_specs = [
        pl.BlockSpec((tm, tk), lambda i, j, k: (i, k)),
        pl.BlockSpec((tk, tn), lambda i, j, k: (k, j)),
    ]
    args = [x2d, w]
    if has_bias:
        in_specs.append(pl.BlockSpec((1, tn), lambda i, j, k: (0, j)))
        args.append(bias.reshape(1, N))
    if has_res:
        in_specs.append(pl.BlockSpec((tm, tn), lambda i, j, k: (i, j)))
        args.append(residual)

    kern = functools.partial(_linear_acc_kernel, has_bias=has_bias,
                             has_res=has_res)
    return pl.pallas_call(
        kern,
        out_shape=jax.ShapeDtypeStruct((M, N), out_dtype),
        grid=(M // tm, N // tn, K // tk),
        in_specs=in_specs,
        out_specs=pl.BlockSpec((tm, tn), lambda i, j, k: (i, j)),
        scratch_shapes=[pltpu.VMEM((tm, tn), jnp.float32)],
        compiler_params=_cparams(("parallel", "parallel", "arbitrary")),
    )(*args)


# -----------------------------------------------------------------------------
# Standalone LayerNorm (used once, before the vocab-sized lm_head matmul)
# -----------------------------------------------------------------------------
def _layer_norm_kernel(x_ref, g_ref, b_ref, o_ref):
    x = x_ref[...].astype(jnp.float32)
    mean = jnp.mean(x, axis=-1, keepdims=True)
    var = jnp.mean(jnp.square(x - mean), axis=-1, keepdims=True)
    xn = (x - mean) * jax.lax.rsqrt(var + 1e-5)
    o_ref[...] = (xn * g_ref[...].astype(jnp.float32)
                  + b_ref[...].astype(jnp.float32)).astype(o_ref.dtype)


def layer_norm(x2d, gamma, beta):
    M, K = x2d.shape
    tm = _pick_tile(M, 8, _ROW_CAP)
    return pl.pallas_call(
        _layer_norm_kernel,
        out_shape=jax.ShapeDtypeStruct((M, K), x2d.dtype),
        grid=(M // tm,),
        in_specs=[pl.BlockSpec((tm, K), lambda i: (i, 0)),
                  pl.BlockSpec((1, K), lambda i: (0, 0)),
                  pl.BlockSpec((1, K), lambda i: (0, 0))],
        out_specs=pl.BlockSpec((tm, K), lambda i: (i, 0)),
        compiler_params=_cparams(("parallel",)),
    )(x2d, gamma.reshape(1, K), beta.reshape(1, K))


# -----------------------------------------------------------------------------
# Flash-style causal self-attention
#   grid = (B, T/tq); all heads per step; K/V full-sequence blocks resident in
#   VMEM per batch; in-kernel causal KV loop (masked work only on the diagonal).
# -----------------------------------------------------------------------------
def _flash_kernel(q_ref, k_ref, v_ref, o_ref, *, scale, tq):
    H, T, hs = k_ref.shape
    qi = pl.program_id(1)

    # scale q once per grid step (f32 multiply, then back to bf16 for the MXU)
    q = (q_ref[...].astype(jnp.float32) * scale).astype(q_ref.dtype)  # (H,tq,hs)

    def attend(j, carry, masked):
        m, l, acc = carry
        start = pl.multiple_of(j * tq, tq)
        kj = k_ref[:, pl.ds(start, tq), :]                            # (H,tq,hs)
        vj = v_ref[:, pl.ds(start, tq), :]
        s = jax.lax.dot_general(q, kj, (((2,), (2,)), ((0,), (0,))),
                                preferred_element_type=jnp.float32)   # (H,tq,tq)
        if masked:  # only the diagonal block pays for the causal mask
            row = jax.lax.broadcasted_iota(jnp.int32, (tq, tq), 0)
            col = jax.lax.broadcasted_iota(jnp.int32, (tq, tq), 1)
            s = jnp.where((col <= row)[None, :, :], s, -1e30)
        m_new = jnp.maximum(m, jnp.max(s, axis=-1, keepdims=True))
        alpha = jnp.exp(m - m_new)
        p = jnp.exp(s - m_new)
        l_new = alpha * l + jnp.sum(p, axis=-1, keepdims=True)
        acc_new = alpha * acc + jax.lax.dot_general(
            p.astype(vj.dtype), vj, (((2,), (1,)), ((0,), (0,))),
            preferred_element_type=jnp.float32)                        # (H,tq,hs)
        return m_new, l_new, acc_new

    m0 = jnp.full((H, tq, 1), -1e30, jnp.float32)
    l0 = jnp.zeros((H, tq, 1), jnp.float32)
    acc0 = jnp.zeros((H, tq, hs), jnp.float32)

    # strictly-below-diagonal KV blocks: unmasked, trip count = qi
    carry = jax.lax.fori_loop(0, qi, lambda j, c: attend(j, c, False),
                              (m0, l0, acc0))
    # diagonal block with the in-block causal mask
    m, l, acc = attend(qi, carry, True)

    o_ref[...] = (acc * pl.reciprocal(l, approx=True)).astype(o_ref.dtype)


def flash_attention(q, k, v, *, tq=256):
    # q, k, v: (B, H, T, hs)
    B, H, T, hs = q.shape
    tq = _pick_tile(T, 8, min(tq, T))
    scale = 1.0 / math.sqrt(hs)
    kern = functools.partial(_flash_kernel, scale=scale, tq=tq)
    # TODO(synk): pack >=2 heads into a lane-dense (tq, 2*hs) output tile (and
    # emit q/k/v head-major straight from the QKV matmul) to get unmasked 128-
    # lane stores when hs < 128.
    return pl.pallas_call(
        kern,
        out_shape=jax.ShapeDtypeStruct((B, H, T, hs), q.dtype),
        grid=(B, T // tq),
        in_specs=[
            pl.BlockSpec((None, H, tq, hs), lambda b, i: (b, 0, i, 0)),
            pl.BlockSpec((None, H, T, hs), lambda b, i: (b, 0, 0, 0)),   # resident per b
            pl.BlockSpec((None, H, T, hs), lambda b, i: (b, 0, 0, 0)),   # resident per b
        ],
        out_specs=pl.BlockSpec((None, H, tq, hs), lambda b, i: (b, 0, i, 0)),
        compiler_params=_cparams(("parallel", "arbitrary")),
    )(q, k, v)


# -----------------------------------------------------------------------------
# Parameter construction (deterministic, synthetic, bf16)
# -----------------------------------------------------------------------------
def init_params(key, *, vocab_size, n_ctx, n_layer, n_head, n_embd,
                dtype=jnp.bfloat16):
    C = n_embd
    keys = jax.random.split(key, 2 + 4 * n_layer)
    ki = iter(keys)

    def normal(k, shape, std=0.02):
        return (jax.random.normal(k, shape, dtype=jnp.float32) * std).astype(dtype)

    wte = normal(next(ki), (vocab_size, C))
    # tied lm_head weight, pre-transposed and zero-padded so the vocab axis
    # tiles (50257 -> 50688 at real GPT-2 size; identity at the demo size).
    vp_granule = 1536 if vocab_size >= 1536 else 128
    vp = _round_up(vocab_size, vp_granule)
    wte_t = jnp.zeros((C, vp), dtype).at[:, :vocab_size].set(wte.T)

    params = {
        "wte": wte,
        "wte_t": wte_t,
        "wpe": normal(next(ki), (n_ctx, C)),
        "ln_f_g": jnp.ones((C,), dtype),
        "ln_f_b": jnp.zeros((C,), dtype),
        "blocks": [],
    }
    for _ in range(n_layer):
        params["blocks"].append({
            "ln1_g": jnp.ones((C,), dtype),
            "ln1_b": jnp.zeros((C,), dtype),
            "attn_w": normal(next(ki), (C, 3 * C)),
            "attn_b": jnp.zeros((3 * C,), dtype),
            "proj_w": normal(next(ki), (C, C)),
            "proj_b": jnp.zeros((C,), dtype),
            "ln2_g": jnp.ones((C,), dtype),
            "ln2_b": jnp.zeros((C,), dtype),
            "fc_w": normal(next(ki), (C, 4 * C)),
            "fc_b": jnp.zeros((4 * C,), dtype),
            "mproj_w": normal(next(ki), (4 * C, C)),
            "mproj_b": jnp.zeros((C,), dtype),
        })
    return params


# -----------------------------------------------------------------------------
# Forward pass (gathers / reshapes in JAX, hot paths in Pallas kernels)
# -----------------------------------------------------------------------------
def gpt2_forward(params, idx, *, n_head):
    B, T = idx.shape
    V, C = params["wte"].shape
    H = n_head
    hs = C // H

    # token + position embeddings (gather = glue in plain JAX)
    x = jnp.take(params["wte"], idx, axis=0) + params["wpe"][:T][None, :, :]
    x2 = x.reshape(B * T, C)

    for blk in params["blocks"]:
        # ---- attention sub-block: LN fused into the QKV matmul ----
        qkv = ln_linear(x2, blk["ln1_g"], blk["ln1_b"],
                        blk["attn_w"], blk["attn_b"])                # (B*T, 3C)
        # TODO(synk): emit q/k/v head-major from ln_linear's out_specs and write
        # the attention output directly as (B*T, C) to drop these two XLA
        # transposes per layer (~25-40% of per-layer activation HBM traffic).
        qkv = qkv.reshape(B, T, 3, H, hs).transpose(2, 0, 3, 1, 4)   # (3,B,H,T,hs)
        y = flash_attention(qkv[0], qkv[1], qkv[2])                  # (B,H,T,hs)
        y = y.transpose(0, 2, 1, 3).reshape(B * T, C)
        # attention projection: K-tiled accumulator + fused bias + residual add
        x2 = linear_residual(y, blk["proj_w"], blk["proj_b"], residual=x2)

        # ---- MLP sub-block: LN fused into fc matmul (+GELU) ----
        h = ln_linear(x2, blk["ln2_g"], blk["ln2_b"],
                      blk["fc_w"], blk["fc_b"], activation="gelu_tanh")
        x2 = linear_residual(h, blk["mproj_w"], blk["mproj_b"], residual=x2)

    # final LN (standalone so the vocab-sized matmul does not recompute it),
    # then tied lm_head as a plain K-tiled matmul against the pre-transposed,
    # zero-padded (C, Vp) weight; padded columns are sliced off.
    xf = layer_norm(x2, params["ln_f_g"], params["ln_f_b"])
    logits = linear_residual(xf, params["wte_t"], out_dtype=jnp.float32)
    # TODO(synk): write only the first V columns from the kernel (masked final
    # N block) to avoid this padded-logits slice copy at real vocab sizes.
    return logits[:, :V].reshape(B, T, V)


# -----------------------------------------------------------------------------
if __name__ == "__main__":
    # small, TPU-friendly config consistent with the GPT2Model forward
    vocab_size = 512
    n_ctx = 32
    n_layer = 2
    n_head = 4
    n_embd = 64
    B, T = 2, 16

    key = jax.random.PRNGKey(0)
    pkey, ikey = jax.random.split(key)
    params = init_params(pkey, vocab_size=vocab_size, n_ctx=n_ctx,
                         n_layer=n_layer, n_head=n_head, n_embd=n_embd)
    idx = jax.random.randint(ikey, (B, T), 0, vocab_size, dtype=jnp.int32)

    fwd = jax.jit(functools.partial(gpt2_forward, n_head=n_head))
    logits = fwd(params, idx)
    jax.block_until_ready(logits)
    assert logits.shape == (B, T, vocab_size)
    assert bool(jnp.all(jnp.isfinite(logits)))
    print("KERNEL_OK")
</pallas_src>

<mosaic_0001>
module attributes {stable_mosaic.version = 11 : i64} {
  func.func @_ln_linear_kernel(%arg0: i32, %arg1: i32, %arg2: memref<32x64xbf16, #tpu.memory_space<vmem>>, %arg3: memref<1x64xbf16, #tpu.memory_space<vmem>>, %arg4: memref<1x64xbf16, #tpu.memory_space<vmem>>, %arg5: memref<64x192xbf16, #tpu.memory_space<vmem>>, %arg6: memref<1x192xbf16, #tpu.memory_space<vmem>>, %arg7: memref<32x192xbf16, #tpu.memory_space<vmem>>) attributes {dimension_semantics = [#tpu.dimension_semantics<parallel>, #tpu.dimension_semantics<parallel>], iteration_bounds = array<i64: 1, 1>, scalar_prefetch = 0 : i64, scratch_operands = 0 : i64, tpu.core_type = #tpu.core_type<tc>, window_params = [{transform_indices = @transform_0, window_bounds = array<i64: 32, 64>}, {pipeline_mode = #tpu.pipeline_mode<synchronous>, transform_indices = @transform_1, window_bounds = array<i64: 1, 64>}, {pipeline_mode = #tpu.pipeline_mode<synchronous>, transform_indices = @transform_2, window_bounds = array<i64: 1, 64>}, {transform_indices = @transform_3, window_bounds = array<i64: 64, 192>}, {transform_indices = @transform_4, window_bounds = array<i64: 1, 192>}, {transform_indices = @transform_5, window_bounds = array<i64: 32, 192>}]} {
    %c0 = arith.constant 0 : index
    %c0_0 = arith.constant 0 : index
    %0 = vector.load %arg2[%c0, %c0_0] : memref<32x64xbf16, #tpu.memory_space<vmem>>, vector<32x64xbf16>
    %1 = arith.extf %0 : vector<32x64xbf16> to vector<32x64xf32>
    %cst = arith.constant dense<0.000000e+00> : vector<32xf32>
    %2 = vector.multi_reduction <add>, %1, %cst [1] : vector<32x64xf32> to vector<32xf32>
    %3 = vector.shape_cast %2 : vector<32xf32> to vector<32x1xf32>
    %cst_1 = arith.constant 6.400000e+01 : f32
    %4 = vector.broadcast %cst_1 : f32 to vector<32x1xf32>
    %5 = arith.divf %3, %4 : vector<32x1xf32>
    %6 = vector.broadcast %5 : vector<32x1xf32> to vector<32x64xf32>
    %7 = arith.subf %1, %6 : vector<32x64xf32>
    %8 = arith.mulf %7, %7 : vector<32x64xf32>
    %cst_2 = arith.constant dense<0.000000e+00> : vector<32xf32>
    %9 = vector.multi_reduction <add>, %8, %cst_2 [1] : vector<32x64xf32> to vector<32xf32>
    %10 = vector.shape_cast %9 : vector<32xf32> to vector<32x1xf32>
    %cst_3 = arith.constant 6.400000e+01 : f32
    %11 = vector.broadcast %cst_3 : f32 to vector<32x1xf32>
    %12 = arith.divf %10, %11 : vector<32x1xf32>
    %13 = vector.broadcast %5 : vector<32x1xf32> to vector<32x64xf32>
    %14 = arith.subf %1, %13 : vector<32x64xf32>
    %cst_4 = arith.constant 9.99999974E-6 : f32
    %15 = vector.broadcast %cst_4 : f32 to vector<32x1xf32>
    %16 = arith.addf %12, %15 : vector<32x1xf32>
    %17 = math.rsqrt %16 : vector<32x1xf32>
    %18 = vector.broadcast %17 : vector<32x1xf32> to vector<32x64xf32>
    %19 = arith.mulf %14, %18 : vector<32x64xf32>
    %c0_5 = arith.constant 0 : index
    %c0_6 = arith.constant 0 : index
    %20 = vector.load %arg3[%c0_5, %c0_6] : memref<1x64xbf16, #tpu.memory_space<vmem>>, vector<1x64xbf16>
    %21 = arith.extf %20 : vector<1x64xbf16> to vector<1x64xf32>
    %22 = vector.broadcast %21 : vector<1x64xf32> to vector<32x64xf32>
    %23 = arith.mulf %19, %22 : vector<32x64xf32>
    %c0_7 = arith.constant 0 : index
    %c0_8 = arith.constant 0 : index
    %24 = vector.load %arg4[%c0_7, %c0_8] : memref<1x64xbf16, #tpu.memory_space<vmem>>, vector<1x64xbf16>
    %25 = arith.extf %24 : vector<1x64xbf16> to vector<1x64xf32>
    %26 = vector.broadcast %25 : vector<1x64xf32> to vector<32x64xf32>
    %27 = arith.addf %23, %26 : vector<32x64xf32>
    %28 = arith.truncf %27 : vector<32x64xf32> to vector<32x64xbf16>
    %c0_9 = arith.constant 0 : index
    %c0_10 = arith.constant 0 : index
    %29 = vector.load %arg5[%c0_9, %c0_10] : memref<64x192xbf16, #tpu.memory_space<vmem>>, vector<64x192xbf16>
    %cst_11 = arith.constant dense<0.000000e+00> : vector<32x192xf32>
    %30 = tpu.matmul %28, %29, %cst_11 {dimension_numbers = #tpu.dot_dimension_numbers<[1], [0], [0], [1], [0, 0, 1, 1], [], []>} : vector<32x64xbf16>, vector<64x192xbf16>, vector<32x192xf32> -> vector<32x192xf32>
    %c0_12 = arith.constant 0 : index
    %c0_13 = arith.constant 0 : index
    %31 = vector.load %arg6[%c0_12, %c0_13] : memref<1x192xbf16, #tpu.memory_space<vmem>>, vector<1x192xbf16>
    %32 = arith.extf %31 : vector<1x192xbf16> to vector<1x192xf32>
    %33 = vector.broadcast %32 : vector<1x192xf32> to vector<32x192xf32>
    %34 = arith.addf %30, %33 : vector<32x192xf32>
    %35 = arith.truncf %34 : vector<32x192xf32> to vector<32x192xbf16>
    %c0_14 = arith.constant 0 : index
    %c0_15 = arith.constant 0 : index
    %36 = vector.load %arg7[%c0_14, %c0_15] : memref<32x192xbf16, #tpu.memory_space<vmem>>, vector<32x192xbf16>
    tpu.vector_store %arg7[%c0_14, %c0_15], %35 {strides = array<i32>} : memref<32x192xbf16, #tpu.memory_space<vmem>>, vector<32x192xbf16>,
    return
  }
  func.func @transform_0(%arg0: i32, %arg1: i32) -> (i32, i32) {
    %c0_i32 = arith.constant 0 : i32
    %c0_i32_0 = arith.constant 0 : i32
    return %arg0, %c0_i32 : i32, i32
  }
  func.func @transform_1(%arg0: i32, %arg1: i32) -> (i32, i32) {
    %c0_i32 = arith.constant 0 : i32
    %c0_i32_0 = arith.constant 0 : i32
    %c0_i32_1 = arith.constant 0 : i32
    return %c0_i32, %c0_i32_0 : i32, i32
  }
  func.func @transform_2(%arg0: i32, %arg1: i32) -> (i32, i32) {
    %c0_i32 = arith.constant 0 : i32
    %c0_i32_0 = arith.constant 0 : i32
    %c0_i32_1 = arith.constant 0 : i32
    return %c0_i32, %c0_i32_0 : i32, i32
  }
  func.func @transform_3(%arg0: i32, %arg1: i32) -> (i32, i32) {
    %c0_i32 = arith.constant 0 : i32
    %c0_i32_0 = arith.constant 0 : i32
    return %c0_i32, %arg1 : i32, i32
  }
  func.func @transform_4(%arg0: i32, %arg1: i32) -> (i32, i32) {
    %c0_i32 = arith.constant 0 : i32
    %c0_i32_0 = arith.constant 0 : i32
    return %c0_i32, %arg1 : i32, i32
  }
  func.func @transform_5(%arg0: i32, %arg1: i32) -> (i32, i32) {
    %c0_i32 = arith.constant 0 : i32
    return %arg0, %arg1 : i32, i32
  }
}

module attributes {stable_mosaic.version = 11 : i64} {
  func.func @_flash_kernel(%arg0: i32, %arg1: i32, %arg2: memref<1x4x16x16xbf16, #tpu.memory_space<vmem>>, %arg3: memref<1x4x16x16xbf16, #tpu.memory_space<vmem>>, %arg4: memref<1x4x16x16xbf16, #tpu.memory_space<vmem>>, %arg5: memref<1x4x16x16xbf16, #tpu.memory_space<vmem>>) attributes {dimension_semantics = [#tpu.dimension_semantics<parallel>, #tpu.dimension_semantics<arbitrary>], iteration_bounds = array<i64: 2, 1>, scalar_prefetch = 0 : i64, scratch_operands = 0 : i64, tpu.core_type = #tpu.core_type<tc>, window_params = [{transform_indices = @transform_0, window_bounds = array<i64: 1, 4, 16, 16>}, {transform_indices = @transform_1, window_bounds = array<i64: 1, 4, 16, 16>}, {transform_indices = @transform_2, window_bounds = array<i64: 1, 4, 16, 16>}, {transform_indices = @transform_3, window_bounds = array<i64: 1, 4, 16, 16>}]} {
    %c0 = arith.constant 0 : index
    %c0_0 = arith.constant 0 : index
    %c0_1 = arith.constant 0 : index
    %c0_2 = arith.constant 0 : index
    %0 = vector.load %arg2[%c0, %c0_0, %c0_1, %c0_2] : memref<1x4x16x16xbf16, #tpu.memory_space<vmem>>, vector<1x4x16x16xbf16>
    %1 = vector.shape_cast %0 : vector<1x4x16x16xbf16> to vector<4x16x16xbf16>
    %2 = arith.extf %1 : vector<4x16x16xbf16> to vector<4x16x16xf32>
    %cst = arith.constant 2.500000e-01 : f32
    %3 = vector.broadcast %cst : f32 to vector<4x16x16xf32>
    %4 = arith.mulf %2, %3 : vector<4x16x16xf32>
    %5 = arith.truncf %4 : vector<4x16x16xf32> to vector<4x16x16xbf16>
    %cst_3 = arith.constant -1.000000e+30 : f32
    %6 = vector.broadcast %cst_3 : f32 to vector<4x16x1xf32>
    %cst_4 = arith.constant 0.000000e+00 : f32
    %7 = vector.broadcast %cst_4 : f32 to vector<4x16x1xf32>
    %cst_5 = arith.constant 0.000000e+00 : f32
    %8 = vector.broadcast %cst_5 : f32 to vector<4x16x16xf32>
    %c0_i32 = arith.constant 0 : i32
    %9 = arith.subi %arg1, %c0_i32 : i32
    %10 = arith.addi %c0_i32, %9 : i32
    %c1_i32 = arith.constant 1 : i32
    %11:3 = scf.for %arg6 = %c0_i32 to %10 step %c1_i32 iter_args(%arg7 = %6, %arg8 = %7, %arg9 = %8) -> (vector<4x16x1xf32>, vector<4x16x1xf32>, vector<4x16x16xf32>)  : i32 {
      %c16_i32_21 = arith.constant 16 : i32
      %53 = arith.muli %arg6, %c16_i32_21 : i32
      %54 = tpu.assume_multiple %53, 16 : i32
      %c0_22 = arith.constant 0 : index
      %c0_23 = arith.constant 0 : index
      %55 = arith.index_cast %54 : i32 to index
      %c0_24 = arith.constant 0 : index
      %56 = vector.load %arg3[%c0_22, %c0_23, %55, %c0_24] : memref<1x4x16x16xbf16, #tpu.memory_space<vmem>>, vector<1x4x16x16xbf16>
      %57 = vector.shape_cast %56 : vector<1x4x16x16xbf16> to vector<4x16x16xbf16>
      %c0_25 = arith.constant 0 : index
      %c0_26 = arith.constant 0 : index
      %58 = arith.index_cast %54 : i32 to index
      %c0_27 = arith.constant 0 : index
      %59 = vector.load %arg4[%c0_25, %c0_26, %58, %c0_27] : memref<1x4x16x16xbf16, #tpu.memory_space<vmem>>, vector<1x4x16x16xbf16>
      %60 = vector.shape_cast %59 : vector<1x4x16x16xbf16> to vector<4x16x16xbf16>
      %cst_28 = arith.constant dense<0.000000e+00> : vector<4x16x16xf32>
      %61 = tpu.matmul %5, %57, %cst_28 {dimension_numbers = #tpu.dot_dimension_numbers<[2], [2], [1], [1], [0, 0, 0, 1, 1, 1], [0], [0]>} : vector<4x16x16xbf16>, vector<4x16x16xbf16>, vector<4x16x16xf32> -> vector<4x16x16xf32>
      %cst_29 = arith.constant dense<0xFF800000> : vector<4x16xf32>
      %62 = vector.multi_reduction <maximumf>, %61, %cst_29 [2] : vector<4x16x16xf32> to vector<4x16xf32>
      %63 = vector.shape_cast %62 : vector<4x16xf32> to vector<4x16x1xf32>
      %64 = arith.maximumf %arg7, %63 : vector<4x16x1xf32>
      %65 = arith.subf %arg7, %64 : vector<4x16x1xf32>
      %66 = math.exp %65 : vector<4x16x1xf32>
      %67 = vector.broadcast %64 : vector<4x16x1xf32> to vector<4x16x16xf32>
      %68 = arith.subf %61, %67 : vector<4x16x16xf32>
      %69 = math.exp %68 : vector<4x16x16xf32>
      %70 = arith.mulf %66, %arg8 : vector<4x16x1xf32>
      %cst_30 = arith.constant dense<0.000000e+00> : vector<4x16xf32>
      %71 = vector.multi_reduction <add>, %69, %cst_30 [2] : vector<4x16x16xf32> to vector<4x16xf32>
      %72 = vector.shape_cast %71 : vector<4x16xf32> to vector<4x16x1xf32>
      %73 = arith.addf %70, %72 : vector<4x16x1xf32>
      %74 = vector.broadcast %66 : vector<4x16x1xf32> to vector<4x16x16xf32>
      %75 = arith.mulf %74, %arg9 : vector<4x16x16xf32>
      %76 = arith.truncf %69 : vector<4x16x16xf32> to vector<4x16x16xbf16>
      %cst_31 = arith.constant dense<0.000000e+00> : vector<4x16x16xf32>
      %77 = tpu.matmul %76, %60, %cst_31 {dimension_numbers = #tpu.dot_dimension_numbers<[2], [1], [1], [2], [0, 0, 0, 1, 1, 2], [0], [0]>} : vector<4x16x16xbf16>, vector<4x16x16xbf16>, vector<4x16x16xf32> -> vector<4x16x16xf32>
      %78 = arith.addf %75, %77 : vector<4x16x16xf32>
      scf.yield %64, %73, %78 : vector<4x16x1xf32>, vector<4x16x1xf32>, vector<4x16x16xf32>
    }
    %c16_i32 = arith.constant 16 : i32
    %12 = arith.muli %arg1, %c16_i32 : i32
    %13 = tpu.assume_multiple %12, 16 : i32
    %c0_6 = arith.constant 0 : index
    %c0_7 = arith.constant 0 : index
    %14 = arith.index_cast %13 : i32 to index
    %c0_8 = arith.constant 0 : index
    %15 = vector.load %arg3[%c0_6, %c0_7, %14, %c0_8] : memref<1x4x16x16xbf16, #tpu.memory_space<vmem>>, vector<1x4x16x16xbf16>
    %16 = vector.shape_cast %15 : vector<1x4x16x16xbf16> to vector<4x16x16xbf16>
    %c0_9 = arith.constant 0 : index
    %c0_10 = arith.constant 0 : index
    %17 = arith.index_cast %13 : i32 to index
    %c0_11 = arith.constant 0 : index
    %18 = vector.load %arg4[%c0_9, %c0_10, %17, %c0_11] : memref<1x4x16x16xbf16, #tpu.memory_space<vmem>>, vector<1x4x16x16xbf16>
    %19 = vector.shape_cast %18 : vector<1x4x16x16xbf16> to vector<4x16x16xbf16>
    %cst_12 = arith.constant dense<0.000000e+00> : vector<4x16x16xf32>
    %20 = tpu.matmul %5, %16, %cst_12 {dimension_numbers = #tpu.dot_dimension_numbers<[2], [2], [1], [1], [0, 0, 0, 1, 1, 1], [0], [0]>} : vector<4x16x16xbf16>, vector<4x16x16xbf16>, vector<4x16x16xf32> -> vector<4x16x16xf32>
    %21 = tpu.iota {dimensions = array<i32: 0>} : vector<16x16xi32>
    %22 = tpu.iota {dimensions = array<i32: 1>} : vector<16x16xi32>
    %23 = arith.cmpi sle, %22, %21 : vector<16x16xi32>
    %24 = vector.shape_cast %23 : vector<16x16xi1> to vector<1x16x16xi1>
    %cst_13 = arith.constant -1.000000e+30 : f32
    %25 = vector.shape_cast %24 : vector<1x16x16xi1> to vector<1x16x16xi1>
    %26 = vector.broadcast %25 : vector<1x16x16xi1> to vector<4x16x16xi1>
    %27 = vector.broadcast %cst_13 : f32 to vector<4x16x16xf32>
    %28 = arith.select %26, %20, %27 : vector<4x16x16xi1>, vector<4x16x16xf32>
    %cst_14 = arith.constant dense<0xFF800000> : vector<4x16xf32>
    %29 = vector.multi_reduction <maximumf>, %28, %cst_14 [2] : vector<4x16x16xf32> to vector<4x16xf32>
    %30 = vector.shape_cast %29 : vector<4x16xf32> to vector<4x16x1xf32>
    %31 = arith.maximumf %11#0, %30 : vector<4x16x1xf32>
    %32 = arith.subf %11#0, %31 : vector<4x16x1xf32>
    %33 = math.exp %32 : vector<4x16x1xf32>
    %34 = vector.broadcast %31 : vector<4x16x1xf32> to vector<4x16x16xf32>
    %35 = arith.subf %28, %34 : vector<4x16x16xf32>
    %36 = math.exp %35 : vector<4x16x16xf32>
    %37 = arith.mulf %33, %11#1 : vector<4x16x1xf32>
    %cst_15 = arith.constant dense<0.000000e+00> : vector<4x16xf32>
    %38 = vector.multi_reduction <add>, %36, %cst_15 [2] : vector<4x16x16xf32> to vector<4x16xf32>
    %39 = vector.shape_cast %38 : vector<4x16xf32> to vector<4x16x1xf32>
    %40 = arith.addf %37, %39 : vector<4x16x1xf32>
    %41 = vector.broadcast %33 : vector<4x16x1xf32> to vector<4x16x16xf32>
    %42 = arith.mulf %41, %11#2 : vector<4x16x16xf32>
    %43 = arith.truncf %36 : vector<4x16x16xf32> to vector<4x16x16xbf16>
    %cst_16 = arith.constant dense<0.000000e+00> : vector<4x16x16xf32>
    %44 = tpu.matmul %43, %19, %cst_16 {dimension_numbers = #tpu.dot_dimension_numbers<[2], [1], [1], [2], [0, 0, 0, 1, 1, 2], [0], [0]>} : vector<4x16x16xbf16>, vector<4x16x16xbf16>, vector<4x16x16xf32> -> vector<4x16x16xf32>
    %45 = arith.addf %42, %44 : vector<4x16x16xf32>
    %46 = tpu.reciprocal %40 {approx = true} : vector<4x16x1xf32> -> vector<4x16x1xf32>
    %47 = vector.broadcast %46 : vector<4x16x1xf32> to vector<4x16x16xf32>
    %48 = arith.mulf %45, %47 : vector<4x16x16xf32>
    %49 = arith.truncf %48 : vector<4x16x16xf32> to vector<4x16x16xbf16>
    %c0_17 = arith.constant 0 : index
    %c0_18 = arith.constant 0 : index
    %c0_19 = arith.constant 0 : index
    %c0_20 = arith.constant 0 : index
    %50 = vector.load %arg5[%c0_17, %c0_18, %c0_19, %c0_20] : memref<1x4x16x16xbf16, #tpu.memory_space<vmem>>, vector<1x4x16x16xbf16>
    %51 = vector.shape_cast %50 : vector<1x4x16x16xbf16> to vector<4x16x16xbf16>
    %52 = vector.shape_cast %49 : vector<4x16x16xbf16> to vector<1x4x16x16xbf16>
    tpu.vector_store %arg5[%c0_17, %c0_18, %c0_19, %c0_20], %52 {strides = array<i32>} : memref<1x4x16x16xbf16, #tpu.memory_space<vmem>>, vector<1x4x16x16xbf16>,
    return
  }
  func.func @transform_0(%arg0: i32, %arg1: i32) -> (i32, i32, i32, i32) {
    %c0_i32 = arith.constant 0 : i32
    %c0_i32_0 = arith.constant 0 : i32
    %c0_i32_1 = arith.constant 0 : i32
    return %arg0, %c0_i32, %arg1, %c0_i32_0 : i32, i32, i32, i32
  }
  func.func @transform_1(%arg0: i32, %arg1: i32) -> (i32, i32, i32, i32) {
    %c0_i32 = arith.constant 0 : i32
    %c0_i32_0 = arith.constant 0 : i32
    %c0_i32_1 = arith.constant 0 : i32
    %c0_i32_2 = arith.constant 0 : i32
    return %arg0, %c0_i32, %c0_i32_0, %c0_i32_1 : i32, i32, i32, i32
  }
  func.func @transform_2(%arg0: i32, %arg1: i32) -> (i32, i32, i32, i32) {
    %c0_i32 = arith.constant 0 : i32
    %c0_i32_0 = arith.constant 0 : i32
    %c0_i32_1 = arith.constant 0 : i32
    %c0_i32_2 = arith.constant 0 : i32
    return %arg0, %c0_i32, %c0_i32_0, %c0_i32_1 : i32, i32, i32, i32
  }
  func.func @transform_3(%arg0: i32, %arg1: i32) -> (i32, i32, i32, i32) {
    %c0_i32 = arith.constant 0 : i32
    %c0_i32_0 = arith.constant 0 : i32
    %c0_i32_1 = arith.constant 0 : i32
    return %arg0, %c0_i32, %arg1, %c0_i32_0 : i32, i32, i32, i32
  }
}

module attributes {stable_mosaic.version = 11 : i64} {
  func.func @_linear_acc_kernel(%arg0: i32, %arg1: i32, %arg2: i32, %arg3: memref<32x64xbf16, #tpu.memory_space<vmem>>, %arg4: memref<64x64xbf16, #tpu.memory_space<vmem>>, %arg5: memref<1x64xbf16, #tpu.memory_space<vmem>>, %arg6: memref<32x64xbf16, #tpu.memory_space<vmem>>, %arg7: memref<32x64xbf16, #tpu.memory_space<vmem>>, %arg8: memref<32x64xf32, #tpu.memory_space<vmem>>) attributes {dimension_semantics = [#tpu.dimension_semantics<parallel>, #tpu.dimension_semantics<parallel>, #tpu.dimension_semantics<arbitrary>], iteration_bounds = array<i64: 1, 1, 1>, scalar_prefetch = 0 : i64, scratch_operands = 1 : i64, tpu.core_type = #tpu.core_type<tc>, window_params = [{transform_indices = @transform_0, window_bounds = array<i64: 32, 64>}, {transform_indices = @transform_1, window_bounds = array<i64: 64, 64>}, {transform_indices = @transform_2, window_bounds = array<i64: 1, 64>}, {transform_indices = @transform_3, window_bounds = array<i64: 32, 64>}, {transform_indices = @transform_4, window_bounds = array<i64: 32, 64>}]} {
    %c0_i32 = arith.constant 0 : i32
    %0 = arith.cmpi eq, %arg2, %c0_i32 : i32
    %1 = arith.extui %0 : i1 to i32
    %c0_i32_0 = arith.constant 0 : i32
    %2 = arith.cmpi ne, %1, %c0_i32_0 : i32
    scf.if %2 {
      %cst_10 = arith.constant 0.000000e+00 : f32
      %12 = vector.broadcast %cst_10 : f32 to vector<32x64xf32>
      %c0_11 = arith.constant 0 : index
      %c0_12 = arith.constant 0 : index
      %13 = vector.load %arg8[%c0_11, %c0_12] : memref<32x64xf32, #tpu.memory_space<vmem>>, vector<32x64xf32>
      tpu.vector_store %arg8[%c0_11, %c0_12], %12 {strides = array<i32>} : memref<32x64xf32, #tpu.memory_space<vmem>>, vector<32x64xf32>,
    } else {
    }
    %c0 = arith.constant 0 : index
    %c0_1 = arith.constant 0 : index
    %3 = vector.load %arg8[%c0, %c0_1] : memref<32x64xf32, #tpu.memory_space<vmem>>, vector<32x64xf32>
    %c0_2 = arith.constant 0 : index
    %c0_3 = arith.constant 0 : index
    %4 = vector.load %arg3[%c0_2, %c0_3] : memref<32x64xbf16, #tpu.memory_space<vmem>>, vector<32x64xbf16>
    %c0_4 = arith.constant 0 : index
    %c0_5 = arith.constant 0 : index
    %5 = vector.load %arg4[%c0_4, %c0_5] : memref<64x64xbf16, #tpu.memory_space<vmem>>, vector<64x64xbf16>
    %cst = arith.constant dense<0.000000e+00> : vector<32x64xf32>
    %6 = tpu.matmul %4, %5, %cst {dimension_numbers = #tpu.dot_dimension_numbers<[1], [0], [0], [1], [0, 0, 1, 1], [], []>} : vector<32x64xbf16>, vector<64x64xbf16>, vector<32x64xf32> -> vector<32x64xf32>
    %7 = arith.addf %3, %6 : vector<32x64xf32>
    %c0_6 = arith.constant 0 : index
    %c0_7 = arith.constant 0 : index
    %8 = vector.load %arg8[%c0_6, %c0_7] : memref<32x64xf32, #tpu.memory_space<vmem>>, vector<32x64xf32>
    tpu.vector_store %arg8[%c0_6, %c0_7], %7 {strides = array<i32>} : memref<32x64xf32, #tpu.memory_space<vmem>>, vector<32x64xf32>,
    %c0_i32_8 = arith.constant 0 : i32
    %9 = arith.cmpi eq, %arg2, %c0_i32_8 : i32
    %10 = arith.extui %9 : i1 to i32
    %c0_i32_9 = arith.constant 0 : i32
    %11 = arith.cmpi ne, %10, %c0_i32_9 : i32
    scf.if %11 {
      %c0_10 = arith.constant 0 : index
      %c0_11 = arith.constant 0 : index
      %12 = vector.load %arg8[%c0_10, %c0_11] : memref<32x64xf32, #tpu.memory_space<vmem>>, vector<32x64xf32>
      %c0_12 = arith.constant 0 : index
      %c0_13 = arith.constant 0 : index
      %13 = vector.load %arg5[%c0_12, %c0_13] : memref<1x64xbf16, #tpu.memory_space<vmem>>, vector<1x64xbf16>
      %14 = arith.extf %13 : vector<1x64xbf16> to vector<1x64xf32>
      %15 = vector.broadcast %14 : vector<1x64xf32> to vector<32x64xf32>
      %16 = arith.addf %12, %15 : vector<32x64xf32>
      %c0_14 = arith.constant 0 : index
      %c0_15 = arith.constant 0 : index
      %17 = vector.load %arg6[%c0_14, %c0_15] : memref<32x64xbf16, #tpu.memory_space<vmem>>, vector<32x64xbf16>
      %18 = arith.extf %17 : vector<32x64xbf16> to vector<32x64xf32>
      %19 = arith.addf %16, %18 : vector<32x64xf32>
      %20 = arith.truncf %19 : vector<32x64xf32> to vector<32x64xbf16>
      %c0_16 = arith.constant 0 : index
      %c0_17 = arith.constant 0 : index
      %21 = vector.load %arg7[%c0_16, %c0_17] : memref<32x64xbf16, #tpu.memory_space<vmem>>, vector<32x64xbf16>
      tpu.vector_store %arg7[%c0_16, %c0_17], %20 {strides = array<i32>} : memref<32x64xbf16, #tpu.memory_space<vmem>>, vector<32x64xbf16>,
    } else {
    }
    return
  }
  func.func @transform_0(%arg0: i32, %arg1: i32, %arg2: i32) -> (i32, i32) {
    %c0_i32 = arith.constant 0 : i32
    return %arg0, %arg2 : i32, i32
  }
  func.func @transform_1(%arg0: i32, %arg1: i32, %arg2: i32) -> (i32, i32) {
    %c0_i32 = arith.constant 0 : i32
    return %arg2, %arg1 : i32, i32
  }
  func.func @transform_2(%arg0: i32, %arg1: i32, %arg2: i32) -> (i32, i32) {
    %c0_i32 = arith.constant 0 : i32
    %c0_i32_0 = arith.constant 0 : i32
    return %c0_i32, %arg1 : i32, i32
  }
  func.func @transform_3(%arg0: i32, %arg1: i32, %arg2: i32) -> (i32, i32) {
    %c0_i32 = arith.constant 0 : i32
    return %arg0, %arg1 : i32, i32
  }
  func.func @transform_4(%arg0: i32, %arg1: i32, %arg2: i32) -> (i32, i32) {
    %c0_i32 = arith.constant 0 : i32
    return %arg0, %arg1 : i32, i32
  }
}

module attributes {stable_mosaic.version = 11 : i64} {
  func.func @_ln_linear_kernel(%arg0: i32, %arg1: i32, %arg2: memref<32x64xbf16, #tpu.memory_space<vmem>>, %arg3: memref<1x64xbf16, #tpu.memory_space<vmem>>, %arg4: memref<1x64xbf16, #tpu.memory_space<vmem>>, %arg5: memref<64x256xbf16, #tpu.memory_space<vmem>>, %arg6: memref<1x256xbf16, #tpu.memory_space<vmem>>, %arg7: memref<32x256xbf16, #tpu.memory_space<vmem>>) attributes {dimension_semantics = [#tpu.dimension_semantics<parallel>, #tpu.dimension_semantics<parallel>], iteration_bounds = array<i64: 1, 1>, scalar_prefetch = 0 : i64, scratch_operands = 0 : i64, tpu.core_type = #tpu.core_type<tc>, window_params = [{transform_indices = @transform_0, window_bounds = array<i64: 32, 64>}, {pipeline_mode = #tpu.pipeline_mode<synchronous>, transform_indices = @transform_1, window_bounds = array<i64: 1, 64>}, {pipeline_mode = #tpu.pipeline_mode<synchronous>, transform_indices = @transform_2, window_bounds = array<i64: 1, 64>}, {transform_indices = @transform_3, window_bounds = array<i64: 64, 256>}, {transform_indices = @transform_4, window_bounds = array<i64: 1, 256>}, {transform_indices = @transform_5, window_bounds = array<i64: 32, 256>}]} {
    %c0 = arith.constant 0 : index
    %c0_0 = arith.constant 0 : index
    %0 = vector.load %arg2[%c0, %c0_0] : memref<32x64xbf16, #tpu.memory_space<vmem>>, vector<32x64xbf16>
    %1 = arith.extf %0 : vector<32x64xbf16> to vector<32x64xf32>
    %cst = arith.constant dense<0.000000e+00> : vector<32xf32>
    %2 = vector.multi_reduction <add>, %1, %cst [1] : vector<32x64xf32> to vector<32xf32>
    %3 = vector.shape_cast %2 : vector<32xf32> to vector<32x1xf32>
    %cst_1 = arith.constant 6.400000e+01 : f32
    %4 = vector.broadcast %cst_1 : f32 to vector<32x1xf32>
    %5 = arith.divf %3, %4 : vector<32x1xf32>
    %6 = vector.broadcast %5 : vector<32x1xf32> to vector<32x64xf32>
    %7 = arith.subf %1, %6 : vector<32x64xf32>
    %8 = arith.mulf %7, %7 : vector<32x64xf32>
    %cst_2 = arith.constant dense<0.000000e+00> : vector<32xf32>
    %9 = vector.multi_reduction <add>, %8, %cst_2 [1] : vector<32x64xf32> to vector<32xf32>
    %10 = vector.shape_cast %9 : vector<32xf32> to vector<32x1xf32>
    %cst_3 = arith.constant 6.400000e+01 : f32
    %11 = vector.broadcast %cst_3 : f32 to vector<32x1xf32>
    %12 = arith.divf %10, %11 : vector<32x1xf32>
    %13 = vector.broadcast %5 : vector<32x1xf32> to vector<32x64xf32>
    %14 = arith.subf %1, %13 : vector<32x64xf32>
    %cst_4 = arith.constant 9.99999974E-6 : f32
    %15 = vector.broadcast %cst_4 : f32 to vector<32x1xf32>
    %16 = arith.addf %12, %15 : vector<32x1xf32>
    %17 = math.rsqrt %16 : vector<32x1xf32>
    %18 = vector.broadcast %17 : vector<32x1xf32> to vector<32x64xf32>
    %19 = arith.mulf %14, %18 : vector<32x64xf32>
    %c0_5 = arith.constant 0 : index
    %c0_6 = arith.constant 0 : index
    %20 = vector.load %arg3[%c0_5, %c0_6] : memref<1x64xbf16, #tpu.memory_space<vmem>>, vector<1x64xbf16>
    %21 = arith.extf %20 : vector<1x64xbf16> to vector<1x64xf32>
    %22 = vector.broadcast %21 : vector<1x64xf32> to vector<32x64xf32>
    %23 = arith.mulf %19, %22 : vector<32x64xf32>
    %c0_7 = arith.constant 0 : index
    %c0_8 = arith.constant 0 : index
    %24 = vector.load %arg4[%c0_7, %c0_8] : memref<1x64xbf16, #tpu.memory_space<vmem>>, vector<1x64xbf16>
    %25 = arith.extf %24 : vector<1x64xbf16> to vector<1x64xf32>
    %26 = vector.broadcast %25 : vector<1x64xf32> to vector<32x64xf32>
    %27 = arith.addf %23, %26 : vector<32x64xf32>
    %28 = arith.truncf %27 : vector<32x64xf32> to vector<32x64xbf16>
    %c0_9 = arith.constant 0 : index
    %c0_10 = arith.constant 0 : index
    %29 = vector.load %arg5[%c0_9, %c0_10] : memref<64x256xbf16, #tpu.memory_space<vmem>>, vector<64x256xbf16>
    %cst_11 = arith.constant dense<0.000000e+00> : vector<32x256xf32>
    %30 = tpu.matmul %28, %29, %cst_11 {dimension_numbers = #tpu.dot_dimension_numbers<[1], [0], [0], [1], [0, 0, 1, 1], [], []>} : vector<32x64xbf16>, vector<64x256xbf16>, vector<32x256xf32> -> vector<32x256xf32>
    %c0_12 = arith.constant 0 : index
    %c0_13 = arith.constant 0 : index
    %31 = vector.load %arg6[%c0_12, %c0_13] : memref<1x256xbf16, #tpu.memory_space<vmem>>, vector<1x256xbf16>
    %32 = arith.extf %31 : vector<1x256xbf16> to vector<1x256xf32>
    %33 = vector.broadcast %32 : vector<1x256xf32> to vector<32x256xf32>
    %34 = arith.addf %30, %33 : vector<32x256xf32>
    %cst_14 = arith.constant 5.000000e-01 : f32
    %35 = vector.broadcast %cst_14 : f32 to vector<32x256xf32>
    %36 = arith.mulf %35, %34 : vector<32x256xf32>
    %cst_15 = arith.constant 4.471500e-02 : f32
    %37 = vector.broadcast %cst_15 : f32 to vector<32x256xf32>
    %38 = arith.mulf %37, %34 : vector<32x256xf32>
    %39 = arith.mulf %38, %34 : vector<32x256xf32>
    %40 = arith.mulf %39, %34 : vector<32x256xf32>
    %41 = arith.addf %34, %40 : vector<32x256xf32>
    %cst_16 = arith.constant 0.797884583 : f32
    %42 = vector.broadcast %cst_16 : f32 to vector<32x256xf32>
    %43 = arith.mulf %42, %41 : vector<32x256xf32>
    %44 = math.tanh %43 : vector<32x256xf32>
    %cst_17 = arith.constant 1.000000e+00 : f32
    %45 = vector.broadcast %cst_17 : f32 to vector<32x256xf32>
    %46 = arith.addf %45, %44 : vector<32x256xf32>
    %47 = arith.mulf %36, %46 : vector<32x256xf32>
    %48 = arith.truncf %47 : vector<32x256xf32> to vector<32x256xbf16>
    %c0_18 = arith.constant 0 : index
    %c0_19 = arith.constant 0 : index
    %49 = vector.load %arg7[%c0_18, %c0_19] : memref<32x256xbf16, #tpu.memory_space<vmem>>, vector<32x256xbf16>
    tpu.vector_store %arg7[%c0_18, %c0_19], %48 {strides = array<i32>} : memref<32x256xbf16, #tpu.memory_space<vmem>>, vector<32x256xbf16>,
    return
  }
  func.func @transform_0(%arg0: i32, %arg1: i32) -> (i32, i32) {
    %c0_i32 = arith.constant 0 : i32
    %c0_i32_0 = arith.constant 0 : i32
    return %arg0, %c0_i32 : i32, i32
  }
  func.func @transform_1(%arg0: i32, %arg1: i32) -> (i32, i32) {
    %c0_i32 = arith.constant 0 : i32
    %c0_i32_0 = arith.constant 0 : i32
    %c0_i32_1 = arith.constant 0 : i32
    return %c0_i32, %c0_i32_0 : i32, i32
  }
  func.func @transform_2(%arg0: i32, %arg1: i32) -> (i32, i32) {
    %c0_i32 = arith.constant 0 : i32
    %c0_i32_0 = arith.constant 0 : i32
    %c0_i32_1 = arith.constant 0 : i32
    return %c0_i32, %c0_i32_0 : i32, i32
  }
  func.func @transform_3(%arg0: i32, %arg1: i32) -> (i32, i32) {
    %c0_i32 = arith.constant 0 : i32
    %c0_i32_0 = arith.constant 0 : i32
    return %c0_i32, %arg1 : i32, i32
  }
  func.func @transform_4(%arg0: i32, %arg1: i32) -> (i32, i32) {
    %c0_i32 = arith.constant 0 : i32
    %c0_i32_0 = arith.constant 0 : i32
    return %c0_i32, %arg1 : i32, i32
  }
  func.func @transform_5(%arg0: i32, %arg1: i32) -> (i32, i32) {
    %c0_i32 = arith.constant 0 : i32
    return %arg0, %arg1 : i32, i32
  }
}

module attributes {stable_mosaic.version = 11 : i64} {
  func.func @_layer_norm_kernel(%arg0: i32, %arg1: memref<32x64xbf16, #tpu.memory_space<vmem>>, %arg2: memref<1x64xbf16, #tpu.memory_space<vmem>>, %arg3: memref<1x64xbf16, #tpu.memory_space<vmem>>, %arg4: memref<32x64xbf16, #tpu.memory_space<vmem>>) attributes {dimension_semantics = [#tpu.dimension_semantics<parallel>], iteration_bounds = array<i64: 1>, scalar_prefetch = 0 : i64, scratch_operands = 0 : i64, tpu.core_type = #tpu.core_type<tc>, window_params = [{transform_indices = @transform_0, window_bounds = array<i64: 32, 64>}, {pipeline_mode = #tpu.pipeline_mode<synchronous>, transform_indices = @transform_1, window_bounds = array<i64: 1, 64>}, {pipeline_mode = #tpu.pipeline_mode<synchronous>, transform_indices = @transform_2, window_bounds = array<i64: 1, 64>}, {transform_indices = @transform_3, window_bounds = array<i64: 32, 64>}]} {
    %c0 = arith.constant 0 : index
    %c0_0 = arith.constant 0 : index
    %0 = vector.load %arg1[%c0, %c0_0] : memref<32x64xbf16, #tpu.memory_space<vmem>>, vector<32x64xbf16>
    %1 = arith.extf %0 : vector<32x64xbf16> to vector<32x64xf32>
    %cst = arith.constant dense<0.000000e+00> : vector<32xf32>
    %2 = vector.multi_reduction <add>, %1, %cst [1] : vector<32x64xf32> to vector<32xf32>
    %3 = vector.shape_cast %2 : vector<32xf32> to vector<32x1xf32>
    %cst_1 = arith.constant 6.400000e+01 : f32
    %4 = vector.broadcast %cst_1 : f32 to vector<32x1xf32>
    %5 = arith.divf %3, %4 : vector<32x1xf32>
    %6 = vector.broadcast %5 : vector<32x1xf32> to vector<32x64xf32>
    %7 = arith.subf %1, %6 : vector<32x64xf32>
    %8 = arith.mulf %7, %7 : vector<32x64xf32>
    %cst_2 = arith.constant dense<0.000000e+00> : vector<32xf32>
    %9 = vector.multi_reduction <add>, %8, %cst_2 [1] : vector<32x64xf32> to vector<32xf32>
    %10 = vector.shape_cast %9 : vector<32xf32> to vector<32x1xf32>
    %cst_3 = arith.constant 6.400000e+01 : f32
    %11 = vector.broadcast %cst_3 : f32 to vector<32x1xf32>
    %12 = arith.divf %10, %11 : vector<32x1xf32>
    %13 = vector.broadcast %5 : vector<32x1xf32> to vector<32x64xf32>
    %14 = arith.subf %1, %13 : vector<32x64xf32>
    %cst_4 = arith.constant 9.99999974E-6 : f32
    %15 = vector.broadcast %cst_4 : f32 to vector<32x1xf32>
    %16 = arith.addf %12, %15 : vector<32x1xf32>
    %17 = math.rsqrt %16 : vector<32x1xf32>
    %18 = vector.broadcast %17 : vector<32x1xf32> to vector<32x64xf32>
    %19 = arith.mulf %14, %18 : vector<32x64xf32>
    %c0_5 = arith.constant 0 : index
    %c0_6 = arith.constant 0 : index
    %20 = vector.load %arg2[%c0_5, %c0_6] : memref<1x64xbf16, #tpu.memory_space<vmem>>, vector<1x64xbf16>
    %21 = arith.extf %20 : vector<1x64xbf16> to vector<1x64xf32>
    %22 = vector.broadcast %21 : vector<1x64xf32> to vector<32x64xf32>
    %23 = arith.mulf %19, %22 : vector<32x64xf32>
    %c0_7 = arith.constant 0 : index
    %c0_8 = arith.constant 0 : index
    %24 = vector.load %arg3[%c0_7, %c0_8] : memref<1x64xbf16, #tpu.memory_space<vmem>>, vector<1x64xbf16>
    %25 = arith.extf %24 : vector<1x64xbf16> to vector<1x64xf32>
    %26 = vector.broadcast %25 : vector<1x64xf32> to vector<32x64xf32>
    %27 = arith.addf %23, %26 : vector<32x64xf32>
    %28 = arith.truncf %27 : vector<32x64xf32> to vector<32x64xbf16>
    %c0_9 = arith.constant 0 : index
    %c0_10 = arith.constant 0 : index
    %29 = vector.load %arg4[%c0_9, %c0_10] : memref<32x64xbf16, #tpu.memory_space<vmem>>, vector<32x64xbf16>
    tpu.vector_store %arg4[%c0_9, %c0_10], %28 {strides = array<i32>} : memref<32x64xbf16, #tpu.memory_space<vmem>>, vector<32x64xbf16>,
    return
  }
  func.func @transform_0(%arg0: i32) -> (i32, i32) {
    %c0_i32 = arith.constant 0 : i32
    %c0_i32_0 = arith.constant 0 : i32
    return %arg0, %c0_i32 : i32, i32
  }
  func.func @transform_1(%arg0: i32) -> (i32, i32) {
    %c0_i32 = arith.constant 0 : i32
    %c0_i32_0 = arith.constant 0 : i32
    %c0_i32_1 = arith.constant 0 : i32
    return %c0_i32, %c0_i32_0 : i32, i32
  }
  func.func @transform_2(%arg0: i32) -> (i32, i32) {
    %c0_i32 = arith.constant 0 : i32
    %c0_i32_0 = arith.constant 0 : i32
    %c0_i32_1 = arith.constant 0 : i32
    return %c0_i32, %c0_i32_0 : i32, i32
  }
  func.func @transform_3(%arg0: i32) -> (i32, i32) {
    %c0_i32 = arith.constant 0 : i32
    %c0_i32_0 = arith.constant 0 : i32
    return %arg0, %c0_i32 : i32, i32
  }
}

module attributes {stable_mosaic.version = 11 : i64} {
  func.func @_linear_acc_kernel(%arg0: i32, %arg1: i32, %arg2: i32, %arg3: memref<32x256xbf16, #tpu.memory_space<vmem>>, %arg4: memref<256x64xbf16, #tpu.memory_space<vmem>>, %arg5: memref<1x64xbf16, #tpu.memory_space<vmem>>, %arg6: memref<32x64xbf16, #tpu.memory_space<vmem>>, %arg7: memref<32x64xbf16, #tpu.memory_space<vmem>>, %arg8: memref<32x64xf32, #tpu.memory_space<vmem>>) attributes {dimension_semantics = [#tpu.dimension_semantics<parallel>, #tpu.dimension_semantics<parallel>, #tpu.dimension_semantics<arbitrary>], iteration_bounds = array<i64: 1, 1, 1>, scalar_prefetch = 0 : i64, scratch_operands = 1 : i64, tpu.core_type = #tpu.core_type<tc>, window_params = [{transform_indices = @transform_0, window_bounds = array<i64: 32, 256>}, {transform_indices = @transform_1, window_bounds = array<i64: 256, 64>}, {transform_indices = @transform_2, window_bounds = array<i64: 1, 64>}, {transform_indices = @transform_3, window_bounds = array<i64: 32, 64>}, {transform_indices = @transform_4, window_bounds = array<i64: 32, 64>}]} {
    %c0_i32 = arith.constant 0 : i32
    %0 = arith.cmpi eq, %arg2, %c0_i32 : i32
    %1 = arith.extui %0 : i1 to i32
    %c0_i32_0 = arith.constant 0 : i32
    %2 = arith.cmpi ne, %1, %c0_i32_0 : i32
    scf.if %2 {
      %cst_10 = arith.constant 0.000000e+00 : f32
      %12 = vector.broadcast %cst_10 : f32 to vector<32x64xf32>
      %c0_11 = arith.constant 0 : index
      %c0_12 = arith.constant 0 : index
      %13 = vector.load %arg8[%c0_11, %c0_12] : memref<32x64xf32, #tpu.memory_space<vmem>>, vector<32x64xf32>
      tpu.vector_store %arg8[%c0_11, %c0_12], %12 {strides = array<i32>} : memref<32x64xf32, #tpu.memory_space<vmem>>, vector<32x64xf32>,
    } else {
    }
    %c0 = arith.constant 0 : index
    %c0_1 = arith.constant 0 : index
    %3 = vector.load %arg8[%c0, %c0_1] : memref<32x64xf32, #tpu.memory_space<vmem>>, vector<32x64xf32>
    %c0_2 = arith.constant 0 : index
    %c0_3 = arith.constant 0 : index
    %4 = vector.load %arg3[%c0_2, %c0_3] : memref<32x256xbf16, #tpu.memory_space<vmem>>, vector<32x256xbf16>
    %c0_4 = arith.constant 0 : index
    %c0_5 = arith.constant 0 : index
    %5 = vector.load %arg4[%c0_4, %c0_5] : memref<256x64xbf16, #tpu.memory_space<vmem>>, vector<256x64xbf16>
    %cst = arith.constant dense<0.000000e+00> : vector<32x64xf32>
    %6 = tpu.matmul %4, %5, %cst {dimension_numbers = #tpu.dot_dimension_numbers<[1], [0], [0], [1], [0, 0, 1, 1], [], []>} : vector<32x256xbf16>, vector<256x64xbf16>, vector<32x64xf32> -> vector<32x64xf32>
    %7 = arith.addf %3, %6 : vector<32x64xf32>
    %c0_6 = arith.constant 0 : index
    %c0_7 = arith.constant 0 : index
    %8 = vector.load %arg8[%c0_6, %c0_7] : memref<32x64xf32, #tpu.memory_space<vmem>>, vector<32x64xf32>
    tpu.vector_store %arg8[%c0_6, %c0_7], %7 {strides = array<i32>} : memref<32x64xf32, #tpu.memory_space<vmem>>, vector<32x64xf32>,
    %c0_i32_8 = arith.constant 0 : i32
    %9 = arith.cmpi eq, %arg2, %c0_i32_8 : i32
    %10 = arith.extui %9 : i1 to i32
    %c0_i32_9 = arith.constant 0 : i32
    %11 = arith.cmpi ne, %10, %c0_i32_9 : i32
    scf.if %11 {
      %c0_10 = arith.constant 0 : index
      %c0_11 = arith.constant 0 : index
      %12 = vector.load %arg8[%c0_10, %c0_11] : memref<32x64xf32, #tpu.memory_space<vmem>>, vector<32x64xf32>
      %c0_12 = arith.constant 0 : index
      %c0_13 = arith.constant 0 : index
      %13 = vector.load %arg5[%c0_12, %c0_13] : memref<1x64xbf16, #tpu.memory_space<vmem>>, vector<1x64xbf16>
      %14 = arith.extf %13 : vector<1x64xbf16> to vector<1x64xf32>
      %15 = vector.broadcast %14 : vector<1x64xf32> to vector<32x64xf32>
      %16 = arith.addf %12, %15 : vector<32x64xf32>
      %c0_14 = arith.constant 0 : index
      %c0_15 = arith.constant 0 : index
      %17 = vector.load %arg6[%c0_14, %c0_15] : memref<32x64xbf16, #tpu.memory_space<vmem>>, vector<32x64xbf16>
      %18 = arith.extf %17 : vector<32x64xbf16> to vector<32x64xf32>
      %19 = arith.addf %16, %18 : vector<32x64xf32>
      %20 = arith.truncf %19 : vector<32x64xf32> to vector<32x64xbf16>
      %c0_16 = arith.constant 0 : index
      %c0_17 = arith.constant 0 : index
      %21 = vector.load %arg7[%c0_16, %c0_17] : memref<32x64xbf16, #tpu.memory_space<vmem>>, vector<32x64xbf16>
      tpu.vector_store %arg7[%c0_16, %c0_17], %20 {strides = array<i32>} : memref<32x64xbf16, #tpu.memory_space<vmem>>, vector<32x64xbf16>,
    } else {
    }
    return
  }
  func.func @transform_0(%arg0: i32, %arg1: i32, %arg2: i32) -> (i32, i32) {
    %c0_i32 = arith.constant 0 : i32
    return %arg0, %arg2 : i32, i32
  }
  func.func @transform_1(%arg0: i32, %arg1: i32, %arg2: i32) -> (i32, i32) {
    %c0_i32 = arith.constant 0 : i32
    return %arg2, %arg1 : i32, i32
  }
  func.func @transform_2(%arg0: i32, %arg1: i32, %arg2: i32) -> (i32, i32) {
    %c0_i32 = arith.constant 0 : i32
    %c0_i32_0 = arith.constant 0 : i32
    return %c0_i32, %arg1 : i32, i32
  }
  func.func @transform_3(%arg0: i32, %arg1: i32, %arg2: i32) -> (i32, i32) {
    %c0_i32 = arith.constant 0 : i32
    return %arg0, %arg1 : i32, i32
  }
  func.func @transform_4(%arg0: i32, %arg1: i32, %arg2: i32) -> (i32, i32) {
    %c0_i32 = arith.constant 0 : i32
    return %arg0, %arg1 : i32, i32
  }
}

module attributes {stable_mosaic.version = 11 : i64} {
  func.func @_linear_acc_kernel(%arg0: i32, %arg1: i32, %arg2: i32, %arg3: memref<32x64xbf16, #tpu.memory_space<vmem>>, %arg4: memref<64x512xbf16, #tpu.memory_space<vmem>>, %arg5: memref<32x512xf32, #tpu.memory_space<vmem>>, %arg6: memref<32x512xf32, #tpu.memory_space<vmem>>) attributes {dimension_semantics = [#tpu.dimension_semantics<parallel>, #tpu.dimension_semantics<parallel>, #tpu.dimension_semantics<arbitrary>], iteration_bounds = array<i64: 1, 1, 1>, scalar_prefetch = 0 : i64, scratch_operands = 1 : i64, tpu.core_type = #tpu.core_type<tc>, window_params = [{transform_indices = @transform_0, window_bounds = array<i64: 32, 64>}, {transform_indices = @transform_1, window_bounds = array<i64: 64, 512>}, {transform_indices = @transform_2, window_bounds = array<i64: 32, 512>}]} {
    %c0_i32 = arith.constant 0 : i32
    %0 = arith.cmpi eq, %arg2, %c0_i32 : i32
    %1 = arith.extui %0 : i1 to i32
    %c0_i32_0 = arith.constant 0 : i32
    %2 = arith.cmpi ne, %1, %c0_i32_0 : i32
    scf.if %2 {
      %cst_10 = arith.constant 0.000000e+00 : f32
      %12 = vector.broadcast %cst_10 : f32 to vector<32x512xf32>
      %c0_11 = arith.constant 0 : index
      %c0_12 = arith.constant 0 : index
      %13 = vector.load %arg6[%c0_11, %c0_12] : memref<32x512xf32, #tpu.memory_space<vmem>>, vector<32x512xf32>
      tpu.vector_store %arg6[%c0_11, %c0_12], %12 {strides = array<i32>} : memref<32x512xf32, #tpu.memory_space<vmem>>, vector<32x512xf32>,
    } else {
    }
    %c0 = arith.constant 0 : index
    %c0_1 = arith.constant 0 : index
    %3 = vector.load %arg6[%c0, %c0_1] : memref<32x512xf32, #tpu.memory_space<vmem>>, vector<32x512xf32>
    %c0_2 = arith.constant 0 : index
    %c0_3 = arith.constant 0 : index
    %4 = vector.load %arg3[%c0_2, %c0_3] : memref<32x64xbf16, #tpu.memory_space<vmem>>, vector<32x64xbf16>
    %c0_4 = arith.constant 0 : index
    %c0_5 = arith.constant 0 : index
    %5 = vector.load %arg4[%c0_4, %c0_5] : memref<64x512xbf16, #tpu.memory_space<vmem>>, vector<64x512xbf16>
    %cst = arith.constant dense<0.000000e+00> : vector<32x512xf32>
    %6 = tpu.matmul %4, %5, %cst {dimension_numbers = #tpu.dot_dimension_numbers<[1], [0], [0], [1], [0, 0, 1, 1], [], []>} : vector<32x64xbf16>, vector<64x512xbf16>, vector<32x512xf32> -> vector<32x512xf32>
    %7 = arith.addf %3, %6 : vector<32x512xf32>
    %c0_6 = arith.constant 0 : index
    %c0_7 = arith.constant 0 : index
    %8 = vector.load %arg6[%c0_6, %c0_7] : memref<32x512xf32, #tpu.memory_space<vmem>>, vector<32x512xf32>
    tpu.vector_store %arg6[%c0_6, %c0_7], %7 {strides = array<i32>} : memref<32x512xf32, #tpu.memory_space<vmem>>, vector<32x512xf32>,
    %c0_i32_8 = arith.constant 0 : i32
    %9 = arith.cmpi eq, %arg2, %c0_i32_8 : i32
    %10 = arith.extui %9 : i1 to i32
    %c0_i32_9 = arith.constant 0 : i32
    %11 = arith.cmpi ne, %10, %c0_i32_9 : i32
    scf.if %11 {
      %c0_10 = arith.constant 0 : index
      %c0_11 = arith.constant 0 : index
      %12 = vector.load %arg6[%c0_10, %c0_11] : memref<32x512xf32, #tpu.memory_space<vmem>>, vector<32x512xf32>
      %c0_12 = arith.constant 0 : index
      %c0_13 = arith.constant 0 : index
      %13 = vector.load %arg5[%c0_12, %c0_13] : memref<32x512xf32, #tpu.memory_space<vmem>>, vector<32x512xf32>
      tpu.vector_store %arg5[%c0_12, %c0_13], %12 {strides = array<i32>} : memref<32x512xf32, #tpu.memory_space<vmem>>, vector<32x512xf32>,
    } else {
    }
    return
  }
  func.func @transform_0(%arg0: i32, %arg1: i32, %arg2: i32) -> (i32, i32) {
    %c0_i32 = arith.constant 0 : i32
    return %arg0, %arg2 : i32, i32
  }
  func.func @transform_1(%arg0: i32, %arg1: i32, %arg2: i32) -> (i32, i32) {
    %c0_i32 = arith.constant 0 : i32
    return %arg2, %arg1 : i32, i32
  }
  func.func @transform_2(%arg0: i32, %arg1: i32, %arg2: i32) -> (i32, i32) {
    %c0_i32 = arith.constant 0 : i32
    return %arg0, %arg1 : i32, i32
  }
}

</mosaic_0001>

<llo_original>
// kernel: gpt2_forward.12
$region0: #{gpt2_forward.12}
  #allocation0 [shape = 'u32[]', space=smem, size = 0x4, offset = 0x4, fixed_abs, tag = 'smem constant byte address 0x4 - core index']
  #allocation1 [shape = 'u32[144,128]{1,0:T(1,128)}', space=vmem, size = 0x12000, scoped, tag = 'internal scratch']
  %s0 = inlined_call_operand.vmem [shape: bf16[32,64], index: 0, kind: input, shape index: {}]
  %s1 = inlined_call_operand.vmem [shape: bf16[1,64], index: 1, kind: input, shape index: {}]
  %s2 = inlined_call_operand.vmem [shape: bf16[1,64], index: 2, kind: input, shape index: {}]
  %s3 = inlined_call_operand.vmem [shape: bf16[64,192], index: 3, kind: input, shape index: {}]
  %s4 = inlined_call_operand.vmem [shape: bf16[1,192], index: 4, kind: input, shape index: {}]
  %s5 = inlined_call_operand.vmem [shape: bf16[32,192], index: 5, kind: output, shape index: {}]
  %s6 = sld [smem:[#allocation0]]
  $region30: #{gpt2_forward.12} parent=0
    _
  %s8 = ssub.s32 1, %s6
  %s9 = scalar_select 0, %s8, %s6
  // Predicated region
  $region2: #{gpt2_forward.12} parent=0 // pred_check
    _
  $region3: #{gpt2_forward.12} parent=0 // pred_check_branch
    %11 = sbr.rel (0) target = $region5
  $region4: #{gpt2_forward.12} parent=0 // pred_region
    _
  $region5: #{gpt2_forward.12} parent=0 // pred_fallthru
    _
  // Predicated region
  $region6: #{gpt2_forward.12} parent=0 // pred_check
    _
  $region7: #{gpt2_forward.12} parent=0 // pred_check_branch
    %13 = sbr.rel (0) target = $region9
  $region8: #{gpt2_forward.12} parent=0 // pred_region
    _
  $region9: #{gpt2_forward.12} parent=0 // pred_fallthru
    _
  // Predicated region
  $region10: #{gpt2_forward.12} parent=0 // pred_check
    _
  $region11: #{gpt2_forward.12} parent=0 // pred_check_branch
    %15 = sbr.rel (0) target = $region13
  $region12: #{gpt2_forward.12} parent=0 // pred_region
    _
  $region13: #{gpt2_forward.12} parent=0 // pred_fallthru
    _
  // Predicated region
  $region14: #{gpt2_forward.12} parent=0 // pred_check
    _
  $region15: #{gpt2_forward.12} parent=0 // pred_check_branch
    %17 = sbr.rel (0) target = $region17
  $region16: #{gpt2_forward.12} parent=0 // pred_region
    _
  $region17: #{gpt2_forward.12} parent=0 // pred_fallthru
    _
  // Predicated region
  $region18: #{gpt2_forward.12} parent=0 // pred_check
    _
  $region19: #{gpt2_forward.12} parent=0 // pred_check_branch
    %19 = sbr.rel (0) target = $region21
  $region20: #{gpt2_forward.12} parent=0 // pred_region
    _
  $region21: #{gpt2_forward.12} parent=0 // pred_fallthru
    _
  %v21 = vld [vmem:[%s0] sm:$0xf]
  %v22 = vld [vmem:[%s0 + $0x4] sm:$0xf]
  %v23 = vld [vmem:[%s0 + $0x8] sm:$0xf]
  %v24 = vld [vmem:[%s0 + $0xc] sm:$0xf]
  %v25 = vunpack.c.l.bf16 %v21
  %v26 = vunpack.c.l.bf16 %v22
  %v27 = vunpack.c.l.bf16 %v23
  %v28 = vunpack.c.l.bf16 %v24
  %vm29 = vcmask 523264
  %v30 = vsel %vm29, %v25, 0.0
  %31 = vadd.xlane.f32.xlu0 %v30
  %v32 = vpop.xlane.xlu0 %31
  %v33 = vsel %vm29, %v26, 0.0
  %34 = vadd.xlane.f32.xlu0 %v33
  %v35 = vpop.xlane.xlu0 %34
  %v36 = vsel %vm29, %v27, 0.0
  %37 = vadd.xlane.f32.xlu0 %v36
  %v38 = vpop.xlane.xlu0 %37
  %v39 = vsel %vm29, %v28, 0.0
  %40 = vadd.xlane.f32.xlu0 %v39
  %v41 = vpop.xlane.xlu0 %40
  %v42 = vrcp.pop 64.0
  %v43 = vmul.f32 %v32, %v42
  %v44 = vmul.f32 %v35, %v42
  %v45 = vmul.f32 %v38, %v42
  %v46 = vmul.f32 %v41, %v42
  %v47 = vsub.f32 %v25, %v43
  %v48 = vsub.f32 %v26, %v44
  %v49 = vsub.f32 %v27, %v45
  %v50 = vsub.f32 %v28, %v46
  %v51 = vmul.f32 %v47, %v47
  %v52 = vmul.f32 %v48, %v48
  %v53 = vmul.f32 %v49, %v49
  %v54 = vmul.f32 %v50, %v50
  %v55 = vsel %vm29, %v51, 0.0
  %56 = vadd.xlane.f32.xlu0 %v55
  %v57 = vpop.xlane.xlu0 %56
  %v58 = vsel %vm29, %v52, 0.0
  %59 = vadd.xlane.f32.xlu0 %v58
  %v60 = vpop.xlane.xlu0 %59
  %v61 = vsel %vm29, %v53, 0.0
  %62 = vadd.xlane.f32.xlu0 %v61
  %v63 = vpop.xlane.xlu0 %62
  %v64 = vsel %vm29, %v54, 0.0
  %65 = vadd.xlane.f32.xlu0 %v64
  %v66 = vpop.xlane.xlu0 %65
  %v67 = vmul.f32 %v57, %v42
  %v68 = vmul.f32 %v60, %v42
  %v69 = vmul.f32 %v63, %v42
  %v70 = vmul.f32 %v66, %v42
  %v71 = vadd.f32 %v67, 1e-05
  %v72 = vadd.f32 %v68, 1e-05
  %v73 = vadd.f32 %v69, 1e-05
  %v74 = vadd.f32 %v70, 1e-05
  %v75 = vrsqrt.pop %v71
  %v76 = vrsqrt.pop %v72
  %v77 = vrsqrt.pop %v73
  %v78 = vrsqrt.pop %v74
  %v79 = vmul.f32 %v47, %v75
  %v80 = vmul.f32 %v48, %v76
  %v81 = vmul.f32 %v49, %v77
  %v82 = vmul.f32 %v50, %v78
  %v83 = vld [vmem:[%s1] sm:$0x1]
  %v84 = vunpack.c.l.bf16 %v83
  %v85 = vlaneseq
  %v86 = vshrl.u32 %v85, 7
  %v87 = vsub.s32 0, %v86
  %v88 = vrot.slane %v84, %v87
  %v89 = vmul.f32 %v79, %v88
  %v90 = vmul.f32 %v80, %v88
  %v91 = vmul.f32 %v81, %v88
  %v92 = vmul.f32 %v82, %v88
  %v93 = vld [vmem:[%s2] sm:$0x1]
  %v94 = vunpack.c.l.bf16 %v93
  %v95 = vlaneseq
  %v96 = vshrl.u32 %v95, 7
  %v97 = vsub.s32 0, %v96
  %v98 = vrot.slane %v94, %v97
  %v99 = vadd.f32 %v89, %v98
  %v100 = vadd.f32 %v90, %v98
  %v101 = vadd.f32 %v91, %v98
  %v102 = vadd.f32 %v92, %v98
  %v103 = vpack.c.bf16 %v100, %v99
  %v104 = vpack.c.bf16 %v102, %v101
  %v105 = vld [vmem:[%s3] sm:$0xff]
  %v106 = vld [vmem:[%s3 + $0x8] sm:$0xff]
  %v107 = vld [vmem:[%s3 + $0x10] sm:$0xff]
  %v108 = vld [vmem:[%s3 + $0x18] sm:$0xff]
  %v109 = vld [vmem:[%s3 + $0x20] sm:$0xff]
  %v110 = vld [vmem:[%s3 + $0x28] sm:$0xff]
  %v111 = vld [vmem:[%s3 + $0x30] sm:$0xff]
  %v112 = vld [vmem:[%s3 + $0x38] sm:$0xff]
  %v113 = vld [vmem:[%s4] sm:$0x3]
  %v114 = vunpack.c.l.bf16 %v113
  %v116 = vlaneseq
  %v117 = vshrl.u32 %v116, 7
  %v118 = vsub.s32 0, %v117
  %v119 = vrot.slane %v114, %v118
  %v120 = vlaneseq
  %v121 = vshrl.u32 %v120, 7
  %v122 = vsub.s32 2, %v121
  %v123 = vrot.slane %v114, %v122
  %v126 = vlaneseq
  %v127 = vshrl.u32 %v126, 7
  %v128 = vsub.s32 0, %v127
  %v129 = vrot.slane %v119, %v128
  %v130 = vlaneseq
  %v131 = vshrl.u32 %v130, 7
  %v132 = vsub.s32 0, %v131
  %v133 = vrot.slane %v123, %v132
  %v142 = vunpack.c.l.b16 %v105
  %v143 = vunpack.c.h.b16 %v105
  %v144 = vunpack.c.l.b16 %v106
  %v145 = vunpack.c.h.b16 %v106
  %v146 = vunpack.c.l.b16 %v107
  %v147 = vunpack.c.h.b16 %v107
  %v148 = vunpack.c.l.b16 %v108
  %v149 = vunpack.c.h.b16 %v108
  %v150 = vunpack.c.l.b16 %v109
  %v151 = vunpack.c.h.b16 %v109
  %v152 = vunpack.c.l.b16 %v110
  %v153 = vunpack.c.h.b16 %v110
  %v154 = vunpack.c.l.b16 %v111
  %v155 = vunpack.c.h.b16 %v111
  %v156 = vunpack.c.l.b16 %v112
  %v157 = vunpack.c.h.b16 %v112
  %v158 = vpack.c.b16 %v144, %v142
  %v159 = vpack.c.b16 %v145, %v143
  %v160 = vpack.c.b16 %v148, %v146
  %v161 = vpack.c.b16 %v149, %v147
  %v162 = vpack.c.b16 %v152, %v150
  %v163 = vpack.c.b16 %v153, %v151
  %v164 = vpack.c.b16 %v156, %v154
  %v165 = vpack.c.b16 %v157, %v155
  %v175 = vsel %vm29, %v103, 0
  %v178 = vsel %vm29, %v104, 0
  %180 = vmatprep.subr.bf16.mxu0 %v159
  %181 = vmatpush1.bf16.msra.mxu0 %v158
  %182 = vmatprep.subr.bf16.mxu0 %v161
  %183 = vmatpush1.bf16.msra.mxu0 %v160
  %184 = vmatprep.subr.bf16.mxu0 %v163
  %185 = vmatpush1.bf16.msra.mxu0 %v162
  %186 = vmatprep.subr.bf16.mxu0 %v165
  %187 = vmatpush1.bf16.msra.mxu0 %v164
  %188 = vmatprep.subr.bf16.mxu0 0
  %189 = vmatpush1.bf16.msra.mxu0 0
  %190 = vmatprep.subr.bf16.mxu0 0
  %191 = vmatpush1.bf16.msra.mxu0 0
  %192 = vmatprep.subr.bf16.mxu0 0
  %193 = vmatpush1.bf16.msra.mxu0 0
  %194 = vmatprep.subr.bf16.mxu0 0
  %195 = vmatpush1.bf16.msra.mxu0 0
  %196 = vmatprep.subr.bf16.mxu0 0
  %197 = vmatpush1.bf16.msra.mxu0 0
  %198 = vmatprep.subr.bf16.mxu0 0
  %199 = vmatpush1.bf16.msra.mxu0 0
  %200 = vmatprep.subr.bf16.mxu0 0
  %201 = vmatpush1.bf16.msra.mxu0 0
  %202 = vmatprep.subr.bf16.mxu0 0
  %203 = vmatpush1.bf16.msra.mxu0 0
  %204 = vmatprep.subr.bf16.mxu0 0
  %205 = vmatpush1.bf16.msra.mxu0 0
  %206 = vmatprep.subr.bf16.mxu0 0
  %207 = vmatpush1.bf16.msra.mxu0 0
  %208 = vmatprep.subr.bf16.mxu0 0
  %209 = vmatpush1.bf16.msra.mxu0 0
  %210 = vmatprep.subr.bf16.mxu0 0
  %211 = vmatpush1.bf16.msra.mxu0 0
  %212 = vmatprep.mubr.bf16.mxu0 0
  %213 = vmatmul.mubr.bf16.gmra.mrb[0].mxu0 %v175
  %v214 = vpop.f32.mrb[0].mxu0
  %v215 = vadd.f32 %v129, %v214
  %v216 = vpop.f32.mrb[0].mxu0
  %v217 = vadd.f32 %v133, %v216
  %v218 = vpop.f32.mrb[0].mxu0
  %v219 = vadd.f32 %v129, %v218
  %v220 = vpop.f32.mrb[0].mxu0
  %v221 = vadd.f32 %v133, %v220
  %222 = vmatprep.mubr.bf16.mxu0 0
  %223 = vmatmul.mubr.bf16.gmra.mrb[0].mxu0 %v178
  %v224 = vpop.f32.mrb[0].mxu0
  %v225 = vadd.f32 %v129, %v224
  %v226 = vpop.f32.mrb[0].mxu0
  %v227 = vadd.f32 %v133, %v226
  %v228 = vpop.f32.mrb[0].mxu0
  %v229 = vadd.f32 %v129, %v228
  %v230 = vpop.f32.mrb[0].mxu0
  %v231 = vadd.f32 %v133, %v230
  %232 = vdwg.mxu0
  %v233 = vpack.c.bf16 %v219, %v215
  %v234 = vpack.c.bf16 %v221, %v217
  %v235 = vpack.c.bf16 %v229, %v225
  %v236 = vpack.c.bf16 %v231, %v227
  %v241 = vunpack.c.l.b16 %v233
  %v242 = vunpack.c.l.b16 %v234
  %v243 = vunpack.c.h.b16 %v233
  %v244 = vunpack.c.h.b16 %v234
  %v245 = vunpack.c.l.b16 %v235
  %v246 = vunpack.c.l.b16 %v236
  %v247 = vunpack.c.h.b16 %v235
  %v248 = vunpack.c.h.b16 %v236
  %v249 = vpack.c.b16 %v242, %v241
  %v250 = vpack.c.b16 %v244, %v243
  %v251 = vpack.c.b16 %v246, %v245
  %v252 = vpack.c.b16 %v248, %v247
  %vm257 = vcmask 1043456
  %vm258 = vcmask 523268
  %vm259 = vmor %vm258, %vm257
  %260 = vst.msk [vmem:[%s5] sm:$0xff] %vm259, %v249
  %261 = vst.msk [vmem:[%s5 + $0x8] sm:$0xff] %vm259, %v250
  %262 = vst.msk [vmem:[%s5 + $0x10] sm:$0xff] %vm259, %v251
  %263 = vst.msk [vmem:[%s5 + $0x18] sm:$0xff] %vm259, %v252
  // Predicated region
  $region22: #{gpt2_forward.12} parent=0 // pred_check
    _
  $region23: #{gpt2_forward.12} parent=0 // pred_check_branch
    %265 = sbr.rel (0) target = $region25
  $region24: #{gpt2_forward.12} parent=0 // pred_region
    _
  $region25: #{gpt2_forward.12} parent=0 // pred_fallthru
    _
  // Predicated region
  $region26: #{gpt2_forward.12} parent=0 // pred_check
    _
  $region27: #{gpt2_forward.12} parent=0 // pred_check_branch
    %267 = sbr.rel (0) target = $region29
  $region28: #{gpt2_forward.12} parent=0 // pred_region
    _
  $region29: #{gpt2_forward.12} parent=0 // pred_fallthru
    _

// kernel: gpt2_forward.15
$region0: #{gpt2_forward.15}
  #allocation0 [shape = 'u32[]', space=smem, size = 0x4, offset = 0x4, fixed_abs, tag = 'smem constant byte address 0x4 - core index']
  #allocation1 [shape = 'u32[144,128]{1,0:T(1,128)}', space=vmem, size = 0x12000, scoped, tag = 'internal scratch']
  %s0 = inlined_call_operand.vmem [shape: bf16[32,64], index: 0, kind: input, shape index: {}]
  %s1 = inlined_call_operand.vmem [shape: bf16[1,64], index: 1, kind: input, shape index: {}]
  %s2 = inlined_call_operand.vmem [shape: bf16[1,64], index: 2, kind: input, shape index: {}]
  %s3 = inlined_call_operand.vmem [shape: bf16[64,256], index: 3, kind: input, shape index: {}]
  %s4 = inlined_call_operand.vmem [shape: bf16[1,256], index: 4, kind: input, shape index: {}]
  %s5 = inlined_call_operand.vmem [shape: bf16[32,256], index: 5, kind: output, shape index: {}]
  %s6 = sld [smem:[#allocation0]]
  $region30: #{gpt2_forward.15} parent=0
    _
  %s8 = ssub.s32 1, %s6
  %s9 = scalar_select 0, %s8, %s6
  // Predicated region
  $region2: #{gpt2_forward.15} parent=0 // pred_check
    _
  $region3: #{gpt2_forward.15} parent=0 // pred_check_branch
    %11 = sbr.rel (0) target = $region5
  $region4: #{gpt2_forward.15} parent=0 // pred_region
    _
  $region5: #{gpt2_forward.15} parent=0 // pred_fallthru
    _
  // Predicated region
  $region6: #{gpt2_forward.15} parent=0 // pred_check
    _
  $region7: #{gpt2_forward.15} parent=0 // pred_check_branch
    %13 = sbr.rel (0) target = $region9
  $region8: #{gpt2_forward.15} parent=0 // pred_region
    _
  $region9: #{gpt2_forward.15} parent=0 // pred_fallthru
    _
  // Predicated region
  $region10: #{gpt2_forward.15} parent=0 // pred_check
    _
  $region11: #{gpt2_forward.15} parent=0 // pred_check_branch
    %15 = sbr.rel (0) target = $region13
  $region12: #{gpt2_forward.15} parent=0 // pred_region
    _
  $region13: #{gpt2_forward.15} parent=0 // pred_fallthru
    _
  // Predicated region
  $region14: #{gpt2_forward.15} parent=0 // pred_check
    _
  $region15: #{gpt2_forward.15} parent=0 // pred_check_branch
    %17 = sbr.rel (0) target = $region17
  $region16: #{gpt2_forward.15} parent=0 // pred_region
    _
  $region17: #{gpt2_forward.15} parent=0 // pred_fallthru
    _
  // Predicated region
  $region18: #{gpt2_forward.15} parent=0 // pred_check
    _
  $region19: #{gpt2_forward.15} parent=0 // pred_check_branch
    %19 = sbr.rel (0) target = $region21
  $region20: #{gpt2_forward.15} parent=0 // pred_region
    _
  $region21: #{gpt2_forward.15} parent=0 // pred_fallthru
    _
  %v21 = vld [vmem:[%s0] sm:$0xf]
  %v22 = vld [vmem:[%s0 + $0x4] sm:$0xf]
  %v23 = vld [vmem:[%s0 + $0x8] sm:$0xf]
  %v24 = vld [vmem:[%s0 + $0xc] sm:$0xf]
  %v25 = vunpack.c.l.bf16 %v21
  %v26 = vunpack.c.l.bf16 %v22
  %v27 = vunpack.c.l.bf16 %v23
  %v28 = vunpack.c.l.bf16 %v24
  %vm29 = vcmask 523264
  %v30 = vsel %vm29, %v25, 0.0
  %31 = vadd.xlane.f32.xlu0 %v30
  %v32 = vpop.xlane.xlu0 %31
  %v33 = vsel %vm29, %v26, 0.0
  %34 = vadd.xlane.f32.xlu0 %v33
  %v35 = vpop.xlane.xlu0 %34
  %v36 = vsel %vm29, %v27, 0.0
  %37 = vadd.xlane.f32.xlu0 %v36
  %v38 = vpop.xlane.xlu0 %37
  %v39 = vsel %vm29, %v28, 0.0
  %40 = vadd.xlane.f32.xlu0 %v39
  %v41 = vpop.xlane.xlu0 %40
  %v42 = vrcp.pop 64.0
  %v43 = vmul.f32 %v32, %v42
  %v44 = vmul.f32 %v35, %v42
  %v45 = vmul.f32 %v38, %v42
  %v46 = vmul.f32 %v41, %v42
  %v47 = vsub.f32 %v25, %v43
  %v48 = vsub.f32 %v26, %v44
  %v49 = vsub.f32 %v27, %v45
  %v50 = vsub.f32 %v28, %v46
  %v51 = vmul.f32 %v47, %v47
  %v52 = vmul.f32 %v48, %v48
  %v53 = vmul.f32 %v49, %v49
  %v54 = vmul.f32 %v50, %v50
  %v55 = vsel %vm29, %v51, 0.0
  %56 = vadd.xlane.f32.xlu0 %v55
  %v57 = vpop.xlane.xlu0 %56
  %v58 = vsel %vm29, %v52, 0.0
  %59 = vadd.xlane.f32.xlu0 %v58
  %v60 = vpop.xlane.xlu0 %59
  %v61 = vsel %vm29, %v53, 0.0
  %62 = vadd.xlane.f32.xlu0 %v61
  %v63 = vpop.xlane.xlu0 %62
  %v64 = vsel %vm29, %v54, 0.0
  %65 = vadd.xlane.f32.xlu0 %v64
  %v66 = vpop.xlane.xlu0 %65
  %v67 = vmul.f32 %v57, %v42
  %v68 = vmul.f32 %v60, %v42
  %v69 = vmul.f32 %v63, %v42
  %v70 = vmul.f32 %v66, %v42
  %v71 = vadd.f32 %v67, 1e-05
  %v72 = vadd.f32 %v68, 1e-05
  %v73 = vadd.f32 %v69, 1e-05
  %v74 = vadd.f32 %v70, 1e-05
  %v75 = vrsqrt.pop %v71
  %v76 = vrsqrt.pop %v72
  %v77 = vrsqrt.pop %v73
  %v78 = vrsqrt.pop %v74
  %v79 = vmul.f32 %v47, %v75
  %v80 = vmul.f32 %v48, %v76
  %v81 = vmul.f32 %v49, %v77
  %v82 = vmul.f32 %v50, %v78
  %v83 = vld [vmem:[%s1] sm:$0x1]
  %v84 = vunpack.c.l.bf16 %v83
  %v85 = vlaneseq
  %v86 = vshrl.u32 %v85, 7
  %v87 = vsub.s32 0, %v86
  %v88 = vrot.slane %v84, %v87
  %v89 = vmul.f32 %v79, %v88
  %v90 = vmul.f32 %v80, %v88
  %v91 = vmul.f32 %v81, %v88
  %v92 = vmul.f32 %v82, %v88
  %v93 = vld [vmem:[%s2] sm:$0x1]
  %v94 = vunpack.c.l.bf16 %v93
  %v95 = vlaneseq
  %v96 = vshrl.u32 %v95, 7
  %v97 = vsub.s32 0, %v96
  %v98 = vrot.slane %v94, %v97
  %v99 = vadd.f32 %v89, %v98
  %v100 = vadd.f32 %v90, %v98
  %v101 = vadd.f32 %v91, %v98
  %v102 = vadd.f32 %v92, %v98
  %v103 = vpack.c.bf16 %v100, %v99
  %v104 = vpack.c.bf16 %v102, %v101
  %v105 = vld [vmem:[%s3] sm:$0xff]
  %v106 = vld [vmem:[%s3 + $0x8] sm:$0xff]
  %v107 = vld [vmem:[%s3 + $0x10] sm:$0xff]
  %v108 = vld [vmem:[%s3 + $0x18] sm:$0xff]
  %v109 = vld [vmem:[%s3 + $0x20] sm:$0xff]
  %v110 = vld [vmem:[%s3 + $0x28] sm:$0xff]
  %v111 = vld [vmem:[%s3 + $0x30] sm:$0xff]
  %v112 = vld [vmem:[%s3 + $0x38] sm:$0xff]
  %v113 = vld [vmem:[%s4] sm:$0x3]
  %v114 = vunpack.c.l.bf16 %v113
  %v116 = vlaneseq
  %v117 = vshrl.u32 %v116, 7
  %v118 = vsub.s32 0, %v117
  %v119 = vrot.slane %v114, %v118
  %v120 = vlaneseq
  %v121 = vshrl.u32 %v120, 7
  %v122 = vsub.s32 2, %v121
  %v123 = vrot.slane %v114, %v122
  %v126 = vlaneseq
  %v127 = vshrl.u32 %v126, 7
  %v128 = vsub.s32 0, %v127
  %v129 = vrot.slane %v119, %v128
  %v130 = vlaneseq
  %v131 = vshrl.u32 %v130, 7
  %v132 = vsub.s32 0, %v131
  %v133 = vrot.slane %v123, %v132
  %v142 = vunpack.c.l.b16 %v105
  %v143 = vunpack.c.h.b16 %v105
  %v144 = vunpack.c.l.b16 %v106
  %v145 = vunpack.c.h.b16 %v106
  %v146 = vunpack.c.l.b16 %v107
  %v147 = vunpack.c.h.b16 %v107
  %v148 = vunpack.c.l.b16 %v108
  %v149 = vunpack.c.h.b16 %v108
  %v150 = vunpack.c.l.b16 %v109
  %v151 = vunpack.c.h.b16 %v109
  %v152 = vunpack.c.l.b16 %v110
  %v153 = vunpack.c.h.b16 %v110
  %v154 = vunpack.c.l.b16 %v111
  %v155 = vunpack.c.h.b16 %v111
  %v156 = vunpack.c.l.b16 %v112
  %v157 = vunpack.c.h.b16 %v112
  %v158 = vpack.c.b16 %v144, %v142
  %v159 = vpack.c.b16 %v145, %v143
  %v160 = vpack.c.b16 %v148, %v146
  %v161 = vpack.c.b16 %v149, %v147
  %v162 = vpack.c.b16 %v152, %v150
  %v163 = vpack.c.b16 %v153, %v151
  %v164 = vpack.c.b16 %v156, %v154
  %v165 = vpack.c.b16 %v157, %v155
  %v175 = vsel %vm29, %v103, 0
  %v178 = vsel %vm29, %v104, 0
  %180 = vmatprep.subr.bf16.mxu0 %v159
  %181 = vmatpush1.bf16.msra.mxu0 %v158
  %182 = vmatprep.subr.bf16.mxu0 %v161
  %183 = vmatpush1.bf16.msra.mxu0 %v160
  %184 = vmatprep.subr.bf16.mxu0 %v163
  %185 = vmatpush1.bf16.msra.mxu0 %v162
  %186 = vmatprep.subr.bf16.mxu0 %v165
  %187 = vmatpush1.bf16.msra.mxu0 %v164
  %188 = vmatprep.subr.bf16.mxu0 0
  %189 = vmatpush1.bf16.msra.mxu0 0
  %190 = vmatprep.subr.bf16.mxu0 0
  %191 = vmatpush1.bf16.msra.mxu0 0
  %192 = vmatprep.subr.bf16.mxu0 0
  %193 = vmatpush1.bf16.msra.mxu0 0
  %194 = vmatprep.subr.bf16.mxu0 0
  %195 = vmatpush1.bf16.msra.mxu0 0
  %196 = vmatprep.subr.bf16.mxu0 0
  %197 = vmatpush1.bf16.msra.mxu0 0
  %198 = vmatprep.subr.bf16.mxu0 0
  %199 = vmatpush1.bf16.msra.mxu0 0
  %200 = vmatprep.subr.bf16.mxu0 0
  %201 = vmatpush1.bf16.msra.mxu0 0
  %202 = vmatprep.subr.bf16.mxu0 0
  %203 = vmatpush1.bf16.msra.mxu0 0
  %204 = vmatprep.subr.bf16.mxu0 0
  %205 = vmatpush1.bf16.msra.mxu0 0
  %206 = vmatprep.subr.bf16.mxu0 0
  %207 = vmatpush1.bf16.msra.mxu0 0
  %208 = vmatprep.subr.bf16.mxu0 0
  %209 = vmatpush1.bf16.msra.mxu0 0
  %210 = vmatprep.subr.bf16.mxu0 0
  %211 = vmatpush1.bf16.msra.mxu0 0
  %212 = vmatprep.mubr.bf16.mxu0 0
  %213 = vmatmul.mubr.bf16.gmra.mrb[0].mxu0 %v175
  %v214 = vpop.f32.mrb[0].mxu0
  %v215 = vadd.f32 %v129, %v214
  %v216 = vpop.f32.mrb[0].mxu0
  %v217 = vadd.f32 %v133, %v216
  %v218 = vpop.f32.mrb[0].mxu0
  %v219 = vadd.f32 %v129, %v218
  %v220 = vpop.f32.mrb[0].mxu0
  %v221 = vadd.f32 %v133, %v220
  %222 = vmatprep.mubr.bf16.mxu0 0
  %223 = vmatmul.mubr.bf16.gmra.mrb[0].mxu0 %v178
  %v224 = vpop.f32.mrb[0].mxu0
  %v225 = vadd.f32 %v129, %v224
  %v226 = vpop.f32.mrb[0].mxu0
  %v227 = vadd.f32 %v133, %v226
  %v228 = vpop.f32.mrb[0].mxu0
  %v229 = vadd.f32 %v129, %v228
  %v230 = vpop.f32.mrb[0].mxu0
  %v231 = vadd.f32 %v133, %v230
  %232 = vdwg.mxu0
  %v233 = vmul.f32 %v215, 0.5
  %v234 = vmul.f32 %v217, 0.5
  %v235 = vmul.f32 %v219, 0.5
  %v236 = vmul.f32 %v221, 0.5
  %v237 = vmul.f32 %v225, 0.5
  %v238 = vmul.f32 %v227, 0.5
  %v239 = vmul.f32 %v229, 0.5
  %v240 = vmul.f32 %v231, 0.5
  %v241 = vmul.f32 %v215, 0.044715
  %v242 = vmul.f32 %v217, 0.044715
  %v243 = vmul.f32 %v219, 0.044715
  %v244 = vmul.f32 %v221, 0.044715
  %v245 = vmul.f32 %v225, 0.044715
  %v246 = vmul.f32 %v227, 0.044715
  %v247 = vmul.f32 %v229, 0.044715
  %v248 = vmul.f32 %v231, 0.044715
  %v249 = vmul.f32 %v241, %v215
  %v250 = vmul.f32 %v242, %v217
  %v251 = vmul.f32 %v243, %v219
  %v252 = vmul.f32 %v244, %v221
  %v253 = vmul.f32 %v245, %v225
  %v254 = vmul.f32 %v246, %v227
  %v255 = vmul.f32 %v247, %v229
  %v256 = vmul.f32 %v248, %v231
  %v257 = vmul.f32 %v249, %v215
  %v258 = vmul.f32 %v250, %v217
  %v259 = vmul.f32 %v251, %v219
  %v260 = vmul.f32 %v252, %v221
  %v261 = vmul.f32 %v253, %v225
  %v262 = vmul.f32 %v254, %v227
  %v263 = vmul.f32 %v255, %v229
  %v264 = vmul.f32 %v256, %v231
  %v265 = vadd.f32 %v215, %v257
  %v266 = vadd.f32 %v217, %v258
  %v267 = vadd.f32 %v219, %v259
  %v268 = vadd.f32 %v221, %v260
  %v269 = vadd.f32 %v225, %v261
  %v270 = vadd.f32 %v227, %v262
  %v271 = vadd.f32 %v229, %v263
  %v272 = vadd.f32 %v231, %v264
  %v273 = vmul.f32 %v265, 0.7978846
  %v274 = vmul.f32 %v266, 0.7978846
  %v275 = vmul.f32 %v267, 0.7978846
  %v276 = vmul.f32 %v268, 0.7978846
  %v277 = vmul.f32 %v269, 0.7978846
  %v278 = vmul.f32 %v270, 0.7978846
  %v279 = vmul.f32 %v271, 0.7978846
  %v280 = vmul.f32 %v272, 0.7978846
  %v281 = vtanh.pop %v273
  %v282 = vtanh.pop %v274
  %v283 = vtanh.pop %v275
  %v284 = vtanh.pop %v276
  %v285 = vtanh.pop %v277
  %v286 = vtanh.pop %v278
  %v287 = vtanh.pop %v279
  %v288 = vtanh.pop %v280
  %v289 = vadd.f32 %v281, 1.0
  %v290 = vadd.f32 %v282, 1.0
  %v291 = vadd.f32 %v283, 1.0
  %v292 = vadd.f32 %v284, 1.0
  %v293 = vadd.f32 %v285, 1.0
  %v294 = vadd.f32 %v286, 1.0
  %v295 = vadd.f32 %v287, 1.0
  %v296 = vadd.f32 %v288, 1.0
  %v297 = vmul.f32 %v233, %v289
  %v298 = vmul.f32 %v234, %v290
  %v299 = vmul.f32 %v235, %v291
  %v300 = vmul.f32 %v236, %v292
  %v301 = vmul.f32 %v237, %v293
  %v302 = vmul.f32 %v238, %v294
  %v303 = vmul.f32 %v239, %v295
  %v304 = vmul.f32 %v240, %v296
  %v305 = vpack.c.bf16 %v299, %v297
  %v306 = vpack.c.bf16 %v300, %v298
  %v307 = vpack.c.bf16 %v303, %v301
  %v308 = vpack.c.bf16 %v304, %v302
  %v313 = vunpack.c.l.b16 %v305
  %v314 = vunpack.c.l.b16 %v306
  %v315 = vunpack.c.h.b16 %v305
  %v316 = vunpack.c.h.b16 %v306
  %v317 = vunpack.c.l.b16 %v307
  %v318 = vunpack.c.l.b16 %v308
  %v319 = vunpack.c.h.b16 %v307
  %v320 = vunpack.c.h.b16 %v308
  %v321 = vpack.c.b16 %v314, %v313
  %v322 = vpack.c.b16 %v316, %v315
  %v323 = vpack.c.b16 %v318, %v317
  %v324 = vpack.c.b16 %v320, %v319
  %329 = vst [vmem:[%s5] sm:$0xff] %v321
  %330 = vst [vmem:[%s5 + $0x8] sm:$0xff] %v322
  %331 = vst [vmem:[%s5 + $0x10] sm:$0xff] %v323
  %332 = vst [vmem:[%s5 + $0x18] sm:$0xff] %v324
  // Predicated region
  $region22: #{gpt2_forward.15} parent=0 // pred_check
    _
  $region23: #{gpt2_forward.15} parent=0 // pred_check_branch
    %334 = sbr.rel (0) target = $region25
  $region24: #{gpt2_forward.15} parent=0 // pred_region
    _
  $region25: #{gpt2_forward.15} parent=0 // pred_fallthru
    _
  // Predicated region
  $region26: #{gpt2_forward.15} parent=0 // pred_check
    _
  $region27: #{gpt2_forward.15} parent=0 // pred_check_branch
    %336 = sbr.rel (0) target = $region29
  $region28: #{gpt2_forward.15} parent=0 // pred_region
    _
  $region29: #{gpt2_forward.15} parent=0 // pred_fallthru
    _

// kernel: gpt2_forward.14
$region0: #{gpt2_forward.14}
  #allocation0 [shape = 'u32[]', space=smem, size = 0x4, offset = 0x4, fixed_abs, tag = 'smem constant byte address 0x4 - core index']
  #allocation1 [shape = 'u32[144,128]{1,0:T(1,128)}', space=vmem, size = 0x12000, scoped, tag = 'internal scratch']
  #allocation2 [shape = 'f32[32,64]{1,0:T(8,128)}', space=vmem, size = 0x4000, scoped, tag = 'scratch operand']
  %s0 = inlined_call_operand.vmem [shape: bf16[32,64], index: 0, kind: input, shape index: {}]
  %s1 = inlined_call_operand.vmem [shape: bf16[64,64], index: 1, kind: input, shape index: {}]
  %s2 = inlined_call_operand.vmem [shape: bf16[1,64], index: 2, kind: input, shape index: {}]
  %s3 = inlined_call_operand.vmem [shape: bf16[32,64], index: 3, kind: input, shape index: {}]
  %s4 = inlined_call_operand.vmem [shape: bf16[32,64], index: 4, kind: output, shape index: {}]
  %s5 = sld [smem:[#allocation0]]
  $region34: #{gpt2_forward.14} parent=0
    _
  %s7 = ssub.s32 1, %s5
  %s8 = scalar_select 0, %s7, %s5
  // Predicated region
  $region2: #{gpt2_forward.14} parent=0 // pred_check
    _
  $region3: #{gpt2_forward.14} parent=0 // pred_check_branch
    %10 = sbr.rel (0) target = $region5
  $region4: #{gpt2_forward.14} parent=0 // pred_region
    _
  $region5: #{gpt2_forward.14} parent=0 // pred_fallthru
    _
  // Predicated region
  $region6: #{gpt2_forward.14} parent=0 // pred_check
    _
  $region7: #{gpt2_forward.14} parent=0 // pred_check_branch
    %12 = sbr.rel (0) target = $region9
  $region8: #{gpt2_forward.14} parent=0 // pred_region
    _
  $region9: #{gpt2_forward.14} parent=0 // pred_fallthru
    _
  // Predicated region
  $region10: #{gpt2_forward.14} parent=0 // pred_check
    _
  $region11: #{gpt2_forward.14} parent=0 // pred_check_branch
    %14 = sbr.rel (0) target = $region13
  $region12: #{gpt2_forward.14} parent=0 // pred_region
    _
  $region13: #{gpt2_forward.14} parent=0 // pred_fallthru
    _
  // Predicated region
  $region14: #{gpt2_forward.14} parent=0 // pred_check
    _
  $region15: #{gpt2_forward.14} parent=0 // pred_check_branch
    %16 = sbr.rel (0) target = $region17
  $region16: #{gpt2_forward.14} parent=0 // pred_region
    _
  $region17: #{gpt2_forward.14} parent=0 // pred_fallthru
    _
  %p18 = scmp.eq.s32.totalorder 0, 0
  // Predicated region
  $region18: #{gpt2_forward.14} parent=0 // pred_check
    %p19 = pneg %p18
  $region19: #{gpt2_forward.14} parent=0 // pred_check_branch
    %21 = sbr.rel (%p19) target = $region21
  $region20: #{gpt2_forward.14} parent=0 // pred_region
    %vm22 = vcmask 523264
    %23 = vst.msk [vmem:[#allocation2] sm:$0xff] %vm22, 0.0
    %24 = vst.msk [vmem:[#allocation2 + $0x8] sm:$0xff] %vm22, 0.0
    %25 = vst.msk [vmem:[#allocation2 + $0x10] sm:$0xff] %vm22, 0.0
    %26 = vst.msk [vmem:[#allocation2 + $0x18] sm:$0xff] %vm22, 0.0
  $region21: #{gpt2_forward.14} parent=0 // pred_fallthru
    _
  %v27 = vld [vmem:[#allocation2] sm:$0xff]
  %v28 = vld [vmem:[#allocation2 + $0x8] sm:$0xff]
  %v29 = vld [vmem:[#allocation2 + $0x10] sm:$0xff]
  %v30 = vld [vmem:[#allocation2 + $0x18] sm:$0xff]
  %v31 = vld [vmem:[%s0] sm:$0xf]
  %v32 = vld [vmem:[%s0 + $0x4] sm:$0xf]
  %v33 = vld [vmem:[%s0 + $0x8] sm:$0xf]
  %v34 = vld [vmem:[%s0 + $0xc] sm:$0xf]
  %v35 = vld [vmem:[%s1] sm:$0xf]
  %v36 = vld [vmem:[%s1 + $0x4] sm:$0xf]
  %v37 = vld [vmem:[%s1 + $0x8] sm:$0xf]
  %v38 = vld [vmem:[%s1 + $0xc] sm:$0xf]
  %v39 = vld [vmem:[%s1 + $0x10] sm:$0xf]
  %v40 = vld [vmem:[%s1 + $0x14] sm:$0xf]
  %v41 = vld [vmem:[%s1 + $0x18] sm:$0xf]
  %v42 = vld [vmem:[%s1 + $0x1c] sm:$0xf]
  %v47 = vunpack.c.l.b16 %v31
  %v48 = vunpack.c.l.b16 %v32
  %v49 = vunpack.c.l.b16 %v33
  %v50 = vunpack.c.l.b16 %v34
  %v51 = vpack.c.b16 %v48, %v47
  %v52 = vpack.c.b16 %v50, %v49
  %v61 = vunpack.c.l.b16 %v35
  %v62 = vunpack.c.l.b16 %v36
  %v63 = vunpack.c.l.b16 %v37
  %v64 = vunpack.c.l.b16 %v38
  %v65 = vunpack.c.l.b16 %v39
  %v66 = vunpack.c.l.b16 %v40
  %v67 = vunpack.c.l.b16 %v41
  %v68 = vunpack.c.l.b16 %v42
  %v69 = vpack.c.b16 %v62, %v61
  %v70 = vpack.c.b16 %v64, %v63
  %v71 = vpack.c.b16 %v66, %v65
  %v72 = vpack.c.b16 %v68, %v67
  %vm77 = vcmask 523264
  %v79 = vsel %vm77, %v51, 0
  %v82 = vsel %vm77, %v52, 0
  %84 = vmatprep.subr.bf16.mxu0 0
  %85 = vmatpush1.bf16.msra.mxu0 %v69
  %86 = vmatprep.subr.bf16.mxu0 0
  %87 = vmatpush1.bf16.msra.mxu0 %v70
  %88 = vmatprep.subr.bf16.mxu0 0
  %89 = vmatpush1.bf16.msra.mxu0 %v71
  %90 = vmatprep.subr.bf16.mxu0 0
  %91 = vmatpush1.bf16.msra.mxu0 %v72
  %92 = vmatprep.subr.bf16.mxu0 0
  %93 = vmatpush1.bf16.msra.mxu0 0
  %94 = vmatprep.subr.bf16.mxu0 0
  %95 = vmatpush1.bf16.msra.mxu0 0
  %96 = vmatprep.subr.bf16.mxu0 0
  %97 = vmatpush1.bf16.msra.mxu0 0
  %98 = vmatprep.subr.bf16.mxu0 0
  %99 = vmatpush1.bf16.msra.mxu0 0
  %100 = vmatprep.subr.bf16.mxu0 0
  %101 = vmatpush1.bf16.msra.mxu0 0
  %102 = vmatprep.subr.bf16.mxu0 0
  %103 = vmatpush1.bf16.msra.mxu0 0
  %104 = vmatprep.subr.bf16.mxu0 0
  %105 = vmatpush1.bf16.msra.mxu0 0
  %106 = vmatprep.subr.bf16.mxu0 0
  %107 = vmatpush1.bf16.msra.mxu0 0
  %108 = vmatprep.subr.bf16.mxu0 0
  %109 = vmatpush1.bf16.msra.mxu0 0
  %110 = vmatprep.subr.bf16.mxu0 0
  %111 = vmatpush1.bf16.msra.mxu0 0
  %112 = vmatprep.subr.bf16.mxu0 0
  %113 = vmatpush1.bf16.msra.mxu0 0
  %114 = vmatprep.subr.bf16.mxu0 0
  %115 = vmatpush1.bf16.msra.mxu0 0
  %116 = vmatprep.mubr.bf16.mxu0 0
  %117 = vmatmul.mubr.bf16.gmra.mrb[0].mxu0 %v79
  %v118 = vpop.f32.mrb[0].mxu0
  %v119 = vadd.f32 0.0, %v118
  %v120 = vpop.f32.mrb[0].mxu0
  %v121 = vpop.f32.mrb[0].mxu0
  %v122 = vadd.f32 0.0, %v121
  %v123 = vpop.f32.mrb[0].mxu0
  %124 = vmatprep.mubr.bf16.mxu0 0
  %125 = vmatmul.mubr.bf16.gmra.mrb[0].mxu0 %v82
  %v126 = vpop.f32.mrb[0].mxu0
  %v127 = vadd.f32 0.0, %v126
  %v128 = vpop.f32.mrb[0].mxu0
  %v129 = vpop.f32.mrb[0].mxu0
  %v130 = vadd.f32 0.0, %v129
  %v131 = vpop.f32.mrb[0].mxu0
  %132 = vdwg.mxu0
  %v133 = vadd.f32 %v27, %v119
  %v134 = vadd.f32 %v28, %v122
  %v135 = vadd.f32 %v29, %v127
  %v136 = vadd.f32 %v30, %v130
  %137 = vst.msk [vmem:[#allocation2] sm:$0xff] %vm77, %v133
  %138 = vst.msk [vmem:[#allocation2 + $0x8] sm:$0xff] %vm77, %v134
  %139 = vst.msk [vmem:[#allocation2 + $0x10] sm:$0xff] %vm77, %v135
  %140 = vst.msk [vmem:[#allocation2 + $0x18] sm:$0xff] %vm77, %v136
  // Predicated region
  $region22: #{gpt2_forward.14} parent=0 // pred_check
    %p141 = pneg %p18
  $region23: #{gpt2_forward.14} parent=0 // pred_check_branch
    %143 = sbr.rel (%p141) target = $region25
  $region24: #{gpt2_forward.14} parent=0 // pred_region
    %v144 = vld [vmem:[#allocation2] sm:$0xff]
    %v145 = vld [vmem:[#allocation2 + $0x8] sm:$0xff]
    %v146 = vld [vmem:[#allocation2 + $0x10] sm:$0xff]
    %v147 = vld [vmem:[#allocation2 + $0x18] sm:$0xff]
    %v148 = vld [vmem:[%s2] sm:$0x1]
    %v149 = vunpack.c.l.bf16 %v148
    %v150 = vlaneseq
    %v151 = vshrl.u32 %v150, 7
    %v152 = vsub.s32 0, %v151
    %v153 = vrot.slane %v149, %v152
    %v154 = vadd.f32 %v144, %v153
    %v155 = vadd.f32 %v145, %v153
    %v156 = vadd.f32 %v146, %v153
    %v157 = vadd.f32 %v147, %v153
    %v158 = vld [vmem:[%s3] sm:$0xf]
    %v159 = vld [vmem:[%s3 + $0x4] sm:$0xf]
    %v160 = vld [vmem:[%s3 + $0x8] sm:$0xf]
    %v161 = vld [vmem:[%s3 + $0xc] sm:$0xf]
    %v162 = vunpack.c.l.bf16 %v158
    %v163 = vunpack.c.l.bf16 %v159
    %v164 = vunpack.c.l.bf16 %v160
    %v165 = vunpack.c.l.bf16 %v161
    %v166 = vadd.f32 %v154, %v162
    %v167 = vadd.f32 %v155, %v163
    %v168 = vadd.f32 %v156, %v164
    %v169 = vadd.f32 %v157, %v165
    %v170 = vpack.c.bf16 %v167, %v166
    %v171 = vpack.c.bf16 %v169, %v168
    %v174 = vunpack.c.l.b16 %v170
    %v175 = vunpack.c.h.b16 %v170
    %v176 = vunpack.c.l.b16 %v171
    %v177 = vunpack.c.h.b16 %v171
    %v178 = vpack.c.b16 %v174, %v174
    %v179 = vpack.c.b16 %v175, %v175
    %v180 = vpack.c.b16 %v176, %v176
    %v181 = vpack.c.b16 %v177, %v177
    %vm186 = vcmask 519168
    %187 = vst.msk [vmem:[%s4] sm:$0xf] %vm186, %v178
    %188 = vst.msk [vmem:[%s4 + $0x4] sm:$0xf] %vm186, %v179
    %189 = vst.msk [vmem:[%s4 + $0x8] sm:$0xf] %vm186, %v180
    %190 = vst.msk [vmem:[%s4 + $0xc] sm:$0xf] %vm186, %v181
  $region25: #{gpt2_forward.14} parent=0 // pred_fallthru
    _
  // Predicated region
  $region26: #{gpt2_forward.14} parent=0 // pred_check
    _
  $region27: #{gpt2_forward.14} parent=0 // pred_check_branch
    %192 = sbr.rel (0) target = $region29
  $region28: #{gpt2_forward.14} parent=0 // pred_region
    _
  $region29: #{gpt2_forward.14} parent=0 // pred_fallthru
    _
  // Predicated region
  $region30: #{gpt2_forward.14} parent=0 // pred_check
    _
  $region31: #{gpt2_forward.14} parent=0 // pred_check_branch
    %194 = sbr.rel (0) target = $region33
  $region32: #{gpt2_forward.14} parent=0 // pred_region
    _
  $region33: #{gpt2_forward.14} parent=0 // pred_fallthru
    _

// kernel: gpt2_forward.13
$region0: #{gpt2_forward.13}
  #allocation0 [shape = 'u32[]', space=smem, size = 0x4, offset = 0x4, fixed_abs, tag = 'smem constant byte address 0x4 - core index']
  #allocation1 [shape = 'u32[144,128]{1,0:T(1,128)}', space=vmem, size = 0x12000, scoped, tag = 'internal scratch']
  %s0 = inlined_call_operand.vmem [shape: bf16[2,4,16,16], index: 0, kind: input, shape index: {}]
  %s1 = inlined_call_operand.vmem [shape: bf16[2,4,16,16], index: 1, kind: input, shape index: {}]
  %s2 = inlined_call_operand.vmem [shape: bf16[2,4,16,16], index: 2, kind: input, shape index: {}]
  %s3 = inlined_call_operand.vmem [shape: bf16[2,4,16,16], index: 3, kind: output, shape index: {}]
  %s4 = sld [smem:[#allocation0]]
  $region52: #{gpt2_forward.13} parent=0
    _
  %s6 = ssub.s32 1, %s4
  %s7 = scalar_select 0, %s6, %s4
  loop: start=0, step=1, limit=4
  $region2: #{gpt2_forward.13} parent=0 // loop_pre_header
    _
  $region3: #{gpt2_forward.13} parent=0 // loop_header
    %s9 = sphi 0, %s13
    %p10 = scmp.ge.s32.totalorder %s9, 4
    %s16 = sphi 0, %s28
    %s17 = sphi 0, %s24
    %s18 = sphi 0, %s16
    %s19 = sphi 0, %s17
    %s20 = sphi 0, %s18
    %s21 = sphi 0, %s19
    %s33 = sphi 0, %s35
    %s36 = sphi 0, %s33
    %s37 = sphi 0, %s36
    %s53 = sphi 0, %s37
    %s59 = sphi 0, %s61
    %s62 = sphi 0, %s59
    %s63 = sphi 0, %s62
    %s79 = sphi 0, %s63
    %s85 = sphi 0, %s87
    %s88 = sphi 0, %s85
    %s89 = sphi 0, %s88
    %s105 = sphi 0, %s89
    %s113 = sphi 0, %s115
    %s116 = sphi 0, %s113
    %s117 = sphi 0, %s116
    %s133 = sphi 0, %s117
  $region4: #{gpt2_forward.13} parent=0 // loop_header_branch
    %12 = sbr.rel (%p10) target = $region8
  $region5: #{gpt2_forward.13} parent=0 // loop_body
    %s14 = ssub.s32 %s9, 1
    %s15 = ssub.s32 %s9, 2
    %s22 = sadd.s32 1, %s17
    %p23 = scmp.ge.s32.totalorder %s22, 1
    %s24 = scalar_select %p23, 0, %s22
    %s25 = sadd.s32 1, %s16
    %s26 = scalar_select %p23, %s25, %s16
    %p27 = scmp.ge.s32.totalorder %s26, 2
    %s28 = scalar_select %p27, 0, %s26
    %s29 = ssub.s32 %s16, %s28
    %s30 = ssub.s32 %s17, %s24
    %s31 = sor.u32 %s29, %s30
    %p32 = scmp.eq.s32.totalorder %s31, 0
    %s34 = sadd.s32 %s33, 1
    %s35 = scalar_select %p32, %s33, %s34
    %p38 = pneg %p32
    %p39 = scmp.eq.s32.totalorder %s9, 1
    %p40 = por %p38, %p39
    %p41 = scmp.ne.s32.totalorder %s33, %s36
    %p42 = scmp.eq.s32.totalorder %s9, 0
    %p43 = por %p41, %p42
    %p44 = scmp.ne.s32.totalorder %s33, %s36
    %p45 = scmp.eq.s32.totalorder %s14, 1
    %p46 = por %p44, %p45
    %p47 = scmp.ne.s32.totalorder %s36, %s37
    %p48 = scmp.eq.s32.totalorder %s14, 0
    %p49 = por %p47, %p48
    %p50 = scmp.ne.s32.totalorder %s36, %s37
    %p51 = scmp.eq.s32.totalorder %s15, 1
    %p52 = por %p50, %p51
    %p54 = scmp.ne.s32.totalorder %s37, %s53
    %p55 = scmp.eq.s32.totalorder %s15, 0
    %p56 = por %p54, %p55
    %s57 = ssub.s32 %s16, %s28
    %p58 = scmp.eq.s32.totalorder %s57, 0
    %s60 = sadd.s32 %s59, 1
    %s61 = scalar_select %p58, %s59, %s60
    %p64 = pneg %p58
    %p65 = scmp.eq.s32.totalorder %s9, 1
    %p66 = por %p64, %p65
    %p67 = scmp.ne.s32.totalorder %s59, %s62
    %p68 = scmp.eq.s32.totalorder %s9, 0
    %p69 = por %p67, %p68
    %p70 = scmp.ne.s32.totalorder %s59, %s62
    %p71 = scmp.eq.s32.totalorder %s14, 1
    %p72 = por %p70, %p71
    %p73 = scmp.ne.s32.totalorder %s62, %s63
    %p74 = scmp.eq.s32.totalorder %s14, 0
    %p75 = por %p73, %p74
    %p76 = scmp.ne.s32.totalorder %s62, %s63
    %p77 = scmp.eq.s32.totalorder %s15, 1
    %p78 = por %p76, %p77
    %p80 = scmp.ne.s32.totalorder %s63, %s79
    %p81 = scmp.eq.s32.totalorder %s15, 0
    %p82 = por %p80, %p81
    %s83 = ssub.s32 %s16, %s28
    %p84 = scmp.eq.s32.totalorder %s83, 0
    %s86 = sadd.s32 %s85, 1
    %s87 = scalar_select %p84, %s85, %s86
    %p90 = pneg %p84
    %p91 = scmp.eq.s32.totalorder %s9, 1
    %p92 = por %p90, %p91
    %p93 = scmp.ne.s32.totalorder %s85, %s88
    %p94 = scmp.eq.s32.totalorder %s9, 0
    %p95 = por %p93, %p94
    %p96 = scmp.ne.s32.totalorder %s85, %s88
    %p97 = scmp.eq.s32.totalorder %s14, 1
    %p98 = por %p96, %p97
    %p99 = scmp.ne.s32.totalorder %s88, %s89
    %p100 = scmp.eq.s32.totalorder %s14, 0
    %p101 = por %p99, %p100
    %p102 = scmp.ne.s32.totalorder %s88, %s89
    %p103 = scmp.eq.s32.totalorder %s15, 1
    %p104 = por %p102, %p103
    %p106 = scmp.ne.s32.totalorder %s89, %s105
    %p107 = scmp.eq.s32.totalorder %s15, 0
    %p108 = por %p106, %p107
    %s109 = ssub.s32 %s16, %s28
    %s110 = ssub.s32 %s17, %s24
    %s111 = sor.u32 %s109, %s110
    %p112 = scmp.eq.s32.totalorder %s111, 0
    %s114 = sadd.s32 %s113, 1
    %s115 = scalar_select %p112, %s113, %s114
    %p118 = pneg %p112
    %p119 = scmp.eq.s32.totalorder %s9, 1
    %p120 = por %p118, %p119
    %p121 = scmp.ne.s32.totalorder %s113, %s116
    %p122 = scmp.eq.s32.totalorder %s9, 0
    %p123 = por %p121, %p122
    %p124 = scmp.ne.s32.totalorder %s113, %s116
    %p125 = scmp.eq.s32.totalorder %s14, 1
    %p126 = por %p124, %p125
    %p127 = scmp.ne.s32.totalorder %s116, %s117
    %p128 = scmp.eq.s32.totalorder %s14, 0
    %p129 = por %p127, %p128
    %p130 = scmp.ne.s32.totalorder %s116, %s117
    %p131 = scmp.eq.s32.totalorder %s15, 1
    %p132 = por %p130, %p131
    %p134 = scmp.ne.s32.totalorder %s117, %s133
    %p135 = scmp.eq.s32.totalorder %s15, 0
    %p136 = por %p134, %p135
    %p137 = scmp.le.s32.totalorder 1, %s9
    %p138 = scmp.lt.s32.totalorder %s9, 3
    %p139 = pnand %p137, %p138
    %p140 = pneg %p139
    // Predicated region
    $region9: #{gpt2_forward.13} parent=5 // pred_check
      _
    $region10: #{gpt2_forward.13} parent=5 // pred_check_branch
      %142 = sbr.rel (%p139) target = $region12
    $region11: #{gpt2_forward.13} parent=5 // pred_region
      %s143 = ssub.s32 %s9, 1
    $region12: #{gpt2_forward.13} parent=5 // pred_fallthru
      _
    %p144 = scmp.lt.s32.totalorder %s9, 2
    // Predicated region
    $region13: #{gpt2_forward.13} parent=5 // pred_check
      %p145 = pneg %p144
    $region14: #{gpt2_forward.13} parent=5 // pred_check_branch
      %147 = sbr.rel (%p145) target = $region16
    $region15: #{gpt2_forward.13} parent=5 // pred_region
      // Predicated region
      $region17: #{gpt2_forward.13} parent=15 // pred_check
        %p148 = pneg %p43
      $region18: #{gpt2_forward.13} parent=15 // pred_check_branch
        %150 = sbr.rel (%p148) target = $region20
      $region19: #{gpt2_forward.13} parent=15 // pred_region
        %s151 = smul.u32 2, %s17
        %p152 = scmp.lt.s32.totalorder %s16, 1
        %s153 = scalar_select %p152, %s16, 1
        %p154 = scmp.lt.s32.totalorder %s151, 1
        %s155 = scalar_select %p154, %s151, 1
        %s156 = smul.addr %s153, 8
        %s157 = sadd.s32 %s155, %s156
        %s158 = smul.addr %s157, 4
        %s159 = scalar_lea.vmem %s0, %s158
        %s160 = smul.u32 2, %s17
      $region20: #{gpt2_forward.13} parent=15 // pred_fallthru
        _
      // Predicated region
      $region21: #{gpt2_forward.13} parent=15 // pred_check
        %p161 = pneg %p69
      $region22: #{gpt2_forward.13} parent=15 // pred_check_branch
        %163 = sbr.rel (%p161) target = $region24
      $region23: #{gpt2_forward.13} parent=15 // pred_region
        %p164 = scmp.lt.s32.totalorder %s16, 1
        %s165 = scalar_select %p164, %s16, 1
        %s166 = smul.addr %s165, 8
        %s167 = smul.addr %s166, 4
        %s168 = scalar_lea.vmem %s1, %s167
      $region24: #{gpt2_forward.13} parent=15 // pred_fallthru
        _
      // Predicated region
      $region25: #{gpt2_forward.13} parent=15 // pred_check
        %p169 = pneg %p95
      $region26: #{gpt2_forward.13} parent=15 // pred_check_branch
        %171 = sbr.rel (%p169) target = $region28
      $region27: #{gpt2_forward.13} parent=15 // pred_region
        %p172 = scmp.lt.s32.totalorder %s16, 1
        %s173 = scalar_select %p172, %s16, 1
        %s174 = smul.addr %s173, 8
        %s175 = smul.addr %s174, 4
        %s176 = scalar_lea.vmem %s2, %s175
      $region28: #{gpt2_forward.13} parent=15 // pred_fallthru
        _
    $region16: #{gpt2_forward.13} parent=5 // pred_fallthru
      _
    %p177 = scmp.le.s32.totalorder 1, %s9
    %p178 = scmp.lt.s32.totalorder %s9, 3
    %p179 = pnand %p177, %p178
    %p180 = pneg %p179
    // Predicated region
    $region29: #{gpt2_forward.13} parent=5 // pred_check
      _
    $region30: #{gpt2_forward.13} parent=5 // pred_check_branch
      %182 = sbr.rel (%p179) target = $region32
    $region31: #{gpt2_forward.13} parent=5 // pred_region
      %s183 = ssub.s32 %s9, 1
      %s184 = smul.u32 2, %s19
      %p185 = scmp.lt.s32.totalorder %s18, 1
      %s186 = scalar_select %p185, %s18, 1
      %p187 = scmp.lt.s32.totalorder %s184, 1
      %s188 = scalar_select %p187, %s184, 1
      %s189 = smul.addr %s186, 8
      %s190 = sadd.s32 %s188, %s189
      %s191 = smul.addr %s190, 4
      %s192 = scalar_lea.vmem %s0, %s191
      %p193 = pneg %p49
      %p194 = pneg %p46
      %p195 = scmp.lt.s32.totalorder %s18, 1
      %s196 = scalar_select %p195, %s18, 1
      %s197 = smul.addr %s196, 8
      %s198 = smul.addr %s197, 4
      %s199 = scalar_lea.vmem %s1, %s198
      %p200 = pneg %p75
      %p201 = pneg %p72
      %p202 = scmp.lt.s32.totalorder %s18, 1
      %s203 = scalar_select %p202, %s18, 1
      %s204 = smul.addr %s203, 8
      %s205 = smul.addr %s204, 4
      %s206 = scalar_lea.vmem %s2, %s205
      %p207 = pneg %p101
      %p208 = pneg %p98
      %p209 = pneg %p129
      %p210 = pneg %p126
      %s211 = smul.u32 2, %s19
      %p212 = scmp.lt.s32.totalorder %s18, 1
      %s213 = scalar_select %p212, %s18, 1
      %p214 = scmp.lt.s32.totalorder %s211, 1
      %s215 = scalar_select %p214, %s211, 1
      %s216 = smul.addr %s213, 8
      %s217 = sadd.s32 %s215, %s216
      %s218 = smul.addr %s217, 4
      %s219 = scalar_lea.vmem %s3, %s218
      %s220 = smul.u32 2, %s19
      %p221 = scmp.lt.s32.totalorder %s18, 1
      %s222 = scalar_select %p221, %s18, 1
      %p223 = scmp.lt.s32.totalorder %s220, 1
      %s224 = scalar_select %p223, %s220, 1
      %s225 = smul.addr %s222, 8
      %s226 = sadd.s32 %s224, %s225
      %s227 = smul.addr %s226, 4
      %s228 = scalar_lea.vmem %s0, %s227
      %s229 = smul.u32 2, %s19
      %p230 = scmp.lt.s32.totalorder %s18, 1
      %s231 = scalar_select %p230, %s18, 1
      %s232 = smul.addr %s231, 8
      %s233 = smul.addr %s232, 4
      %s234 = scalar_lea.vmem %s1, %s233
      %p235 = scmp.lt.s32.totalorder %s18, 1
      %s236 = scalar_select %p235, %s18, 1
      %s237 = smul.addr %s236, 8
      %s238 = smul.addr %s237, 4
      %s239 = scalar_lea.vmem %s2, %s238
      %s240 = smul.u32 2, %s19
      %p241 = scmp.lt.s32.totalorder %s18, 1
      %s242 = scalar_select %p241, %s18, 1
      %p243 = scmp.lt.s32.totalorder %s240, 1
      %s244 = scalar_select %p243, %s240, 1
      %s245 = smul.addr %s242, 8
      %s246 = sadd.s32 %s244, %s245
      %s247 = smul.addr %s246, 4
      %s248 = scalar_lea.vmem %s3, %s247
      %s249 = smul.u32 2, %s19
      %v251 = vld [vmem:[%s228] sm:$0xf]
      %v252 = vld [vmem:[%s228 + $0x4] sm:$0xf]
      %v253 = vld [vmem:[%s228 + $0x8] sm:$0xf]
      %v254 = vld [vmem:[%s228 + $0xc] sm:$0xf]
      %v255 = vld [vmem:[%s228 + $0x10] sm:$0xf]
      %v256 = vld [vmem:[%s228 + $0x14] sm:$0xf]
      %v257 = vld [vmem:[%s228 + $0x18] sm:$0xf]
      %v258 = vld [vmem:[%s228 + $0x1c] sm:$0xf]
      %v259 = vunpack.c.l.bf16 %v251
      %v260 = vunpack.c.l.bf16 %v252
      %v261 = vunpack.c.l.bf16 %v253
      %v262 = vunpack.c.l.bf16 %v254
      %v263 = vunpack.c.l.bf16 %v255
      %v264 = vunpack.c.l.bf16 %v256
      %v265 = vunpack.c.l.bf16 %v257
      %v266 = vunpack.c.l.bf16 %v258
      %v267 = vmul.f32 %v259, 0.25
      %v268 = vmul.f32 %v260, 0.25
      %v269 = vmul.f32 %v261, 0.25
      %v270 = vmul.f32 %v262, 0.25
      %v271 = vmul.f32 %v263, 0.25
      %v272 = vmul.f32 %v264, 0.25
      %v273 = vmul.f32 %v265, 0.25
      %v274 = vmul.f32 %v266, 0.25
      %v275 = vpack.c.bf16 %v268, %v267
      %v276 = vpack.c.bf16 %v270, %v269
      %v277 = vpack.c.bf16 %v272, %v271
      %v278 = vpack.c.bf16 %v274, %v273
      // While loop
      $region33: #{gpt2_forward.13} parent=31 // loop_pre_header
        _
      $region34: #{gpt2_forward.13} parent=31 // loop_header
        %s280 = sphi 0, %s282
        %p281 = scmp.ge.s32.totalorder %s280, %s19
        %v285 = vphi -1e+30, %v565
        %v286 = vphi -1e+30, %v566
        %v287 = vphi -1e+30, %v567
        %v288 = vphi -1e+30, %v568
        %v289 = vphi -1e+30, %v569
        %v290 = vphi -1e+30, %v570
        %v291 = vphi -1e+30, %v571
        %v292 = vphi -1e+30, %v572
        %v293 = vphi 0.0, %v653
        %v294 = vphi 0.0, %v654
        %v295 = vphi 0.0, %v655
        %v296 = vphi 0.0, %v656
        %v297 = vphi 0.0, %v657
        %v298 = vphi 0.0, %v658
        %v299 = vphi 0.0, %v659
        %v300 = vphi 0.0, %v660
        %v301 = vphi 0.0, %v873
        %v302 = vphi 0.0, %v874
        %v303 = vphi 0.0, %v875
        %v304 = vphi 0.0, %v876
        %v305 = vphi 0.0, %v877
        %v306 = vphi 0.0, %v878
        %v307 = vphi 0.0, %v879
        %v308 = vphi 0.0, %v880
      $region35: #{gpt2_forward.13} parent=31 // loop_header_branch
        %284 = sbr.rel (%p281) target = $region39
      $region36: #{gpt2_forward.13} parent=31 // loop_body
        %s309 = smul.u32 %s280, 16
        %s310 = sshra.s32 %s309, 3
        %s311 = sand.u32 %s309, 7
        %s312 = smul.addr %s310, 4
        %s313 = scalar_lea.vmem %s234, %s312
        %v314 = vld [vmem:[%s313] sm:$0xf]
        %v315 = vld [vmem:[%s313 + $0x4] sm:$0xf]
        %v316 = vld [vmem:[%s313 + $0x8] sm:$0xf]
        %v317 = vld [vmem:[%s313 + $0xc] sm:$0xf]
        %v318 = vld [vmem:[%s313 + $0x10] sm:$0xf]
        %v319 = vld [vmem:[%s313 + $0x14] sm:$0xf]
        %v320 = vld [vmem:[%s313 + $0x18] sm:$0xf]
        %v321 = vld [vmem:[%s313 + $0x1c] sm:$0xf]
        %s322 = smul.addr %s310, 4
        %s323 = scalar_lea.vmem %s239, %s322
        %v324 = vld [vmem:[%s323] sm:$0xf]
        %v325 = vld [vmem:[%s323 + $0x4] sm:$0xf]
        %v326 = vld [vmem:[%s323 + $0x8] sm:$0xf]
        %v327 = vld [vmem:[%s323 + $0xc] sm:$0xf]
        %v328 = vld [vmem:[%s323 + $0x10] sm:$0xf]
        %v329 = vld [vmem:[%s323 + $0x14] sm:$0xf]
        %v330 = vld [vmem:[%s323 + $0x18] sm:$0xf]
        %v331 = vld [vmem:[%s323 + $0x1c] sm:$0xf]
        %v334 = vunpack.c.l.b16 %v314
        %v335 = vunpack.c.l.b16 %v315
        %v336 = vpack.c.b16 %v335, %v334
        %vm337 = vcmask 130048
        %v339 = vsel %vm337, %v275, 0
        %v342 = vsel %vm337, %v336, 0
        %344 = vmatprep.subr.bf16.mxu0 0
        %345 = vmatpush1.bf16.xpose.msra.mxu0 %v342
        %346 = vmatprep.subr.bf16.mxu0 0
        %347 = vmatpush1.bf16.xpose.msra.mxu0 0
        %348 = vmatprep.subr.bf16.mxu0 0
        %349 = vmatpush1.bf16.xpose.msra.mxu0 0
        %350 = vmatprep.subr.bf16.mxu0 0
        %351 = vmatpush1.bf16.xpose.msra.mxu0 0
        %352 = vmatprep.subr.bf16.mxu0 0
        %353 = vmatpush1.bf16.xpose.msra.mxu0 0
        %354 = vmatprep.subr.bf16.mxu0 0
        %355 = vmatpush1.bf16.xpose.msra.mxu0 0
        %356 = vmatprep.subr.bf16.mxu0 0
        %357 = vmatpush1.bf16.xpose.msra.mxu0 0
        %358 = vmatprep.subr.bf16.mxu0 0
        %359 = vmatpush1.bf16.xpose.msra.mxu0 0
        %360 = vmatprep.subr.bf16.mxu0 0
        %361 = vmatpush1.bf16.xpose.msra.mxu0 0
        %362 = vmatprep.subr.bf16.mxu0 0
        %363 = vmatpush1.bf16.xpose.msra.mxu0 0
        %364 = vmatprep.subr.bf16.mxu0 0
        %365 = vmatpush1.bf16.xpose.msra.mxu0 0
        %366 = vmatprep.subr.bf16.mxu0 0
        %367 = vmatpush1.bf16.xpose.msra.mxu0 0
        %368 = vmatprep.subr.bf16.mxu0 0
        %369 = vmatpush1.bf16.xpose.msra.mxu0 0
        %370 = vmatprep.subr.bf16.mxu0 0
        %371 = vmatpush1.bf16.xpose.msra.mxu0 0
        %372 = vmatprep.subr.bf16.mxu0 0
        %373 = vmatpush1.bf16.xpose.msra.mxu0 0
        %374 = vmatprep.subr.bf16.mxu0 0
        %375 = vmatpush1.bf16.xpose.msra.mxu0 0
        %376 = vmatprep.mubr.bf16.mxu0 0
        %377 = vmatmul.mubr.bf16.gmra.mrb[0].mxu0 %v339
        %v378 = vpop.f32.mrb[0].mxu0
        %v379 = vadd.f32 0.0, %v378
        %v380 = vpop.f32.mrb[0].mxu0
        %v381 = vpop.f32.mrb[0].mxu0
        %v382 = vadd.f32 0.0, %v381
        %v383 = vpop.f32.mrb[0].mxu0
        %384 = vdwg.mxu0
        %v387 = vunpack.c.l.b16 %v316
        %v388 = vunpack.c.l.b16 %v317
        %v389 = vpack.c.b16 %v388, %v387
        %v391 = vsel %vm337, %v276, 0
        %v394 = vsel %vm337, %v389, 0
        %396 = vmatprep.subr.bf16.mxu0 0
        %397 = vmatpush1.bf16.xpose.msra.mxu0 %v394
        %398 = vmatprep.subr.bf16.mxu0 0
        %399 = vmatpush1.bf16.xpose.msra.mxu0 0
        %400 = vmatprep.subr.bf16.mxu0 0
        %401 = vmatpush1.bf16.xpose.msra.mxu0 0
        %402 = vmatprep.subr.bf16.mxu0 0
        %403 = vmatpush1.bf16.xpose.msra.mxu0 0
        %404 = vmatprep.subr.bf16.mxu0 0
        %405 = vmatpush1.bf16.xpose.msra.mxu0 0
        %406 = vmatprep.subr.bf16.mxu0 0
        %407 = vmatpush1.bf16.xpose.msra.mxu0 0
        %408 = vmatprep.subr.bf16.mxu0 0
        %409 = vmatpush1.bf16.xpose.msra.mxu0 0
        %410 = vmatprep.subr.bf16.mxu0 0
        %411 = vmatpush1.bf16.xpose.msra.mxu0 0
        %412 = vmatprep.subr.bf16.mxu0 0
        %413 = vmatpush1.bf16.xpose.msra.mxu0 0
        %414 = vmatprep.subr.bf16.mxu0 0
        %415 = vmatpush1.bf16.xpose.msra.mxu0 0
        %416 = vmatprep.subr.bf16.mxu0 0
        %417 = vmatpush1.bf16.xpose.msra.mxu0 0
        %418 = vmatprep.subr.bf16.mxu0 0
        %419 = vmatpush1.bf16.xpose.msra.mxu0 0
        %420 = vmatprep.subr.bf16.mxu0 0
        %421 = vmatpush1.bf16.xpose.msra.mxu0 0
        %422 = vmatprep.subr.bf16.mxu0 0
        %423 = vmatpush1.bf16.xpose.msra.mxu0 0
        %424 = vmatprep.subr.bf16.mxu0 0
        %425 = vmatpush1.bf16.xpose.msra.mxu0 0
        %426 = vmatprep.subr.bf16.mxu0 0
        %427 = vmatpush1.bf16.xpose.msra.mxu0 0
        %428 = vmatprep.mubr.bf16.mxu0 0
        %429 = vmatmul.mubr.bf16.gmra.mrb[0].mxu0 %v391
        %v430 = vpop.f32.mrb[0].mxu0
        %v431 = vadd.f32 0.0, %v430
        %v432 = vpop.f32.mrb[0].mxu0
        %v433 = vpop.f32.mrb[0].mxu0
        %v434 = vadd.f32 0.0, %v433
        %v435 = vpop.f32.mrb[0].mxu0
        %436 = vdwg.mxu0
        %v439 = vunpack.c.l.b16 %v318
        %v440 = vunpack.c.l.b16 %v319
        %v441 = vpack.c.b16 %v440, %v439
        %v443 = vsel %vm337, %v277, 0
        %v446 = vsel %vm337, %v441, 0
        %448 = vmatprep.subr.bf16.mxu0 0
        %449 = vmatpush1.bf16.xpose.msra.mxu0 %v446
        %450 = vmatprep.subr.bf16.mxu0 0
        %451 = vmatpush1.bf16.xpose.msra.mxu0 0
        %452 = vmatprep.subr.bf16.mxu0 0
        %453 = vmatpush1.bf16.xpose.msra.mxu0 0
        %454 = vmatprep.subr.bf16.mxu0 0
        %455 = vmatpush1.bf16.xpose.msra.mxu0 0
        %456 = vmatprep.subr.bf16.mxu0 0
        %457 = vmatpush1.bf16.xpose.msra.mxu0 0
        %458 = vmatprep.subr.bf16.mxu0 0
        %459 = vmatpush1.bf16.xpose.msra.mxu0 0
        %460 = vmatprep.subr.bf16.mxu0 0
        %461 = vmatpush1.bf16.xpose.msra.mxu0 0
        %462 = vmatprep.subr.bf16.mxu0 0
        %463 = vmatpush1.bf16.xpose.msra.mxu0 0
        %464 = vmatprep.subr.bf16.mxu0 0
        %465 = vmatpush1.bf16.xpose.msra.mxu0 0
        %466 = vmatprep.subr.bf16.mxu0 0
        %467 = vmatpush1.bf16.xpose.msra.mxu0 0
        %468 = vmatprep.subr.bf16.mxu0 0
        %469 = vmatpush1.bf16.xpose.msra.mxu0 0
        %470 = vmatprep.subr.bf16.mxu0 0
        %471 = vmatpush1.bf16.xpose.msra.mxu0 0
        %472 = vmatprep.subr.bf16.mxu0 0
        %473 = vmatpush1.bf16.xpose.msra.mxu0 0
        %474 = vmatprep.subr.bf16.mxu0 0
        %475 = vmatpush1.bf16.xpose.msra.mxu0 0
        %476 = vmatprep.subr.bf16.mxu0 0
        %477 = vmatpush1.bf16.xpose.msra.mxu0 0
        %478 = vmatprep.subr.bf16.mxu0 0
        %479 = vmatpush1.bf16.xpose.msra.mxu0 0
        %480 = vmatprep.mubr.bf16.mxu0 0
        %481 = vmatmul.mubr.bf16.gmra.mrb[0].mxu0 %v443
        %v482 = vpop.f32.mrb[0].mxu0
        %v483 = vadd.f32 0.0, %v482
        %v484 = vpop.f32.mrb[0].mxu0
        %v485 = vpop.f32.mrb[0].mxu0
        %v486 = vadd.f32 0.0, %v485
        %v487 = vpop.f32.mrb[0].mxu0
        %488 = vdwg.mxu0
        %v491 = vunpack.c.l.b16 %v320
        %v492 = vunpack.c.l.b16 %v321
        %v493 = vpack.c.b16 %v492, %v491
        %v495 = vsel %vm337, %v278, 0
        %v498 = vsel %vm337, %v493, 0
        %500 = vmatprep.subr.bf16.mxu0 0
        %501 = vmatpush1.bf16.xpose.msra.mxu0 %v498
        %502 = vmatprep.subr.bf16.mxu0 0
        %503 = vmatpush1.bf16.xpose.msra.mxu0 0
        %504 = vmatprep.subr.bf16.mxu0 0
        %505 = vmatpush1.bf16.xpose.msra.mxu0 0
        %506 = vmatprep.subr.bf16.mxu0 0
        %507 = vmatpush1.bf16.xpose.msra.mxu0 0
        %508 = vmatprep.subr.bf16.mxu0 0
        %509 = vmatpush1.bf16.xpose.msra.mxu0 0
        %510 = vmatprep.subr.bf16.mxu0 0
        %511 = vmatpush1.bf16.xpose.msra.mxu0 0
        %512 = vmatprep.subr.bf16.mxu0 0
        %513 = vmatpush1.bf16.xpose.msra.mxu0 0
        %514 = vmatprep.subr.bf16.mxu0 0
        %515 = vmatpush1.bf16.xpose.msra.mxu0 0
        %516 = vmatprep.subr.bf16.mxu0 0
        %517 = vmatpush1.bf16.xpose.msra.mxu0 0
        %518 = vmatprep.subr.bf16.mxu0 0
        %519 = vmatpush1.bf16.xpose.msra.mxu0 0
        %520 = vmatprep.subr.bf16.mxu0 0
        %521 = vmatpush1.bf16.xpose.msra.mxu0 0
        %522 = vmatprep.subr.bf16.mxu0 0
        %523 = vmatpush1.bf16.xpose.msra.mxu0 0
        %524 = vmatprep.subr.bf16.mxu0 0
        %525 = vmatpush1.bf16.xpose.msra.mxu0 0
        %526 = vmatprep.subr.bf16.mxu0 0
        %527 = vmatpush1.bf16.xpose.msra.mxu0 0
        %528 = vmatprep.subr.bf16.mxu0 0
        %529 = vmatpush1.bf16.xpose.msra.mxu0 0
        %530 = vmatprep.subr.bf16.mxu0 0
        %531 = vmatpush1.bf16.xpose.msra.mxu0 0
        %532 = vmatprep.mubr.bf16.mxu0 0
        %533 = vmatmul.mubr.bf16.gmra.mrb[0].mxu0 %v495
        %v534 = vpop.f32.mrb[0].mxu0
        %v535 = vadd.f32 0.0, %v534
        %v536 = vpop.f32.mrb[0].mxu0
        %v537 = vpop.f32.mrb[0].mxu0
        %v538 = vadd.f32 0.0, %v537
        %v539 = vpop.f32.mrb[0].mxu0
        %540 = vdwg.mxu0
        %v541 = vsel %vm337, %v379, -inf
        %542 = vmax.xlane.f32.xlu0 %v541
        %v543 = vpop.xlane.xlu0 %542
        %v544 = vsel %vm337, %v382, -inf
        %545 = vmax.xlane.f32.xlu0 %v544
        %v546 = vpop.xlane.xlu0 %545
        %v547 = vsel %vm337, %v431, -inf
        %548 = vmax.xlane.f32.xlu0 %v547
        %v549 = vpop.xlane.xlu0 %548
        %v550 = vsel %vm337, %v434, -inf
        %551 = vmax.xlane.f32.xlu0 %v550
        %v552 = vpop.xlane.xlu0 %551
        %v553 = vsel %vm337, %v483, -inf
        %554 = vmax.xlane.f32.xlu0 %v553
        %v555 = vpop.xlane.xlu0 %554
        %v556 = vsel %vm337, %v486, -inf
        %557 = vmax.xlane.f32.xlu0 %v556
        %v558 = vpop.xlane.xlu0 %557
        %v559 = vsel %vm337, %v535, -inf
        %560 = vmax.xlane.f32.xlu0 %v559
        %v561 = vpop.xlane.xlu0 %560
        %v562 = vsel %vm337, %v538, -inf
        %563 = vmax.xlane.f32.xlu0 %v562
        %v564 = vpop.xlane.xlu0 %563
        %v565 = vmax.f32 %v285, %v543
        %v566 = vmax.f32 %v286, %v546
        %v567 = vmax.f32 %v287, %v549
        %v568 = vmax.f32 %v288, %v552
        %v569 = vmax.f32 %v289, %v555
        %v570 = vmax.f32 %v290, %v558
        %v571 = vmax.f32 %v291, %v561
        %v572 = vmax.f32 %v292, %v564
        %v573 = vsub.f32 %v285, %v565
        %v574 = vsub.f32 %v286, %v566
        %v575 = vsub.f32 %v287, %v567
        %v576 = vsub.f32 %v288, %v568
        %v577 = vsub.f32 %v289, %v569
        %v578 = vsub.f32 %v290, %v570
        %v579 = vsub.f32 %v291, %v571
        %v580 = vsub.f32 %v292, %v572
        %v581 = vmul.f32 %v573, 1.442695
        %v582 = vpow.pop %v581
        %v583 = vmul.f32 %v574, 1.442695
        %v584 = vpow.pop %v583
        %v585 = vmul.f32 %v575, 1.442695
        %v586 = vpow.pop %v585
        %v587 = vmul.f32 %v576, 1.442695
        %v588 = vpow.pop %v587
        %v589 = vmul.f32 %v577, 1.442695
        %v590 = vpow.pop %v589
        %v591 = vmul.f32 %v578, 1.442695
        %v592 = vpow.pop %v591
        %v593 = vmul.f32 %v579, 1.442695
        %v594 = vpow.pop %v593
        %v595 = vmul.f32 %v580, 1.442695
        %v596 = vpow.pop %v595
        %v597 = vsub.f32 %v379, %v565
        %v598 = vsub.f32 %v382, %v566
        %v599 = vsub.f32 %v431, %v567
        %v600 = vsub.f32 %v434, %v568
        %v601 = vsub.f32 %v483, %v569
        %v602 = vsub.f32 %v486, %v570
        %v603 = vsub.f32 %v535, %v571
        %v604 = vsub.f32 %v538, %v572
        %v605 = vmul.f32 %v597, 1.442695
        %v606 = vpow.pop %v605
        %v607 = vmul.f32 %v598, 1.442695
        %v608 = vpow.pop %v607
        %v609 = vmul.f32 %v599, 1.442695
        %v610 = vpow.pop %v609
        %v611 = vmul.f32 %v600, 1.442695
        %v612 = vpow.pop %v611
        %v613 = vmul.f32 %v601, 1.442695
        %v614 = vpow.pop %v613
        %v615 = vmul.f32 %v602, 1.442695
        %v616 = vpow.pop %v615
        %v617 = vmul.f32 %v603, 1.442695
        %v618 = vpow.pop %v617
        %v619 = vmul.f32 %v604, 1.442695
        %v620 = vpow.pop %v619
        %v621 = vmul.f32 %v582, %v293
        %v622 = vmul.f32 %v584, %v294
        %v623 = vmul.f32 %v586, %v295
        %v624 = vmul.f32 %v588, %v296
        %v625 = vmul.f32 %v590, %v297
        %v626 = vmul.f32 %v592, %v298
        %v627 = vmul.f32 %v594, %v299
        %v628 = vmul.f32 %v596, %v300
        %v629 = vsel %vm337, %v606, 0.0
        %630 = vadd.xlane.f32.xlu0 %v629
        %v631 = vpop.xlane.xlu0 %630
        %v632 = vsel %vm337, %v608, 0.0
        %633 = vadd.xlane.f32.xlu0 %v632
        %v634 = vpop.xlane.xlu0 %633
        %v635 = vsel %vm337, %v610, 0.0
        %636 = vadd.xlane.f32.xlu0 %v635
        %v637 = vpop.xlane.xlu0 %636
        %v638 = vsel %vm337, %v612, 0.0
        %639 = vadd.xlane.f32.xlu0 %v638
        %v640 = vpop.xlane.xlu0 %639
        %v641 = vsel %vm337, %v614, 0.0
        %642 = vadd.xlane.f32.xlu0 %v641
        %v643 = vpop.xlane.xlu0 %642
        %v644 = vsel %vm337, %v616, 0.0
        %645 = vadd.xlane.f32.xlu0 %v644
        %v646 = vpop.xlane.xlu0 %645
        %v647 = vsel %vm337, %v618, 0.0
        %648 = vadd.xlane.f32.xlu0 %v647
        %v649 = vpop.xlane.xlu0 %648
        %v650 = vsel %vm337, %v620, 0.0
        %651 = vadd.xlane.f32.xlu0 %v650
        %v652 = vpop.xlane.xlu0 %651
        %v653 = vadd.f32 %v621, %v631
        %v654 = vadd.f32 %v622, %v634
        %v655 = vadd.f32 %v623, %v637
        %v656 = vadd.f32 %v624, %v640
        %v657 = vadd.f32 %v625, %v643
        %v658 = vadd.f32 %v626, %v646
        %v659 = vadd.f32 %v627, %v649
        %v660 = vadd.f32 %v628, %v652
        %v661 = vmul.f32 %v582, %v301
        %v662 = vmul.f32 %v584, %v302
        %v663 = vmul.f32 %v586, %v303
        %v664 = vmul.f32 %v588, %v304
        %v665 = vmul.f32 %v590, %v305
        %v666 = vmul.f32 %v592, %v306
        %v667 = vmul.f32 %v594, %v307
        %v668 = vmul.f32 %v596, %v308
        %v669 = vpack.c.bf16 %v608, %v606
        %v670 = vpack.c.bf16 %v612, %v610
        %v671 = vpack.c.bf16 %v616, %v614
        %v672 = vpack.c.bf16 %v620, %v618
        %v675 = vunpack.c.l.b16 %v324
        %v676 = vunpack.c.l.b16 %v325
        %v677 = vpack.c.b16 %v676, %v675
        %v680 = vsel %vm337, %v669, 0
        %682 = vmatprep.subr.bf16.mxu0 0
        %683 = vmatpush1.bf16.msra.mxu0 %v677
        %684 = vmatprep.subr.bf16.mxu0 0
        %685 = vmatpush1.bf16.msra.mxu0 0
        %686 = vmatprep.subr.bf16.mxu0 0
        %687 = vmatpush1.bf16.msra.mxu0 0
        %688 = vmatprep.subr.bf16.mxu0 0
        %689 = vmatpush1.bf16.msra.mxu0 0
        %690 = vmatprep.subr.bf16.mxu0 0
        %691 = vmatpush1.bf16.msra.mxu0 0
        %692 = vmatprep.subr.bf16.mxu0 0
        %693 = vmatpush1.bf16.msra.mxu0 0
        %694 = vmatprep.subr.bf16.mxu0 0
        %695 = vmatpush1.bf16.msra.mxu0 0
        %696 = vmatprep.subr.bf16.mxu0 0
        %697 = vmatpush1.bf16.msra.mxu0 0
        %698 = vmatprep.subr.bf16.mxu0 0
        %699 = vmatpush1.bf16.msra.mxu0 0
        %700 = vmatprep.subr.bf16.mxu0 0
        %701 = vmatpush1.bf16.msra.mxu0 0
        %702 = vmatprep.subr.bf16.mxu0 0
        %703 = vmatpush1.bf16.msra.mxu0 0
        %704 = vmatprep.subr.bf16.mxu0 0
        %705 = vmatpush1.bf16.msra.mxu0 0
        %706 = vmatprep.subr.bf16.mxu0 0
        %707 = vmatpush1.bf16.msra.mxu0 0
        %708 = vmatprep.subr.bf16.mxu0 0
        %709 = vmatpush1.bf16.msra.mxu0 0
        %710 = vmatprep.subr.bf16.mxu0 0
        %711 = vmatpush1.bf16.msra.mxu0 0
        %712 = vmatprep.subr.bf16.mxu0 0
        %713 = vmatpush1.bf16.msra.mxu0 0
        %714 = vmatprep.mubr.bf16.mxu0 0
        %715 = vmatmul.mubr.bf16.gmra.mrb[0].mxu0 %v680
        %v716 = vpop.f32.mrb[0].mxu0
        %v717 = vadd.f32 0.0, %v716
        %v718 = vpop.f32.mrb[0].mxu0
        %v719 = vpop.f32.mrb[0].mxu0
        %v720 = vadd.f32 0.0, %v719
        %v721 = vpop.f32.mrb[0].mxu0
        %722 = vdwg.mxu0
        %v725 = vunpack.c.l.b16 %v326
        %v726 = vunpack.c.l.b16 %v327
        %v727 = vpack.c.b16 %v726, %v725
        %v730 = vsel %vm337, %v670, 0
        %732 = vmatprep.subr.bf16.mxu0 0
        %733 = vmatpush1.bf16.msra.mxu0 %v727
        %734 = vmatprep.subr.bf16.mxu0 0
        %735 = vmatpush1.bf16.msra.mxu0 0
        %736 = vmatprep.subr.bf16.mxu0 0
        %737 = vmatpush1.bf16.msra.mxu0 0
        %738 = vmatprep.subr.bf16.mxu0 0
        %739 = vmatpush1.bf16.msra.mxu0 0
        %740 = vmatprep.subr.bf16.mxu0 0
        %741 = vmatpush1.bf16.msra.mxu0 0
        %742 = vmatprep.subr.bf16.mxu0 0
        %743 = vmatpush1.bf16.msra.mxu0 0
        %744 = vmatprep.subr.bf16.mxu0 0
        %745 = vmatpush1.bf16.msra.mxu0 0
        %746 = vmatprep.subr.bf16.mxu0 0
        %747 = vmatpush1.bf16.msra.mxu0 0
        %748 = vmatprep.subr.bf16.mxu0 0
        %749 = vmatpush1.bf16.msra.mxu0 0
        %750 = vmatprep.subr.bf16.mxu0 0
        %751 = vmatpush1.bf16.msra.mxu0 0
        %752 = vmatprep.subr.bf16.mxu0 0
        %753 = vmatpush1.bf16.msra.mxu0 0
        %754 = vmatprep.subr.bf16.mxu0 0
        %755 = vmatpush1.bf16.msra.mxu0 0
        %756 = vmatprep.subr.bf16.mxu0 0
        %757 = vmatpush1.bf16.msra.mxu0 0
        %758 = vmatprep.subr.bf16.mxu0 0
        %759 = vmatpush1.bf16.msra.mxu0 0
        %760 = vmatprep.subr.bf16.mxu0 0
        %761 = vmatpush1.bf16.msra.mxu0 0
        %762 = vmatprep.subr.bf16.mxu0 0
        %763 = vmatpush1.bf16.msra.mxu0 0
        %764 = vmatprep.mubr.bf16.mxu0 0
        %765 = vmatmul.mubr.bf16.gmra.mrb[0].mxu0 %v730
        %v766 = vpop.f32.mrb[0].mxu0
        %v767 = vadd.f32 0.0, %v766
        %v768 = vpop.f32.mrb[0].mxu0
        %v769 = vpop.f32.mrb[0].mxu0
        %v770 = vadd.f32 0.0, %v769
        %v771 = vpop.f32.mrb[0].mxu0
        %772 = vdwg.mxu0
        %v775 = vunpack.c.l.b16 %v328
        %v776 = vunpack.c.l.b16 %v329
        %v777 = vpack.c.b16 %v776, %v775
        %v780 = vsel %vm337, %v671, 0
        %782 = vmatprep.subr.bf16.mxu0 0
        %783 = vmatpush1.bf16.msra.mxu0 %v777
        %784 = vmatprep.subr.bf16.mxu0 0
        %785 = vmatpush1.bf16.msra.mxu0 0
        %786 = vmatprep.subr.bf16.mxu0 0
        %787 = vmatpush1.bf16.msra.mxu0 0
        %788 = vmatprep.subr.bf16.mxu0 0
        %789 = vmatpush1.bf16.msra.mxu0 0
        %790 = vmatprep.subr.bf16.mxu0 0
        %791 = vmatpush1.bf16.msra.mxu0 0
        %792 = vmatprep.subr.bf16.mxu0 0
        %793 = vmatpush1.bf16.msra.mxu0 0
        %794 = vmatprep.subr.bf16.mxu0 0
        %795 = vmatpush1.bf16.msra.mxu0 0
        %796 = vmatprep.subr.bf16.mxu0 0
        %797 = vmatpush1.bf16.msra.mxu0 0
        %798 = vmatprep.subr.bf16.mxu0 0
        %799 = vmatpush1.bf16.msra.mxu0 0
        %800 = vmatprep.subr.bf16.mxu0 0
        %801 = vmatpush1.bf16.msra.mxu0 0
        %802 = vmatprep.subr.bf16.mxu0 0
        %803 = vmatpush1.bf16.msra.mxu0 0
        %804 = vmatprep.subr.bf16.mxu0 0
        %805 = vmatpush1.bf16.msra.mxu0 0
        %806 = vmatprep.subr.bf16.mxu0 0
        %807 = vmatpush1.bf16.msra.mxu0 0
        %808 = vmatprep.subr.bf16.mxu0 0
        %809 = vmatpush1.bf16.msra.mxu0 0
        %810 = vmatprep.subr.bf16.mxu0 0
        %811 = vmatpush1.bf16.msra.mxu0 0
        %812 = vmatprep.subr.bf16.mxu0 0
        %813 = vmatpush1.bf16.msra.mxu0 0
        %814 = vmatprep.mubr.bf16.mxu0 0
        %815 = vmatmul.mubr.bf16.gmra.mrb[0].mxu0 %v780
        %v816 = vpop.f32.mrb[0].mxu0
        %v817 = vadd.f32 0.0, %v816
        %v818 = vpop.f32.mrb[0].mxu0
        %v819 = vpop.f32.mrb[0].mxu0
        %v820 = vadd.f32 0.0, %v819
        %v821 = vpop.f32.mrb[0].mxu0
        %822 = vdwg.mxu0
        %v825 = vunpack.c.l.b16 %v330
        %v826 = vunpack.c.l.b16 %v331
        %v827 = vpack.c.b16 %v826, %v825
        %v830 = vsel %vm337, %v672, 0
        %832 = vmatprep.subr.bf16.mxu0 0
        %833 = vmatpush1.bf16.msra.mxu0 %v827
        %834 = vmatprep.subr.bf16.mxu0 0
        %835 = vmatpush1.bf16.msra.mxu0 0
        %836 = vmatprep.subr.bf16.mxu0 0
        %837 = vmatpush1.bf16.msra.mxu0 0
        %838 = vmatprep.subr.bf16.mxu0 0
        %839 = vmatpush1.bf16.msra.mxu0 0
        %840 = vmatprep.subr.bf16.mxu0 0
        %841 = vmatpush1.bf16.msra.mxu0 0
        %842 = vmatprep.subr.bf16.mxu0 0
        %843 = vmatpush1.bf16.msra.mxu0 0
        %844 = vmatprep.subr.bf16.mxu0 0
        %845 = vmatpush1.bf16.msra.mxu0 0
        %846 = vmatprep.subr.bf16.mxu0 0
        %847 = vmatpush1.bf16.msra.mxu0 0
        %848 = vmatprep.subr.bf16.mxu0 0
        %849 = vmatpush1.bf16.msra.mxu0 0
        %850 = vmatprep.subr.bf16.mxu0 0
        %851 = vmatpush1.bf16.msra.mxu0 0
        %852 = vmatprep.subr.bf16.mxu0 0
        %853 = vmatpush1.bf16.msra.mxu0 0
        %854 = vmatprep.subr.bf16.mxu0 0
        %855 = vmatpush1.bf16.msra.mxu0 0
        %856 = vmatprep.subr.bf16.mxu0 0
        %857 = vmatpush1.bf16.msra.mxu0 0
        %858 = vmatprep.subr.bf16.mxu0 0
        %859 = vmatpush1.bf16.msra.mxu0 0
        %860 = vmatprep.subr.bf16.mxu0 0
        %861 = vmatpush1.bf16.msra.mxu0 0
        %862 = vmatprep.subr.bf16.mxu0 0
        %863 = vmatpush1.bf16.msra.mxu0 0
        %864 = vmatprep.mubr.bf16.mxu0 0
        %865 = vmatmul.mubr.bf16.gmra.mrb[0].mxu0 %v830
        %v866 = vpop.f32.mrb[0].mxu0
        %v867 = vadd.f32 0.0, %v866
        %v868 = vpop.f32.mrb[0].mxu0
        %v869 = vpop.f32.mrb[0].mxu0
        %v870 = vadd.f32 0.0, %v869
        %v871 = vpop.f32.mrb[0].mxu0
        %872 = vdwg.mxu0
        %v873 = vadd.f32 %v661, %v717
        %v874 = vadd.f32 %v662, %v720
        %v875 = vadd.f32 %v663, %v767
        %v876 = vadd.f32 %v664, %v770
        %v877 = vadd.f32 %v665, %v817
        %v878 = vadd.f32 %v666, %v820
        %v879 = vadd.f32 %v667, %v867
        %v880 = vadd.f32 %v668, %v870
      $region37: #{gpt2_forward.13} parent=31 // loop_footer
        %s282 = sadd.s32 %s280, 1
      $region38: #{gpt2_forward.13} parent=31 // loop_footer_branch
        %279 = sbr.rel target = $region34
      $region39: #{gpt2_forward.13} parent=31 // loop_exit
        _
      %s881 = smul.u32 %s19, 16
      %s882 = sshra.s32 %s881, 3
      %s883 = sand.u32 %s881, 7
      %s884 = smul.addr %s882, 4
      %s885 = scalar_lea.vmem %s234, %s884
      %v886 = vld [vmem:[%s885] sm:$0xf]
      %v887 = vld [vmem:[%s885 + $0x4] sm:$0xf]
      %v888 = vld [vmem:[%s885 + $0x8] sm:$0xf]
      %v889 = vld [vmem:[%s885 + $0xc] sm:$0xf]
      %v890 = vld [vmem:[%s885 + $0x10] sm:$0xf]
      %v891 = vld [vmem:[%s885 + $0x14] sm:$0xf]
      %v892 = vld [vmem:[%s885 + $0x18] sm:$0xf]
      %v893 = vld [vmem:[%s885 + $0x1c] sm:$0xf]
      %s894 = smul.addr %s882, 4
      %s895 = scalar_lea.vmem %s239, %s894
      %v896 = vld [vmem:[%s895] sm:$0xf]
      %v897 = vld [vmem:[%s895 + $0x4] sm:$0xf]
      %v898 = vld [vmem:[%s895 + $0x8] sm:$0xf]
      %v899 = vld [vmem:[%s895 + $0xc] sm:$0xf]
      %v900 = vld [vmem:[%s895 + $0x10] sm:$0xf]
      %v901 = vld [vmem:[%s895 + $0x14] sm:$0xf]
      %v902 = vld [vmem:[%s895 + $0x18] sm:$0xf]
      %v903 = vld [vmem:[%s895 + $0x1c] sm:$0xf]
      %v906 = vunpack.c.l.b16 %v886
      %v907 = vunpack.c.l.b16 %v887
      %v908 = vpack.c.b16 %v907, %v906
      %vm909 = vcmask 130048
      %v911 = vsel %vm909, %v275, 0
      %v914 = vsel %vm909, %v908, 0
      %916 = vmatprep.subr.bf16.mxu0 0
      %917 = vmatpush1.bf16.xpose.msra.mxu0 %v914
      %918 = vmatprep.subr.bf16.mxu0 0
      %919 = vmatpush1.bf16.xpose.msra.mxu0 0
      %920 = vmatprep.subr.bf16.mxu0 0
      %921 = vmatpush1.bf16.xpose.msra.mxu0 0
      %922 = vmatprep.subr.bf16.mxu0 0
      %923 = vmatpush1.bf16.xpose.msra.mxu0 0
      %924 = vmatprep.subr.bf16.mxu0 0
      %925 = vmatpush1.bf16.xpose.msra.mxu0 0
      %926 = vmatprep.subr.bf16.mxu0 0
      %927 = vmatpush1.bf16.xpose.msra.mxu0 0
      %928 = vmatprep.subr.bf16.mxu0 0
      %929 = vmatpush1.bf16.xpose.msra.mxu0 0
      %930 = vmatprep.subr.bf16.mxu0 0
      %931 = vmatpush1.bf16.xpose.msra.mxu0 0
      %932 = vmatprep.subr.bf16.mxu0 0
      %933 = vmatpush1.bf16.xpose.msra.mxu0 0
      %934 = vmatprep.subr.bf16.mxu0 0
      %935 = vmatpush1.bf16.xpose.msra.mxu0 0
      %936 = vmatprep.subr.bf16.mxu0 0
      %937 = vmatpush1.bf16.xpose.msra.mxu0 0
      %938 = vmatprep.subr.bf16.mxu0 0
      %939 = vmatpush1.bf16.xpose.msra.mxu0 0
      %940 = vmatprep.subr.bf16.mxu0 0
      %941 = vmatpush1.bf16.xpose.msra.mxu0 0
      %942 = vmatprep.subr.bf16.mxu0 0
      %943 = vmatpush1.bf16.xpose.msra.mxu0 0
      %944 = vmatprep.subr.bf16.mxu0 0
      %945 = vmatpush1.bf16.xpose.msra.mxu0 0
      %946 = vmatprep.subr.bf16.mxu0 0
      %947 = vmatpush1.bf16.xpose.msra.mxu0 0
      %948 = vmatprep.mubr.bf16.mxu0 0
      %949 = vmatmul.mubr.bf16.gmra.mrb[0].mxu0 %v911
      %v950 = vpop.f32.mrb[0].mxu0
      %v951 = vadd.f32 0.0, %v950
      %v952 = vpop.f32.mrb[0].mxu0
      %v953 = vpop.f32.mrb[0].mxu0
      %v954 = vadd.f32 0.0, %v953
      %v955 = vpop.f32.mrb[0].mxu0
      %956 = vdwg.mxu0
      %v959 = vunpack.c.l.b16 %v888
      %v960 = vunpack.c.l.b16 %v889
      %v961 = vpack.c.b16 %v960, %v959
      %v963 = vsel %vm909, %v276, 0
      %v966 = vsel %vm909, %v961, 0
      %968 = vmatprep.subr.bf16.mxu0 0
      %969 = vmatpush1.bf16.xpose.msra.mxu0 %v966
      %970 = vmatprep.subr.bf16.mxu0 0
      %971 = vmatpush1.bf16.xpose.msra.mxu0 0
      %972 = vmatprep.subr.bf16.mxu0 0
      %973 = vmatpush1.bf16.xpose.msra.mxu0 0
      %974 = vmatprep.subr.bf16.mxu0 0
      %975 = vmatpush1.bf16.xpose.msra.mxu0 0
      %976 = vmatprep.subr.bf16.mxu0 0
      %977 = vmatpush1.bf16.xpose.msra.mxu0 0
      %978 = vmatprep.subr.bf16.mxu0 0
      %979 = vmatpush1.bf16.xpose.msra.mxu0 0
      %980 = vmatprep.subr.bf16.mxu0 0
      %981 = vmatpush1.bf16.xpose.msra.mxu0 0
      %982 = vmatprep.subr.bf16.mxu0 0
      %983 = vmatpush1.bf16.xpose.msra.mxu0 0
      %984 = vmatprep.subr.bf16.mxu0 0
      %985 = vmatpush1.bf16.xpose.msra.mxu0 0
      %986 = vmatprep.subr.bf16.mxu0 0
      %987 = vmatpush1.bf16.xpose.msra.mxu0 0
      %988 = vmatprep.subr.bf16.mxu0 0
      %989 = vmatpush1.bf16.xpose.msra.mxu0 0
      %990 = vmatprep.subr.bf16.mxu0 0
      %991 = vmatpush1.bf16.xpose.msra.mxu0 0
      %992 = vmatprep.subr.bf16.mxu0 0
      %993 = vmatpush1.bf16.xpose.msra.mxu0 0
      %994 = vmatprep.subr.bf16.mxu0 0
      %995 = vmatpush1.bf16.xpose.msra.mxu0 0
      %996 = vmatprep.subr.bf16.mxu0 0
      %997 = vmatpush1.bf16.xpose.msra.mxu0 0
      %998 = vmatprep.subr.bf16.mxu0 0
      %999 = vmatpush1.bf16.xpose.msra.mxu0 0
      %1000 = vmatprep.mubr.bf16.mxu0 0
      %1001 = vmatmul.mubr.bf16.gmra.mrb[0].mxu0 %v963
      %v1002 = vpop.f32.mrb[0].mxu0
      %v1003 = vadd.f32 0.0, %v1002
      %v1004 = vpop.f32.mrb[0].mxu0
      %v1005 = vpop.f32.mrb[0].mxu0
      %v1006 = vadd.f32 0.0, %v1005
      %v1007 = vpop.f32.mrb[0].mxu0
      %1008 = vdwg.mxu0
      %v1011 = vunpack.c.l.b16 %v890
      %v1012 = vunpack.c.l.b16 %v891
      %v1013 = vpack.c.b16 %v1012, %v1011
      %v1015 = vsel %vm909, %v277, 0
      %v1018 = vsel %vm909, %v1013, 0
      %1020 = vmatprep.subr.bf16.mxu0 0
      %1021 = vmatpush1.bf16.xpose.msra.mxu0 %v1018
      %1022 = vmatprep.subr.bf16.mxu0 0
      %1023 = vmatpush1.bf16.xpose.msra.mxu0 0
      %1024 = vmatprep.subr.bf16.mxu0 0
      %1025 = vmatpush1.bf16.xpose.msra.mxu0 0
      %1026 = vmatprep.subr.bf16.mxu0 0
      %1027 = vmatpush1.bf16.xpose.msra.mxu0 0
      %1028 = vmatprep.subr.bf16.mxu0 0
      %1029 = vmatpush1.bf16.xpose.msra.mxu0 0
      %1030 = vmatprep.subr.bf16.mxu0 0
      %1031 = vmatpush1.bf16.xpose.msra.mxu0 0
      %1032 = vmatprep.subr.bf16.mxu0 0
      %1033 = vmatpush1.bf16.xpose.msra.mxu0 0
      %1034 = vmatprep.subr.bf16.mxu0 0
      %1035 = vmatpush1.bf16.xpose.msra.mxu0 0
      %1036 = vmatprep.subr.bf16.mxu0 0
      %1037 = vmatpush1.bf16.xpose.msra.mxu0 0
      %1038 = vmatprep.subr.bf16.mxu0 0
      %1039 = vmatpush1.bf16.xpose.msra.mxu0 0
      %1040 = vmatprep.subr.bf16.mxu0 0
      %1041 = vmatpush1.bf16.xpose.msra.mxu0 0
      %1042 = vmatprep.subr.bf16.mxu0 0
      %1043 = vmatpush1.bf16.xpose.msra.mxu0 0
      %1044 = vmatprep.subr.bf16.mxu0 0
      %1045 = vmatpush1.bf16.xpose.msra.mxu0 0
      %1046 = vmatprep.subr.bf16.mxu0 0
      %1047 = vmatpush1.bf16.xpose.msra.mxu0 0
      %1048 = vmatprep.subr.bf16.mxu0 0
      %1049 = vmatpush1.bf16.xpose.msra.mxu0 0
      %1050 = vmatprep.subr.bf16.mxu0 0
      %1051 = vmatpush1.bf16.xpose.msra.mxu0 0
      %1052 = vmatprep.mubr.bf16.mxu0 0
      %1053 = vmatmul.mubr.bf16.gmra.mrb[0].mxu0 %v1015
      %v1054 = vpop.f32.mrb[0].mxu0
      %v1055 = vadd.f32 0.0, %v1054
      %v1056 = vpop.f32.mrb[0].mxu0
      %v1057 = vpop.f32.mrb[0].mxu0
      %v1058 = vadd.f32 0.0, %v1057
      %v1059 = vpop.f32.mrb[0].mxu0
      %1060 = vdwg.mxu0
      %v1063 = vunpack.c.l.b16 %v892
      %v1064 = vunpack.c.l.b16 %v893
      %v1065 = vpack.c.b16 %v1064, %v1063
      %v1067 = vsel %vm909, %v278, 0
      %v1070 = vsel %vm909, %v1065, 0
      %1072 = vmatprep.subr.bf16.mxu0 0
      %1073 = vmatpush1.bf16.xpose.msra.mxu0 %v1070
      %1074 = vmatprep.subr.bf16.mxu0 0
      %1075 = vmatpush1.bf16.xpose.msra.mxu0 0
      %1076 = vmatprep.subr.bf16.mxu0 0
      %1077 = vmatpush1.bf16.xpose.msra.mxu0 0
      %1078 = vmatprep.subr.bf16.mxu0 0
      %1079 = vmatpush1.bf16.xpose.msra.mxu0 0
      %1080 = vmatprep.subr.bf16.mxu0 0
      %1081 = vmatpush1.bf16.xpose.msra.mxu0 0
      %1082 = vmatprep.subr.bf16.mxu0 0
      %1083 = vmatpush1.bf16.xpose.msra.mxu0 0
      %1084 = vmatprep.subr.bf16.mxu0 0
      %1085 = vmatpush1.bf16.xpose.msra.mxu0 0
      %1086 = vmatprep.subr.bf16.mxu0 0
      %1087 = vmatpush1.bf16.xpose.msra.mxu0 0
      %1088 = vmatprep.subr.bf16.mxu0 0
      %1089 = vmatpush1.bf16.xpose.msra.mxu0 0
      %1090 = vmatprep.subr.bf16.mxu0 0
      %1091 = vmatpush1.bf16.xpose.msra.mxu0 0
      %1092 = vmatprep.subr.bf16.mxu0 0
      %1093 = vmatpush1.bf16.xpose.msra.mxu0 0
      %1094 = vmatprep.subr.bf16.mxu0 0
      %1095 = vmatpush1.bf16.xpose.msra.mxu0 0
      %1096 = vmatprep.subr.bf16.mxu0 0
      %1097 = vmatpush1.bf16.xpose.msra.mxu0 0
      %1098 = vmatprep.subr.bf16.mxu0 0
      %1099 = vmatpush1.bf16.xpose.msra.mxu0 0
      %1100 = vmatprep.subr.bf16.mxu0 0
      %1101 = vmatpush1.bf16.xpose.msra.mxu0 0
      %1102 = vmatprep.subr.bf16.mxu0 0
      %1103 = vmatpush1.bf16.xpose.msra.mxu0 0
      %1104 = vmatprep.mubr.bf16.mxu0 0
      %1105 = vmatmul.mubr.bf16.gmra.mrb[0].mxu0 %v1067
      %v1106 = vpop.f32.mrb[0].mxu0
      %v1107 = vadd.f32 0.0, %v1106
      %v1108 = vpop.f32.mrb[0].mxu0
      %v1109 = vpop.f32.mrb[0].mxu0
      %v1110 = vadd.f32 0.0, %v1109
      %v1111 = vpop.f32.mrb[0].mxu0
      %1112 = vdwg.mxu0
      %v1113 = vlaneseq
      %v1114 = vshrl.u32 %v1113, 7
      %v1115 = vadd.s32 %v1114, 8
      %v1116 = vlaneseq
      %v1117 = vand.u32 %v1116, 127
      %vm1118 = vcmp.le.s32.totalorder %v1117, %v1114
      %vm1119 = vcmp.le.s32.totalorder %v1117, %v1115
      %v1120 = vsel %vm1118, 1, 0
      %v1121 = vsel %vm1119, 1, 0
      %vm1122 = vcmp.eq.s32.totalorder %v1120, 1
      %vm1123 = vcmp.eq.s32.totalorder %v1121, 1
      %v1124 = vsel %vm1122, %v951, -1e+30
      %v1125 = vsel %vm1123, %v954, -1e+30
      %v1126 = vsel %vm1122, %v1003, -1e+30
      %v1127 = vsel %vm1123, %v1006, -1e+30
      %v1128 = vsel %vm1122, %v1055, -1e+30
      %v1129 = vsel %vm1123, %v1058, -1e+30
      %v1130 = vsel %vm1122, %v1107, -1e+30
      %v1131 = vsel %vm1123, %v1110, -1e+30
      %v1132 = vsel %vm909, %v1124, -inf
      %1133 = vmax.xlane.f32.xlu0 %v1132
      %v1134 = vpop.xlane.xlu0 %1133
      %v1135 = vsel %vm909, %v1125, -inf
      %1136 = vmax.xlane.f32.xlu0 %v1135
      %v1137 = vpop.xlane.xlu0 %1136
      %v1138 = vsel %vm909, %v1126, -inf
      %1139 = vmax.xlane.f32.xlu0 %v1138
      %v1140 = vpop.xlane.xlu0 %1139
      %v1141 = vsel %vm909, %v1127, -inf
      %1142 = vmax.xlane.f32.xlu0 %v1141
      %v1143 = vpop.xlane.xlu0 %1142
      %v1144 = vsel %vm909, %v1128, -inf
      %1145 = vmax.xlane.f32.xlu0 %v1144
      %v1146 = vpop.xlane.xlu0 %1145
      %v1147 = vsel %vm909, %v1129, -inf
      %1148 = vmax.xlane.f32.xlu0 %v1147
      %v1149 = vpop.xlane.xlu0 %1148
      %v1150 = vsel %vm909, %v1130, -inf
      %1151 = vmax.xlane.f32.xlu0 %v1150
      %v1152 = vpop.xlane.xlu0 %1151
      %v1153 = vsel %vm909, %v1131, -inf
      %1154 = vmax.xlane.f32.xlu0 %v1153
      %v1155 = vpop.xlane.xlu0 %1154
      %v1156 = vmax.f32 %v285, %v1134
      %v1157 = vmax.f32 %v286, %v1137
      %v1158 = vmax.f32 %v287, %v1140
      %v1159 = vmax.f32 %v288, %v1143
      %v1160 = vmax.f32 %v289, %v1146
      %v1161 = vmax.f32 %v290, %v1149
      %v1162 = vmax.f32 %v291, %v1152
      %v1163 = vmax.f32 %v292, %v1155
      %v1164 = vsub.f32 %v285, %v1156
      %v1165 = vsub.f32 %v286, %v1157
      %v1166 = vsub.f32 %v287, %v1158
      %v1167 = vsub.f32 %v288, %v1159
      %v1168 = vsub.f32 %v289, %v1160
      %v1169 = vsub.f32 %v290, %v1161
      %v1170 = vsub.f32 %v291, %v1162
      %v1171 = vsub.f32 %v292, %v1163
      %v1172 = vmul.f32 %v1164, 1.442695
      %v1173 = vpow.pop %v1172
      %v1174 = vmul.f32 %v1165, 1.442695
      %v1175 = vpow.pop %v1174
      %v1176 = vmul.f32 %v1166, 1.442695
      %v1177 = vpow.pop %v1176
      %v1178 = vmul.f32 %v1167, 1.442695
      %v1179 = vpow.pop %v1178
      %v1180 = vmul.f32 %v1168, 1.442695
      %v1181 = vpow.pop %v1180
      %v1182 = vmul.f32 %v1169, 1.442695
      %v1183 = vpow.pop %v1182
      %v1184 = vmul.f32 %v1170, 1.442695
      %v1185 = vpow.pop %v1184
      %v1186 = vmul.f32 %v1171, 1.442695
      %v1187 = vpow.pop %v1186
      %v1188 = vsub.f32 %v1124, %v1156
      %v1189 = vsub.f32 %v1125, %v1157
      %v1190 = vsub.f32 %v1126, %v1158
      %v1191 = vsub.f32 %v1127, %v1159
      %v1192 = vsub.f32 %v1128, %v1160
      %v1193 = vsub.f32 %v1129, %v1161
      %v1194 = vsub.f32 %v1130, %v1162
      %v1195 = vsub.f32 %v1131, %v1163
      %v1196 = vmul.f32 %v1188, 1.442695
      %v1197 = vpow.pop %v1196
      %v1198 = vmul.f32 %v1189, 1.442695
      %v1199 = vpow.pop %v1198
      %v1200 = vmul.f32 %v1190, 1.442695
      %v1201 = vpow.pop %v1200
      %v1202 = vmul.f32 %v1191, 1.442695
      %v1203 = vpow.pop %v1202
      %v1204 = vmul.f32 %v1192, 1.442695
      %v1205 = vpow.pop %v1204
      %v1206 = vmul.f32 %v1193, 1.442695
      %v1207 = vpow.pop %v1206
      %v1208 = vmul.f32 %v1194, 1.442695
      %v1209 = vpow.pop %v1208
      %v1210 = vmul.f32 %v1195, 1.442695
      %v1211 = vpow.pop %v1210
      %v1212 = vmul.f32 %v1173, %v293
      %v1213 = vmul.f32 %v1175, %v294
      %v1214 = vmul.f32 %v1177, %v295
      %v1215 = vmul.f32 %v1179, %v296
      %v1216 = vmul.f32 %v1181, %v297
      %v1217 = vmul.f32 %v1183, %v298
      %v1218 = vmul.f32 %v1185, %v299
      %v1219 = vmul.f32 %v1187, %v300
      %v1220 = vsel %vm909, %v1197, 0.0
      %1221 = vadd.xlane.f32.xlu0 %v1220
      %v1222 = vpop.xlane.xlu0 %1221
      %v1223 = vsel %vm909, %v1199, 0.0
      %1224 = vadd.xlane.f32.xlu0 %v1223
      %v1225 = vpop.xlane.xlu0 %1224
      %v1226 = vsel %vm909, %v1201, 0.0
      %1227 = vadd.xlane.f32.xlu0 %v1226
      %v1228 = vpop.xlane.xlu0 %1227
      %v1229 = vsel %vm909, %v1203, 0.0
      %1230 = vadd.xlane.f32.xlu0 %v1229
      %v1231 = vpop.xlane.xlu0 %1230
      %v1232 = vsel %vm909, %v1205, 0.0
      %1233 = vadd.xlane.f32.xlu0 %v1232
      %v1234 = vpop.xlane.xlu0 %1233
      %v1235 = vsel %vm909, %v1207, 0.0
      %1236 = vadd.xlane.f32.xlu0 %v1235
      %v1237 = vpop.xlane.xlu0 %1236
      %v1238 = vsel %vm909, %v1209, 0.0
      %1239 = vadd.xlane.f32.xlu0 %v1238
      %v1240 = vpop.xlane.xlu0 %1239
      %v1241 = vsel %vm909, %v1211, 0.0
      %1242 = vadd.xlane.f32.xlu0 %v1241
      %v1243 = vpop.xlane.xlu0 %1242
      %v1244 = vadd.f32 %v1212, %v1222
      %v1245 = vadd.f32 %v1213, %v1225
      %v1246 = vadd.f32 %v1214, %v1228
      %v1247 = vadd.f32 %v1215, %v1231
      %v1248 = vadd.f32 %v1216, %v1234
      %v1249 = vadd.f32 %v1217, %v1237
      %v1250 = vadd.f32 %v1218, %v1240
      %v1251 = vadd.f32 %v1219, %v1243
      %v1252 = vmul.f32 %v1173, %v301
      %v1253 = vmul.f32 %v1175, %v302
      %v1254 = vmul.f32 %v1177, %v303
      %v1255 = vmul.f32 %v1179, %v304
      %v1256 = vmul.f32 %v1181, %v305
      %v1257 = vmul.f32 %v1183, %v306
      %v1258 = vmul.f32 %v1185, %v307
      %v1259 = vmul.f32 %v1187, %v308
      %v1260 = vpack.c.bf16 %v1199, %v1197
      %v1261 = vpack.c.bf16 %v1203, %v1201
      %v1262 = vpack.c.bf16 %v1207, %v1205
      %v1263 = vpack.c.bf16 %v1211, %v1209
      %v1266 = vunpack.c.l.b16 %v896
      %v1267 = vunpack.c.l.b16 %v897
      %v1268 = vpack.c.b16 %v1267, %v1266
      %v1271 = vsel %vm909, %v1260, 0
      %1273 = vmatprep.subr.bf16.mxu0 0
      %1274 = vmatpush1.bf16.msra.mxu0 %v1268
      %1275 = vmatprep.subr.bf16.mxu0 0
      %1276 = vmatpush1.bf16.msra.mxu0 0
      %1277 = vmatprep.subr.bf16.mxu0 0
      %1278 = vmatpush1.bf16.msra.mxu0 0
      %1279 = vmatprep.subr.bf16.mxu0 0
      %1280 = vmatpush1.bf16.msra.mxu0 0
      %1281 = vmatprep.subr.bf16.mxu0 0
      %1282 = vmatpush1.bf16.msra.mxu0 0
      %1283 = vmatprep.subr.bf16.mxu0 0
      %1284 = vmatpush1.bf16.msra.mxu0 0
      %1285 = vmatprep.subr.bf16.mxu0 0
      %1286 = vmatpush1.bf16.msra.mxu0 0
      %1287 = vmatprep.subr.bf16.mxu0 0
      %1288 = vmatpush1.bf16.msra.mxu0 0
      %1289 = vmatprep.subr.bf16.mxu0 0
      %1290 = vmatpush1.bf16.msra.mxu0 0
      %1291 = vmatprep.subr.bf16.mxu0 0
      %1292 = vmatpush1.bf16.msra.mxu0 0
      %1293 = vmatprep.subr.bf16.mxu0 0
      %1294 = vmatpush1.bf16.msra.mxu0 0
      %1295 = vmatprep.subr.bf16.mxu0 0
      %1296 = vmatpush1.bf16.msra.mxu0 0
      %1297 = vmatprep.subr.bf16.mxu0 0
      %1298 = vmatpush1.bf16.msra.mxu0 0
      %1299 = vmatprep.subr.bf16.mxu0 0
      %1300 = vmatpush1.bf16.msra.mxu0 0
      %1301 = vmatprep.subr.bf16.mxu0 0
      %1302 = vmatpush1.bf16.msra.mxu0 0
      %1303 = vmatprep.subr.bf16.mxu0 0
      %1304 = vmatpush1.bf16.msra.mxu0 0
      %1305 = vmatprep.mubr.bf16.mxu0 0
      %1306 = vmatmul.mubr.bf16.gmra.mrb[0].mxu0 %v1271
      %v1307 = vpop.f32.mrb[0].mxu0
      %v1308 = vadd.f32 0.0, %v1307
      %v1309 = vpop.f32.mrb[0].mxu0
      %v1310 = vpop.f32.mrb[0].mxu0
      %v1311 = vadd.f32 0.0, %v1310
      %v1312 = vpop.f32.mrb[0].mxu0
      %1313 = vdwg.mxu0
      %v1316 = vunpack.c.l.b16 %v898
      %v1317 = vunpack.c.l.b16 %v899
      %v1318 = vpack.c.b16 %v1317, %v1316
      %v1321 = vsel %vm909, %v1261, 0
      %1323 = vmatprep.subr.bf16.mxu0 0
      %1324 = vmatpush1.bf16.msra.mxu0 %v1318
      %1325 = vmatprep.subr.bf16.mxu0 0
      %1326 = vmatpush1.bf16.msra.mxu0 0
      %1327 = vmatprep.subr.bf16.mxu0 0
      %1328 = vmatpush1.bf16.msra.mxu0 0
      %1329 = vmatprep.subr.bf16.mxu0 0
      %1330 = vmatpush1.bf16.msra.mxu0 0
      %1331 = vmatprep.subr.bf16.mxu0 0
      %1332 = vmatpush1.bf16.msra.mxu0 0
      %1333 = vmatprep.subr.bf16.mxu0 0
      %1334 = vmatpush1.bf16.msra.mxu0 0
      %1335 = vmatprep.subr.bf16.mxu0 0
      %1336 = vmatpush1.bf16.msra.mxu0 0
      %1337 = vmatprep.subr.bf16.mxu0 0
      %1338 = vmatpush1.bf16.msra.mxu0 0
      %1339 = vmatprep.subr.bf16.mxu0 0
      %1340 = vmatpush1.bf16.msra.mxu0 0
      %1341 = vmatprep.subr.bf16.mxu0 0
      %1342 = vmatpush1.bf16.msra.mxu0 0
      %1343 = vmatprep.subr.bf16.mxu0 0
      %1344 = vmatpush1.bf16.msra.mxu0 0
      %1345 = vmatprep.subr.bf16.mxu0 0
      %1346 = vmatpush1.bf16.msra.mxu0 0
      %1347 = vmatprep.subr.bf16.mxu0 0
      %1348 = vmatpush1.bf16.msra.mxu0 0
      %1349 = vmatprep.subr.bf16.mxu0 0
      %1350 = vmatpush1.bf16.msra.mxu0 0
      %1351 = vmatprep.subr.bf16.mxu0 0
      %1352 = vmatpush1.bf16.msra.mxu0 0
      %1353 = vmatprep.subr.bf16.mxu0 0
      %1354 = vmatpush1.bf16.msra.mxu0 0
      %1355 = vmatprep.mubr.bf16.mxu0 0
      %1356 = vmatmul.mubr.bf16.gmra.mrb[0].mxu0 %v1321
      %v1357 = vpop.f32.mrb[0].mxu0
      %v1358 = vadd.f32 0.0, %v1357
      %v1359 = vpop.f32.mrb[0].mxu0
      %v1360 = vpop.f32.mrb[0].mxu0
      %v1361 = vadd.f32 0.0, %v1360
      %v1362 = vpop.f32.mrb[0].mxu0
      %1363 = vdwg.mxu0
      %v1366 = vunpack.c.l.b16 %v900
      %v1367 = vunpack.c.l.b16 %v901
      %v1368 = vpack.c.b16 %v1367, %v1366
      %v1371 = vsel %vm909, %v1262, 0
      %1373 = vmatprep.subr.bf16.mxu0 0
      %1374 = vmatpush1.bf16.msra.mxu0 %v1368
      %1375 = vmatprep.subr.bf16.mxu0 0
      %1376 = vmatpush1.bf16.msra.mxu0 0
      %1377 = vmatprep.subr.bf16.mxu0 0
      %1378 = vmatpush1.bf16.msra.mxu0 0
      %1379 = vmatprep.subr.bf16.mxu0 0
      %1380 = vmatpush1.bf16.msra.mxu0 0
      %1381 = vmatprep.subr.bf16.mxu0 0
      %1382 = vmatpush1.bf16.msra.mxu0 0
      %1383 = vmatprep.subr.bf16.mxu0 0
      %1384 = vmatpush1.bf16.msra.mxu0 0
      %1385 = vmatprep.subr.bf16.mxu0 0
      %1386 = vmatpush1.bf16.msra.mxu0 0
      %1387 = vmatprep.subr.bf16.mxu0 0
      %1388 = vmatpush1.bf16.msra.mxu0 0
      %1389 = vmatprep.subr.bf16.mxu0 0
      %1390 = vmatpush1.bf16.msra.mxu0 0
      %1391 = vmatprep.subr.bf16.mxu0 0
      %1392 = vmatpush1.bf16.msra.mxu0 0
      %1393 = vmatprep.subr.bf16.mxu0 0
      %1394 = vmatpush1.bf16.msra.mxu0 0
      %1395 = vmatprep.subr.bf16.mxu0 0
      %1396 = vmatpush1.bf16.msra.mxu0 0
      %1397 = vmatprep.subr.bf16.mxu0 0
      %1398 = vmatpush1.bf16.msra.mxu0 0
      %1399 = vmatprep.subr.bf16.mxu0 0
      %1400 = vmatpush1.bf16.msra.mxu0 0
      %1401 = vmatprep.subr.bf16.mxu0 0
      %1402 = vmatpush1.bf16.msra.mxu0 0
      %1403 = vmatprep.subr.bf16.mxu0 0
      %1404 = vmatpush1.bf16.msra.mxu0 0
      %1405 = vmatprep.mubr.bf16.mxu0 0
      %1406 = vmatmul.mubr.bf16.gmra.mrb[0].mxu0 %v1371
      %v1407 = vpop.f32.mrb[0].mxu0
      %v1408 = vadd.f32 0.0, %v1407
      %v1409 = vpop.f32.mrb[0].mxu0
      %v1410 = vpop.f32.mrb[0].mxu0
      %v1411 = vadd.f32 0.0, %v1410
      %v1412 = vpop.f32.mrb[0].mxu0
      %1413 = vdwg.mxu0
      %v1416 = vunpack.c.l.b16 %v902
      %v1417 = vunpack.c.l.b16 %v903
      %v1418 = vpack.c.b16 %v1417, %v1416
      %v1421 = vsel %vm909, %v1263, 0
      %1423 = vmatprep.subr.bf16.mxu0 0
      %1424 = vmatpush1.bf16.msra.mxu0 %v1418
      %1425 = vmatprep.subr.bf16.mxu0 0
      %1426 = vmatpush1.bf16.msra.mxu0 0
      %1427 = vmatprep.subr.bf16.mxu0 0
      %1428 = vmatpush1.bf16.msra.mxu0 0
      %1429 = vmatprep.subr.bf16.mxu0 0
      %1430 = vmatpush1.bf16.msra.mxu0 0
      %1431 = vmatprep.subr.bf16.mxu0 0
      %1432 = vmatpush1.bf16.msra.mxu0 0
      %1433 = vmatprep.subr.bf16.mxu0 0
      %1434 = vmatpush1.bf16.msra.mxu0 0
      %1435 = vmatprep.subr.bf16.mxu0 0
      %1436 = vmatpush1.bf16.msra.mxu0 0
      %1437 = vmatprep.subr.bf16.mxu0 0
      %1438 = vmatpush1.bf16.msra.mxu0 0
      %1439 = vmatprep.subr.bf16.mxu0 0
      %1440 = vmatpush1.bf16.msra.mxu0 0
      %1441 = vmatprep.subr.bf16.mxu0 0
      %1442 = vmatpush1.bf16.msra.mxu0 0
      %1443 = vmatprep.subr.bf16.mxu0 0
      %1444 = vmatpush1.bf16.msra.mxu0 0
      %1445 = vmatprep.subr.bf16.mxu0 0
      %1446 = vmatpush1.bf16.msra.mxu0 0
      %1447 = vmatprep.subr.bf16.mxu0 0
      %1448 = vmatpush1.bf16.msra.mxu0 0
      %1449 = vmatprep.subr.bf16.mxu0 0
      %1450 = vmatpush1.bf16.msra.mxu0 0
      %1451 = vmatprep.subr.bf16.mxu0 0
      %1452 = vmatpush1.bf16.msra.mxu0 0
      %1453 = vmatprep.subr.bf16.mxu0 0
      %1454 = vmatpush1.bf16.msra.mxu0 0
      %1455 = vmatprep.mubr.bf16.mxu0 0
      %1456 = vmatmul.mubr.bf16.gmra.mrb[0].mxu0 %v1421
      %v1457 = vpop.f32.mrb[0].mxu0
      %v1458 = vadd.f32 0.0, %v1457
      %v1459 = vpop.f32.mrb[0].mxu0
      %v1460 = vpop.f32.mrb[0].mxu0
      %v1461 = vadd.f32 0.0, %v1460
      %v1462 = vpop.f32.mrb[0].mxu0
      %1463 = vdwg.mxu0
      %v1464 = vadd.f32 %v1252, %v1308
      %v1465 = vadd.f32 %v1253, %v1311
      %v1466 = vadd.f32 %v1254, %v1358
      %v1467 = vadd.f32 %v1255, %v1361
      %v1468 = vadd.f32 %v1256, %v1408
      %v1469 = vadd.f32 %v1257, %v1411
      %v1470 = vadd.f32 %v1258, %v1458
      %v1471 = vadd.f32 %v1259, %v1461
      %v1472 = vrcp.pop %v1244
      %v1473 = vrcp.pop %v1245
      %v1474 = vrcp.pop %v1246
      %v1475 = vrcp.pop %v1247
      %v1476 = vrcp.pop %v1248
      %v1477 = vrcp.pop %v1249
      %v1478 = vrcp.pop %v1250
      %v1479 = vrcp.pop %v1251
      %v1480 = vmul.f32 %v1464, %v1472
      %v1481 = vmul.f32 %v1465, %v1473
      %v1482 = vmul.f32 %v1466, %v1474
      %v1483 = vmul.f32 %v1467, %v1475
      %v1484 = vmul.f32 %v1468, %v1476
      %v1485 = vmul.f32 %v1469, %v1477
      %v1486 = vmul.f32 %v1470, %v1478
      %v1487 = vmul.f32 %v1471, %v1479
      %v1488 = vpack.c.bf16 %v1481, %v1480
      %v1489 = vpack.c.bf16 %v1483, %v1482
      %v1490 = vpack.c.bf16 %v1485, %v1484
      %v1491 = vpack.c.bf16 %v1487, %v1486
      %v1496 = vunpack.c.l.b16 %v1488
      %v1497 = vunpack.c.h.b16 %v1488
      %v1498 = vunpack.c.l.b16 %v1489
      %v1499 = vunpack.c.h.b16 %v1489
      %v1500 = vunpack.c.l.b16 %v1490
      %v1501 = vunpack.c.h.b16 %v1490
      %v1502 = vunpack.c.l.b16 %v1491
      %v1503 = vunpack.c.h.b16 %v1491
      %v1504 = vpack.c.b16 %v1496, %v1496
      %v1505 = vpack.c.b16 %v1497, %v1497
      %v1506 = vpack.c.b16 %v1498, %v1498
      %v1507 = vpack.c.b16 %v1499, %v1499
      %v1508 = vpack.c.b16 %v1500, %v1500
      %v1509 = vpack.c.b16 %v1501, %v1501
      %v1510 = vpack.c.b16 %v1502, %v1502
      %v1511 = vpack.c.b16 %v1503, %v1503
      %vm1520 = vcmask 125952
      %1521 = vst.msk [vmem:[%s248] sm:$0xf] %vm1520, %v1504
      %1522 = vst.msk [vmem:[%s248 + $0x4] sm:$0xf] %vm1520, %v1505
      %1523 = vst.msk [vmem:[%s248 + $0x8] sm:$0xf] %vm1520, %v1506
      %1524 = vst.msk [vmem:[%s248 + $0xc] sm:$0xf] %vm1520, %v1507
      %1525 = vst.msk [vmem:[%s248 + $0x10] sm:$0xf] %vm1520, %v1508
      %1526 = vst.msk [vmem:[%s248 + $0x14] sm:$0xf] %vm1520, %v1509
      %1527 = vst.msk [vmem:[%s248 + $0x18] sm:$0xf] %vm1520, %v1510
      %1528 = vst.msk [vmem:[%s248 + $0x1c] sm:$0xf] %vm1520, %v1511
      %s1529 = smul.u32 2, %s19
      %p1530 = scmp.lt.s32.totalorder %s18, 1
      %s1531 = scalar_select %p1530, %s18, 1
      %p1532 = scmp.lt.s32.totalorder %s1529, 1
      %s1533 = scalar_select %p1532, %s1529, 1
      %s1534 = smul.addr %s1531, 8
      %s1535 = sadd.s32 %s1533, %s1534
      %s1536 = smul.addr %s1535, 4
      %s1537 = scalar_lea.vmem %s3, %s1536
      // Predicated region
      $region40: #{gpt2_forward.13} parent=31 // pred_check
        %p1538 = pneg %p126
      $region41: #{gpt2_forward.13} parent=31 // pred_check_branch
        %1540 = sbr.rel (%p1538) target = $region43
      $region42: #{gpt2_forward.13} parent=31 // pred_region
        %s1541 = smul.u32 2, %s19
      $region43: #{gpt2_forward.13} parent=31 // pred_fallthru
        _
    $region32: #{gpt2_forward.13} parent=5 // pred_fallthru
      _
    %p1542 = scmp.le.s32.totalorder 2, %s9
    // Predicated region
    $region44: #{gpt2_forward.13} parent=5 // pred_check
      %p1543 = pneg %p1542
    $region45: #{gpt2_forward.13} parent=5 // pred_check_branch
      %1545 = sbr.rel (%p1543) target = $region47
    $region46: #{gpt2_forward.13} parent=5 // pred_region
      %s1546 = ssub.s32 %s9, 2
      // Predicated region
      $region48: #{gpt2_forward.13} parent=46 // pred_check
        %p1547 = pneg %p132
      $region49: #{gpt2_forward.13} parent=46 // pred_check_branch
        %1549 = sbr.rel (%p1547) target = $region51
      $region50: #{gpt2_forward.13} parent=46 // pred_region
        %s1550 = smul.u32 2, %s21
        %p1551 = scmp.lt.s32.totalorder %s20, 1
        %s1552 = scalar_select %p1551, %s20, 1
        %p1553 = scmp.lt.s32.totalorder %s1550, 1
        %s1554 = scalar_select %p1553, %s1550, 1
        %s1555 = smul.addr %s1552, 8
        %s1556 = sadd.s32 %s1554, %s1555
        %s1557 = smul.addr %s1556, 4
        %s1558 = scalar_lea.vmem %s3, %s1557
      $region51: #{gpt2_forward.13} parent=46 // pred_fallthru
        _
    $region47: #{gpt2_forward.13} parent=5 // pred_fallthru
      _
  $region6: #{gpt2_forward.13} parent=0 // loop_footer
    %s13 = sadd.s32 1, %s9
  $region7: #{gpt2_forward.13} parent=0 // loop_footer_branch
    %8 = sbr.rel target = $region3
  $region8: #{gpt2_forward.13} parent=0 // loop_exit
    _

// kernel: gpt2_forward.22
$region0: #{gpt2_forward.22}
  #allocation0 [shape = 'u32[]', space=smem, size = 0x4, offset = 0x4, fixed_abs, tag = 'smem constant byte address 0x4 - core index']
  #allocation1 [shape = 'u32[144,128]{1,0:T(1,128)}', space=vmem, size = 0x12000, scoped, tag = 'internal scratch']
  %s0 = inlined_call_operand.vmem [shape: bf16[32,64], index: 0, kind: input, shape index: {}]
  %s1 = inlined_call_operand.vmem [shape: bf16[1,64], index: 1, kind: input, shape index: {}]
  %s2 = inlined_call_operand.vmem [shape: bf16[1,64], index: 2, kind: input, shape index: {}]
  %s3 = inlined_call_operand.vmem [shape: bf16[32,64], index: 3, kind: output, shape index: {}]
  %s4 = sld [smem:[#allocation0]]
  $region22: #{gpt2_forward.22} parent=0
    _
  %s6 = ssub.s32 1, %s4
  %s7 = scalar_select 0, %s6, %s4
  // Predicated region
  $region2: #{gpt2_forward.22} parent=0 // pred_check
    _
  $region3: #{gpt2_forward.22} parent=0 // pred_check_branch
    %9 = sbr.rel (0) target = $region5
  $region4: #{gpt2_forward.22} parent=0 // pred_region
    _
  $region5: #{gpt2_forward.22} parent=0 // pred_fallthru
    _
  // Predicated region
  $region6: #{gpt2_forward.22} parent=0 // pred_check
    _
  $region7: #{gpt2_forward.22} parent=0 // pred_check_branch
    %11 = sbr.rel (0) target = $region9
  $region8: #{gpt2_forward.22} parent=0 // pred_region
    _
  $region9: #{gpt2_forward.22} parent=0 // pred_fallthru
    _
  // Predicated region
  $region10: #{gpt2_forward.22} parent=0 // pred_check
    _
  $region11: #{gpt2_forward.22} parent=0 // pred_check_branch
    %13 = sbr.rel (0) target = $region13
  $region12: #{gpt2_forward.22} parent=0 // pred_region
    _
  $region13: #{gpt2_forward.22} parent=0 // pred_fallthru
    _
  %v14 = vld [vmem:[%s0] sm:$0xf]
  %v15 = vld [vmem:[%s0 + $0x4] sm:$0xf]
  %v16 = vld [vmem:[%s0 + $0x8] sm:$0xf]
  %v17 = vld [vmem:[%s0 + $0xc] sm:$0xf]
  %v18 = vunpack.c.l.bf16 %v14
  %v19 = vunpack.c.l.bf16 %v15
  %v20 = vunpack.c.l.bf16 %v16
  %v21 = vunpack.c.l.bf16 %v17
  %vm22 = vcmask 523264
  %v23 = vsel %vm22, %v18, 0.0
  %24 = vadd.xlane.f32.xlu0 %v23
  %v25 = vpop.xlane.xlu0 %24
  %v26 = vsel %vm22, %v19, 0.0
  %27 = vadd.xlane.f32.xlu0 %v26
  %v28 = vpop.xlane.xlu0 %27
  %v29 = vsel %vm22, %v20, 0.0
  %30 = vadd.xlane.f32.xlu0 %v29
  %v31 = vpop.xlane.xlu0 %30
  %v32 = vsel %vm22, %v21, 0.0
  %33 = vadd.xlane.f32.xlu0 %v32
  %v34 = vpop.xlane.xlu0 %33
  %v35 = vrcp.pop 64.0
  %v36 = vmul.f32 %v25, %v35
  %v37 = vmul.f32 %v28, %v35
  %v38 = vmul.f32 %v31, %v35
  %v39 = vmul.f32 %v34, %v35
  %v40 = vsub.f32 %v18, %v36
  %v41 = vsub.f32 %v19, %v37
  %v42 = vsub.f32 %v20, %v38
  %v43 = vsub.f32 %v21, %v39
  %v44 = vmul.f32 %v40, %v40
  %v45 = vmul.f32 %v41, %v41
  %v46 = vmul.f32 %v42, %v42
  %v47 = vmul.f32 %v43, %v43
  %v48 = vsel %vm22, %v44, 0.0
  %49 = vadd.xlane.f32.xlu0 %v48
  %v50 = vpop.xlane.xlu0 %49
  %v51 = vsel %vm22, %v45, 0.0
  %52 = vadd.xlane.f32.xlu0 %v51
  %v53 = vpop.xlane.xlu0 %52
  %v54 = vsel %vm22, %v46, 0.0
  %55 = vadd.xlane.f32.xlu0 %v54
  %v56 = vpop.xlane.xlu0 %55
  %v57 = vsel %vm22, %v47, 0.0
  %58 = vadd.xlane.f32.xlu0 %v57
  %v59 = vpop.xlane.xlu0 %58
  %v60 = vmul.f32 %v50, %v35
  %v61 = vmul.f32 %v53, %v35
  %v62 = vmul.f32 %v56, %v35
  %v63 = vmul.f32 %v59, %v35
  %v64 = vadd.f32 %v60, 1e-05
  %v65 = vadd.f32 %v61, 1e-05
  %v66 = vadd.f32 %v62, 1e-05
  %v67 = vadd.f32 %v63, 1e-05
  %v68 = vrsqrt.pop %v64
  %v69 = vrsqrt.pop %v65
  %v70 = vrsqrt.pop %v66
  %v71 = vrsqrt.pop %v67
  %v72 = vmul.f32 %v40, %v68
  %v73 = vmul.f32 %v41, %v69
  %v74 = vmul.f32 %v42, %v70
  %v75 = vmul.f32 %v43, %v71
  %v76 = vld [vmem:[%s1] sm:$0x1]
  %v77 = vunpack.c.l.bf16 %v76
  %v78 = vlaneseq
  %v79 = vshrl.u32 %v78, 7
  %v80 = vsub.s32 0, %v79
  %v81 = vrot.slane %v77, %v80
  %v82 = vmul.f32 %v72, %v81
  %v83 = vmul.f32 %v73, %v81
  %v84 = vmul.f32 %v74, %v81
  %v85 = vmul.f32 %v75, %v81
  %v86 = vld [vmem:[%s2] sm:$0x1]
  %v87 = vunpack.c.l.bf16 %v86
  %v88 = vlaneseq
  %v89 = vshrl.u32 %v88, 7
  %v90 = vsub.s32 0, %v89
  %v91 = vrot.slane %v87, %v90
  %v92 = vadd.f32 %v82, %v91
  %v93 = vadd.f32 %v83, %v91
  %v94 = vadd.f32 %v84, %v91
  %v95 = vadd.f32 %v85, %v91
  %v96 = vpack.c.bf16 %v93, %v92
  %v97 = vpack.c.bf16 %v95, %v94
  %v100 = vunpack.c.l.b16 %v96
  %v101 = vunpack.c.h.b16 %v96
  %v102 = vunpack.c.l.b16 %v97
  %v103 = vunpack.c.h.b16 %v97
  %v104 = vpack.c.b16 %v100, %v100
  %v105 = vpack.c.b16 %v101, %v101
  %v106 = vpack.c.b16 %v102, %v102
  %v107 = vpack.c.b16 %v103, %v103
  %vm112 = vcmask 519168
  %113 = vst.msk [vmem:[%s3] sm:$0xf] %vm112, %v104
  %114 = vst.msk [vmem:[%s3 + $0x4] sm:$0xf] %vm112, %v105
  %115 = vst.msk [vmem:[%s3 + $0x8] sm:$0xf] %vm112, %v106
  %116 = vst.msk [vmem:[%s3 + $0xc] sm:$0xf] %vm112, %v107
  // Predicated region
  $region14: #{gpt2_forward.22} parent=0 // pred_check
    _
  $region15: #{gpt2_forward.22} parent=0 // pred_check_branch
    %118 = sbr.rel (0) target = $region17
  $region16: #{gpt2_forward.22} parent=0 // pred_region
    _
  $region17: #{gpt2_forward.22} parent=0 // pred_fallthru
    _
  // Predicated region
  $region18: #{gpt2_forward.22} parent=0 // pred_check
    _
  $region19: #{gpt2_forward.22} parent=0 // pred_check_branch
    %120 = sbr.rel (0) target = $region21
  $region20: #{gpt2_forward.22} parent=0 // pred_region
    _
  $region21: #{gpt2_forward.22} parent=0 // pred_fallthru
    _

// kernel: gpt2_forward.16
$region0: #{gpt2_forward.16}
  #allocation0 [shape = 'u32[]', space=smem, size = 0x4, offset = 0x4, fixed_abs, tag = 'smem constant byte address 0x4 - core index']
  #allocation1 [shape = 'u32[144,128]{1,0:T(1,128)}', space=vmem, size = 0x12000, scoped, tag = 'internal scratch']
  #allocation2 [shape = 'f32[32,64]{1,0:T(8,128)}', space=vmem, size = 0x4000, scoped, tag = 'scratch operand']
  %s0 = inlined_call_operand.vmem [shape: bf16[32,256], index: 0, kind: input, shape index: {}]
  %s1 = inlined_call_operand.vmem [shape: bf16[256,64], index: 1, kind: input, shape index: {}]
  %s2 = inlined_call_operand.vmem [shape: bf16[1,64], index: 2, kind: input, shape index: {}]
  %s3 = inlined_call_operand.vmem [shape: bf16[32,64], index: 3, kind: input, shape index: {}]
  %s4 = inlined_call_operand.vmem [shape: bf16[32,64], index: 4, kind: output, shape index: {}]
  %s5 = sld [smem:[#allocation0]]
  $region34: #{gpt2_forward.16} parent=0
    _
  %s7 = ssub.s32 1, %s5
  %s8 = scalar_select 0, %s7, %s5
  // Predicated region
  $region2: #{gpt2_forward.16} parent=0 // pred_check
    _
  $region3: #{gpt2_forward.16} parent=0 // pred_check_branch
    %10 = sbr.rel (0) target = $region5
  $region4: #{gpt2_forward.16} parent=0 // pred_region
    _
  $region5: #{gpt2_forward.16} parent=0 // pred_fallthru
    _
  // Predicated region
  $region6: #{gpt2_forward.16} parent=0 // pred_check
    _
  $region7: #{gpt2_forward.16} parent=0 // pred_check_branch
    %12 = sbr.rel (0) target = $region9
  $region8: #{gpt2_forward.16} parent=0 // pred_region
    _
  $region9: #{gpt2_forward.16} parent=0 // pred_fallthru
    _
  // Predicated region
  $region10: #{gpt2_forward.16} parent=0 // pred_check
    _
  $region11: #{gpt2_forward.16} parent=0 // pred_check_branch
    %14 = sbr.rel (0) target = $region13
  $region12: #{gpt2_forward.16} parent=0 // pred_region
    _
  $region13: #{gpt2_forward.16} parent=0 // pred_fallthru
    _
  // Predicated region
  $region14: #{gpt2_forward.16} parent=0 // pred_check
    _
  $region15: #{gpt2_forward.16} parent=0 // pred_check_branch
    %16 = sbr.rel (0) target = $region17
  $region16: #{gpt2_forward.16} parent=0 // pred_region
    _
  $region17: #{gpt2_forward.16} parent=0 // pred_fallthru
    _
  %p18 = scmp.eq.s32.totalorder 0, 0
  // Predicated region
  $region18: #{gpt2_forward.16} parent=0 // pred_check
    %p19 = pneg %p18
  $region19: #{gpt2_forward.16} parent=0 // pred_check_branch
    %21 = sbr.rel (%p19) target = $region21
  $region20: #{gpt2_forward.16} parent=0 // pred_region
    %vm22 = vcmask 523264
    %23 = vst.msk [vmem:[#allocation2] sm:$0xff] %vm22, 0.0
    %24 = vst.msk [vmem:[#allocation2 + $0x8] sm:$0xff] %vm22, 0.0
    %25 = vst.msk [vmem:[#allocation2 + $0x10] sm:$0xff] %vm22, 0.0
    %26 = vst.msk [vmem:[#allocation2 + $0x18] sm:$0xff] %vm22, 0.0
  $region21: #{gpt2_forward.16} parent=0 // pred_fallthru
    _
  %v27 = vld [vmem:[#allocation2] sm:$0xff]
  %v28 = vld [vmem:[#allocation2 + $0x8] sm:$0xff]
  %v29 = vld [vmem:[#allocation2 + $0x10] sm:$0xff]
  %v30 = vld [vmem:[#allocation2 + $0x18] sm:$0xff]
  %v31 = vld [vmem:[%s0] sm:$0xff]
  %v32 = vld [vmem:[%s0 + $0x8] sm:$0xff]
  %v33 = vld [vmem:[%s0 + $0x10] sm:$0xff]
  %v34 = vld [vmem:[%s0 + $0x18] sm:$0xff]
  %v35 = vld [vmem:[%s1] sm:$0xf]
  %v36 = vld [vmem:[%s1 + $0x4] sm:$0xf]
  %v37 = vld [vmem:[%s1 + $0x8] sm:$0xf]
  %v38 = vld [vmem:[%s1 + $0xc] sm:$0xf]
  %v39 = vld [vmem:[%s1 + $0x10] sm:$0xf]
  %v40 = vld [vmem:[%s1 + $0x14] sm:$0xf]
  %v41 = vld [vmem:[%s1 + $0x18] sm:$0xf]
  %v42 = vld [vmem:[%s1 + $0x1c] sm:$0xf]
  %v43 = vld [vmem:[%s1 + $0x20] sm:$0xf]
  %v44 = vld [vmem:[%s1 + $0x24] sm:$0xf]
  %v45 = vld [vmem:[%s1 + $0x28] sm:$0xf]
  %v46 = vld [vmem:[%s1 + $0x2c] sm:$0xf]
  %v47 = vld [vmem:[%s1 + $0x30] sm:$0xf]
  %v48 = vld [vmem:[%s1 + $0x34] sm:$0xf]
  %v49 = vld [vmem:[%s1 + $0x38] sm:$0xf]
  %v50 = vld [vmem:[%s1 + $0x3c] sm:$0xf]
  %v51 = vld [vmem:[%s1 + $0x40] sm:$0xf]
  %v52 = vld [vmem:[%s1 + $0x44] sm:$0xf]
  %v53 = vld [vmem:[%s1 + $0x48] sm:$0xf]
  %v54 = vld [vmem:[%s1 + $0x4c] sm:$0xf]
  %v55 = vld [vmem:[%s1 + $0x50] sm:$0xf]
  %v56 = vld [vmem:[%s1 + $0x54] sm:$0xf]
  %v57 = vld [vmem:[%s1 + $0x58] sm:$0xf]
  %v58 = vld [vmem:[%s1 + $0x5c] sm:$0xf]
  %v59 = vld [vmem:[%s1 + $0x60] sm:$0xf]
  %v60 = vld [vmem:[%s1 + $0x64] sm:$0xf]
  %v61 = vld [vmem:[%s1 + $0x68] sm:$0xf]
  %v62 = vld [vmem:[%s1 + $0x6c] sm:$0xf]
  %v63 = vld [vmem:[%s1 + $0x70] sm:$0xf]
  %v64 = vld [vmem:[%s1 + $0x74] sm:$0xf]
  %v65 = vld [vmem:[%s1 + $0x78] sm:$0xf]
  %v66 = vld [vmem:[%s1 + $0x7c] sm:$0xf]
  %v71 = vunpack.c.l.b16 %v31
  %v72 = vunpack.c.h.b16 %v31
  %v73 = vunpack.c.l.b16 %v32
  %v74 = vunpack.c.h.b16 %v32
  %v75 = vunpack.c.l.b16 %v33
  %v76 = vunpack.c.h.b16 %v33
  %v77 = vunpack.c.l.b16 %v34
  %v78 = vunpack.c.h.b16 %v34
  %v79 = vpack.c.b16 %v73, %v71
  %v80 = vpack.c.b16 %v74, %v72
  %v81 = vpack.c.b16 %v77, %v75
  %v82 = vpack.c.b16 %v78, %v76
  %v119 = vunpack.c.l.b16 %v35
  %v120 = vunpack.c.l.b16 %v36
  %v121 = vunpack.c.l.b16 %v37
  %v122 = vunpack.c.l.b16 %v38
  %v123 = vunpack.c.l.b16 %v39
  %v124 = vunpack.c.l.b16 %v40
  %v125 = vunpack.c.l.b16 %v41
  %v126 = vunpack.c.l.b16 %v42
  %v127 = vunpack.c.l.b16 %v43
  %v128 = vunpack.c.l.b16 %v44
  %v129 = vunpack.c.l.b16 %v45
  %v130 = vunpack.c.l.b16 %v46
  %v131 = vunpack.c.l.b16 %v47
  %v132 = vunpack.c.l.b16 %v48
  %v133 = vunpack.c.l.b16 %v49
  %v134 = vunpack.c.l.b16 %v50
  %v135 = vunpack.c.l.b16 %v51
  %v136 = vunpack.c.l.b16 %v52
  %v137 = vunpack.c.l.b16 %v53
  %v138 = vunpack.c.l.b16 %v54
  %v139 = vunpack.c.l.b16 %v55
  %v140 = vunpack.c.l.b16 %v56
  %v141 = vunpack.c.l.b16 %v57
  %v142 = vunpack.c.l.b16 %v58
  %v143 = vunpack.c.l.b16 %v59
  %v144 = vunpack.c.l.b16 %v60
  %v145 = vunpack.c.l.b16 %v61
  %v146 = vunpack.c.l.b16 %v62
  %v147 = vunpack.c.l.b16 %v63
  %v148 = vunpack.c.l.b16 %v64
  %v149 = vunpack.c.l.b16 %v65
  %v150 = vunpack.c.l.b16 %v66
  %v151 = vpack.c.b16 %v120, %v119
  %v152 = vpack.c.b16 %v122, %v121
  %v153 = vpack.c.b16 %v124, %v123
  %v154 = vpack.c.b16 %v126, %v125
  %v155 = vpack.c.b16 %v128, %v127
  %v156 = vpack.c.b16 %v130, %v129
  %v157 = vpack.c.b16 %v132, %v131
  %v158 = vpack.c.b16 %v134, %v133
  %v159 = vpack.c.b16 %v136, %v135
  %v160 = vpack.c.b16 %v138, %v137
  %v161 = vpack.c.b16 %v140, %v139
  %v162 = vpack.c.b16 %v142, %v141
  %v163 = vpack.c.b16 %v144, %v143
  %v164 = vpack.c.b16 %v146, %v145
  %v165 = vpack.c.b16 %v148, %v147
  %v166 = vpack.c.b16 %v150, %v149
  %183 = vmatprep.subr.bf16.mxu0 0
  %184 = vmatpush1.bf16.msra.mxu0 %v151
  %185 = vmatprep.subr.bf16.mxu0 0
  %186 = vmatpush1.bf16.msra.mxu0 %v152
  %187 = vmatprep.subr.bf16.mxu0 0
  %188 = vmatpush1.bf16.msra.mxu0 %v153
  %189 = vmatprep.subr.bf16.mxu0 0
  %190 = vmatpush1.bf16.msra.mxu0 %v154
  %191 = vmatprep.subr.bf16.mxu0 0
  %192 = vmatpush1.bf16.msra.mxu0 %v155
  %193 = vmatprep.subr.bf16.mxu0 0
  %194 = vmatpush1.bf16.msra.mxu0 %v156
  %195 = vmatprep.subr.bf16.mxu0 0
  %196 = vmatpush1.bf16.msra.mxu0 %v157
  %197 = vmatprep.subr.bf16.mxu0 0
  %198 = vmatpush1.bf16.msra.mxu0 %v158
  %199 = vmatprep.subr.bf16.mxu0 0
  %200 = vmatpush1.bf16.msra.mxu0 %v159
  %201 = vmatprep.subr.bf16.mxu0 0
  %202 = vmatpush1.bf16.msra.mxu0 %v160
  %203 = vmatprep.subr.bf16.mxu0 0
  %204 = vmatpush1.bf16.msra.mxu0 %v161
  %205 = vmatprep.subr.bf16.mxu0 0
  %206 = vmatpush1.bf16.msra.mxu0 %v162
  %207 = vmatprep.subr.bf16.mxu0 0
  %208 = vmatpush1.bf16.msra.mxu0 %v163
  %209 = vmatprep.subr.bf16.mxu0 0
  %210 = vmatpush1.bf16.msra.mxu0 %v164
  %211 = vmatprep.subr.bf16.mxu0 0
  %212 = vmatpush1.bf16.msra.mxu0 %v165
  %213 = vmatprep.subr.bf16.mxu0 0
  %214 = vmatpush1.bf16.msra.mxu0 %v166
  %215 = vmatprep.mubr.bf16.mxu0 %v80
  %216 = vmatmul.mubr.bf16.gmra.mrb[0].mxu0 %v79
  %v217 = vpop.f32.mrb[0].mxu0
  %v218 = vadd.f32 0.0, %v217
  %v219 = vpop.f32.mrb[0].mxu0
  %v220 = vpop.f32.mrb[0].mxu0
  %v221 = vadd.f32 0.0, %v220
  %v222 = vpop.f32.mrb[0].mxu0
  %223 = vmatprep.mubr.bf16.mxu0 %v82
  %224 = vmatmul.mubr.bf16.gmra.mrb[0].mxu0 %v81
  %v225 = vpop.f32.mrb[0].mxu0
  %v226 = vadd.f32 0.0, %v225
  %v227 = vpop.f32.mrb[0].mxu0
  %v228 = vpop.f32.mrb[0].mxu0
  %v229 = vadd.f32 0.0, %v228
  %v230 = vpop.f32.mrb[0].mxu0
  %231 = vdwg.mxu0
  %v232 = vadd.f32 %v27, %v218
  %v233 = vadd.f32 %v28, %v221
  %v234 = vadd.f32 %v29, %v226
  %v235 = vadd.f32 %v30, %v229
  %vm236 = vcmask 523264
  %237 = vst.msk [vmem:[#allocation2] sm:$0xff] %vm236, %v232
  %238 = vst.msk [vmem:[#allocation2 + $0x8] sm:$0xff] %vm236, %v233
  %239 = vst.msk [vmem:[#allocation2 + $0x10] sm:$0xff] %vm236, %v234
  %240 = vst.msk [vmem:[#allocation2 + $0x18] sm:$0xff] %vm236, %v235
  // Predicated region
  $region22: #{gpt2_forward.16} parent=0 // pred_check
    %p241 = pneg %p18
  $region23: #{gpt2_forward.16} parent=0 // pred_check_branch
    %243 = sbr.rel (%p241) target = $region25
  $region24: #{gpt2_forward.16} parent=0 // pred_region
    %v244 = vld [vmem:[#allocation2] sm:$0xff]
    %v245 = vld [vmem:[#allocation2 + $0x8] sm:$0xff]
    %v246 = vld [vmem:[#allocation2 + $0x10] sm:$0xff]
    %v247 = vld [vmem:[#allocation2 + $0x18] sm:$0xff]
    %v248 = vld [vmem:[%s2] sm:$0x1]
    %v249 = vunpack.c.l.bf16 %v248
    %v250 = vlaneseq
    %v251 = vshrl.u32 %v250, 7
    %v252 = vsub.s32 0, %v251
    %v253 = vrot.slane %v249, %v252
    %v254 = vadd.f32 %v244, %v253
    %v255 = vadd.f32 %v245, %v253
    %v256 = vadd.f32 %v246, %v253
    %v257 = vadd.f32 %v247, %v253
    %v258 = vld [vmem:[%s3] sm:$0xf]
    %v259 = vld [vmem:[%s3 + $0x4] sm:$0xf]
    %v260 = vld [vmem:[%s3 + $0x8] sm:$0xf]
    %v261 = vld [vmem:[%s3 + $0xc] sm:$0xf]
    %v262 = vunpack.c.l.bf16 %v258
    %v263 = vunpack.c.l.bf16 %v259
    %v264 = vunpack.c.l.bf16 %v260
    %v265 = vunpack.c.l.bf16 %v261
    %v266 = vadd.f32 %v254, %v262
    %v267 = vadd.f32 %v255, %v263
    %v268 = vadd.f32 %v256, %v264
    %v269 = vadd.f32 %v257, %v265
    %v270 = vpack.c.bf16 %v267, %v266
    %v271 = vpack.c.bf16 %v269, %v268
    %v274 = vunpack.c.l.b16 %v270
    %v275 = vunpack.c.h.b16 %v270
    %v276 = vunpack.c.l.b16 %v271
    %v277 = vunpack.c.h.b16 %v271
    %v278 = vpack.c.b16 %v274, %v274
    %v279 = vpack.c.b16 %v275, %v275
    %v280 = vpack.c.b16 %v276, %v276
    %v281 = vpack.c.b16 %v277, %v277
    %vm286 = vcmask 519168
    %287 = vst.msk [vmem:[%s4] sm:$0xf] %vm286, %v278
    %288 = vst.msk [vmem:[%s4 + $0x4] sm:$0xf] %vm286, %v279
    %289 = vst.msk [vmem:[%s4 + $0x8] sm:$0xf] %vm286, %v280
    %290 = vst.msk [vmem:[%s4 + $0xc] sm:$0xf] %vm286, %v281
  $region25: #{gpt2_forward.16} parent=0 // pred_fallthru
    _
  // Predicated region
  $region26: #{gpt2_forward.16} parent=0 // pred_check
    _
  $region27: #{gpt2_forward.16} parent=0 // pred_check_branch
    %292 = sbr.rel (0) target = $region29
  $region28: #{gpt2_forward.16} parent=0 // pred_region
    _
  $region29: #{gpt2_forward.16} parent=0 // pred_fallthru
    _
  // Predicated region
  $region30: #{gpt2_forward.16} parent=0 // pred_check
    _
  $region31: #{gpt2_forward.16} parent=0 // pred_check_branch
    %294 = sbr.rel (0) target = $region33
  $region32: #{gpt2_forward.16} parent=0 // pred_region
    _
  $region33: #{gpt2_forward.16} parent=0 // pred_fallthru
    _

// kernel: gpt2_forward.23
$region0: #{gpt2_forward.23}
  #allocation0 [shape = 'u32[]', space=smem, size = 0x4, offset = 0x4, fixed_abs, tag = 'smem constant byte address 0x4 - core index']
  #allocation1 [shape = 'u32[144,128]{1,0:T(1,128)}', space=vmem, size = 0x12000, scoped, tag = 'internal scratch']
  #allocation2 [shape = 'f32[32,512]{1,0:T(8,128)}', space=vmem, size = 0x10000, scoped, tag = 'scratch operand']
  %s0 = inlined_call_operand.vmem [shape: bf16[32,64], index: 0, kind: input, shape index: {}]
  %s1 = inlined_call_operand.vmem [shape: bf16[64,512], index: 1, kind: input, shape index: {}]
  %s2 = inlined_call_operand.hbm [shape: f32[32,512], index: 2, kind: output, shape index: {}]
  %s3 = sld [smem:[#allocation0]]
  $region26: #{gpt2_forward.23} parent=0
    _
  %s5 = ssub.s32 1, %s3
  %s6 = scalar_select 0, %s5, %s3
  $region1: #{gpt2_forward.23} parent=0
    #allocation3 [shape = 'u8[65536]{0}', space=vmem, size = 0x10000, scoped, tag = 'output window, operand 0, single buffered']
    #allocation4 [shape = 's32[1]{0}', space=sflag, size = 0x4, scoped, tag = 'scoped memory for gpt2_forward.23']
    %7 = vsyncpa [#allocation4], 0
    // Predicated region
    $region2: #{gpt2_forward.23} parent=1 // pred_check
      _
    $region3: #{gpt2_forward.23} parent=1 // pred_check_branch
      %9 = sbr.rel (0) target = $region5
    $region4: #{gpt2_forward.23} parent=1 // pred_region
      _
    $region5: #{gpt2_forward.23} parent=1 // pred_fallthru
      _
    // Predicated region
    $region6: #{gpt2_forward.23} parent=1 // pred_check
      _
    $region7: #{gpt2_forward.23} parent=1 // pred_check_branch
      %11 = sbr.rel (0) target = $region9
    $region8: #{gpt2_forward.23} parent=1 // pred_region
      _
    $region9: #{gpt2_forward.23} parent=1 // pred_fallthru
      _
    %p13 = scmp.eq.s32.totalorder 0, 0
    // Predicated region
    $region10: #{gpt2_forward.23} parent=1 // pred_check
      %p14 = pneg %p13
    $region11: #{gpt2_forward.23} parent=1 // pred_check_branch
      %16 = sbr.rel (%p14) target = $region13
    $region12: #{gpt2_forward.23} parent=1 // pred_region
      %17 = vst [vmem:[#allocation2] sm:$0xff] 0.0
      %18 = vst [vmem:[#allocation2 + $0x8] sm:$0xff] 0.0
      %19 = vst [vmem:[#allocation2 + $0x10] sm:$0xff] 0.0
      %20 = vst [vmem:[#allocation2 + $0x18] sm:$0xff] 0.0
      %21 = vst [vmem:[#allocation2 + $0x20] sm:$0xff] 0.0
      %22 = vst [vmem:[#allocation2 + $0x28] sm:$0xff] 0.0
      %23 = vst [vmem:[#allocation2 + $0x30] sm:$0xff] 0.0
      %24 = vst [vmem:[#allocation2 + $0x38] sm:$0xff] 0.0
      %25 = vst [vmem:[#allocation2 + $0x40] sm:$0xff] 0.0
      %26 = vst [vmem:[#allocation2 + $0x48] sm:$0xff] 0.0
      %27 = vst [vmem:[#allocation2 + $0x50] sm:$0xff] 0.0
      %28 = vst [vmem:[#allocation2 + $0x58] sm:$0xff] 0.0
      %29 = vst [vmem:[#allocation2 + $0x60] sm:$0xff] 0.0
      %30 = vst [vmem:[#allocation2 + $0x68] sm:$0xff] 0.0
      %31 = vst [vmem:[#allocation2 + $0x70] sm:$0xff] 0.0
      %32 = vst [vmem:[#allocation2 + $0x78] sm:$0xff] 0.0
    $region13: #{gpt2_forward.23} parent=1 // pred_fallthru
      _
    %v33 = vld [vmem:[#allocation2] sm:$0xff]
    %v34 = vld [vmem:[#allocation2 + $0x8] sm:$0xff]
    %v35 = vld [vmem:[#allocation2 + $0x10] sm:$0xff]
    %v36 = vld [vmem:[#allocation2 + $0x18] sm:$0xff]
    %v37 = vld [vmem:[#allocation2 + $0x20] sm:$0xff]
    %v38 = vld [vmem:[#allocation2 + $0x28] sm:$0xff]
    %v39 = vld [vmem:[#allocation2 + $0x30] sm:$0xff]
    %v40 = vld [vmem:[#allocation2 + $0x38] sm:$0xff]
    %v41 = vld [vmem:[#allocation2 + $0x40] sm:$0xff]
    %v42 = vld [vmem:[#allocation2 + $0x48] sm:$0xff]
    %v43 = vld [vmem:[#allocation2 + $0x50] sm:$0xff]
    %v44 = vld [vmem:[#allocation2 + $0x58] sm:$0xff]
    %v45 = vld [vmem:[#allocation2 + $0x60] sm:$0xff]
    %v46 = vld [vmem:[#allocation2 + $0x68] sm:$0xff]
    %v47 = vld [vmem:[#allocation2 + $0x70] sm:$0xff]
    %v48 = vld [vmem:[#allocation2 + $0x78] sm:$0xff]
    %v49 = vld [vmem:[%s0] sm:$0xf]
    %v50 = vld [vmem:[%s0 + $0x4] sm:$0xf]
    %v51 = vld [vmem:[%s0 + $0x8] sm:$0xf]
    %v52 = vld [vmem:[%s0 + $0xc] sm:$0xf]
    %v53 = vld [vmem:[%s1] sm:$0xff]
    %v54 = vld [vmem:[%s1 + $0x8] sm:$0xff]
    %v55 = vld [vmem:[%s1 + $0x10] sm:$0xff]
    %v56 = vld [vmem:[%s1 + $0x18] sm:$0xff]
    %v57 = vld [vmem:[%s1 + $0x20] sm:$0xff]
    %v58 = vld [vmem:[%s1 + $0x28] sm:$0xff]
    %v59 = vld [vmem:[%s1 + $0x30] sm:$0xff]
    %v60 = vld [vmem:[%s1 + $0x38] sm:$0xff]
    %v61 = vld [vmem:[%s1 + $0x40] sm:$0xff]
    %v62 = vld [vmem:[%s1 + $0x48] sm:$0xff]
    %v63 = vld [vmem:[%s1 + $0x50] sm:$0xff]
    %v64 = vld [vmem:[%s1 + $0x58] sm:$0xff]
    %v65 = vld [vmem:[%s1 + $0x60] sm:$0xff]
    %v66 = vld [vmem:[%s1 + $0x68] sm:$0xff]
    %v67 = vld [vmem:[%s1 + $0x70] sm:$0xff]
    %v68 = vld [vmem:[%s1 + $0x78] sm:$0xff]
    %v73 = vunpack.c.l.b16 %v49
    %v74 = vunpack.c.l.b16 %v50
    %v75 = vunpack.c.l.b16 %v51
    %v76 = vunpack.c.l.b16 %v52
    %v77 = vpack.c.b16 %v74, %v73
    %v78 = vpack.c.b16 %v76, %v75
    %v95 = vunpack.c.l.b16 %v53
    %v96 = vunpack.c.h.b16 %v53
    %v97 = vunpack.c.l.b16 %v54
    %v98 = vunpack.c.h.b16 %v54
    %v99 = vunpack.c.l.b16 %v55
    %v100 = vunpack.c.h.b16 %v55
    %v101 = vunpack.c.l.b16 %v56
    %v102 = vunpack.c.h.b16 %v56
    %v103 = vunpack.c.l.b16 %v57
    %v104 = vunpack.c.h.b16 %v57
    %v105 = vunpack.c.l.b16 %v58
    %v106 = vunpack.c.h.b16 %v58
    %v107 = vunpack.c.l.b16 %v59
    %v108 = vunpack.c.h.b16 %v59
    %v109 = vunpack.c.l.b16 %v60
    %v110 = vunpack.c.h.b16 %v60
    %v111 = vunpack.c.l.b16 %v61
    %v112 = vunpack.c.h.b16 %v61
    %v113 = vunpack.c.l.b16 %v62
    %v114 = vunpack.c.h.b16 %v62
    %v115 = vunpack.c.l.b16 %v63
    %v116 = vunpack.c.h.b16 %v63
    %v117 = vunpack.c.l.b16 %v64
    %v118 = vunpack.c.h.b16 %v64
    %v119 = vunpack.c.l.b16 %v65
    %v120 = vunpack.c.h.b16 %v65
    %v121 = vunpack.c.l.b16 %v66
    %v122 = vunpack.c.h.b16 %v66
    %v123 = vunpack.c.l.b16 %v67
    %v124 = vunpack.c.h.b16 %v67
    %v125 = vunpack.c.l.b16 %v68
    %v126 = vunpack.c.h.b16 %v68
    %v127 = vpack.c.b16 %v99, %v95
    %v128 = vpack.c.b16 %v100, %v96
    %v129 = vpack.c.b16 %v101, %v97
    %v130 = vpack.c.b16 %v102, %v98
    %v131 = vpack.c.b16 %v107, %v103
    %v132 = vpack.c.b16 %v108, %v104
    %v133 = vpack.c.b16 %v109, %v105
    %v134 = vpack.c.b16 %v110, %v106
    %v135 = vpack.c.b16 %v115, %v111
    %v136 = vpack.c.b16 %v116, %v112
    %v137 = vpack.c.b16 %v117, %v113
    %v138 = vpack.c.b16 %v118, %v114
    %v139 = vpack.c.b16 %v123, %v119
    %v140 = vpack.c.b16 %v124, %v120
    %v141 = vpack.c.b16 %v125, %v121
    %v142 = vpack.c.b16 %v126, %v122
    %vm159 = vcmask 523264
    %v161 = vsel %vm159, %v77, 0
    %v164 = vsel %vm159, %v78, 0
    %166 = vmatprep.subr.bf16.mxu0 %v128
    %167 = vmatpush1.bf16.msra.mxu0 %v127
    %168 = vmatprep.subr.bf16.mxu0 %v132
    %169 = vmatpush1.bf16.msra.mxu0 %v131
    %170 = vmatprep.subr.bf16.mxu0 %v136
    %171 = vmatpush1.bf16.msra.mxu0 %v135
    %172 = vmatprep.subr.bf16.mxu0 %v140
    %173 = vmatpush1.bf16.msra.mxu0 %v139
    %174 = vmatprep.subr.bf16.mxu0 0
    %175 = vmatpush1.bf16.msra.mxu0 0
    %176 = vmatprep.subr.bf16.mxu0 0
    %177 = vmatpush1.bf16.msra.mxu0 0
    %178 = vmatprep.subr.bf16.mxu0 0
    %179 = vmatpush1.bf16.msra.mxu0 0
    %180 = vmatprep.subr.bf16.mxu0 0
    %181 = vmatpush1.bf16.msra.mxu0 0
    %182 = vmatprep.subr.bf16.mxu0 0
    %183 = vmatpush1.bf16.msra.mxu0 0
    %184 = vmatprep.subr.bf16.mxu0 0
    %185 = vmatpush1.bf16.msra.mxu0 0
    %186 = vmatprep.subr.bf16.mxu0 0
    %187 = vmatpush1.bf16.msra.mxu0 0
    %188 = vmatprep.subr.bf16.mxu0 0
    %189 = vmatpush1.bf16.msra.mxu0 0
    %190 = vmatprep.subr.bf16.mxu0 0
    %191 = vmatpush1.bf16.msra.mxu0 0
    %192 = vmatprep.subr.bf16.mxu0 0
    %193 = vmatpush1.bf16.msra.mxu0 0
    %194 = vmatprep.subr.bf16.mxu0 0
    %195 = vmatpush1.bf16.msra.mxu0 0
    %196 = vmatprep.subr.bf16.mxu0 0
    %197 = vmatpush1.bf16.msra.mxu0 0
    %198 = vmatprep.mubr.bf16.mxu0 0
    %199 = vmatmul.mubr.bf16.gmra.mrb[0].mxu0 %v161
    %v200 = vpop.f32.mrb[0].mxu0
    %v201 = vadd.f32 0.0, %v200
    %v202 = vpop.f32.mrb[0].mxu0
    %v203 = vadd.f32 0.0, %v202
    %v204 = vpop.f32.mrb[0].mxu0
    %v205 = vadd.f32 0.0, %v204
    %v206 = vpop.f32.mrb[0].mxu0
    %v207 = vadd.f32 0.0, %v206
    %208 = vmatprep.mubr.bf16.mxu0 0
    %209 = vmatmul.mubr.bf16.gmra.mrb[0].mxu0 %v164
    %v210 = vpop.f32.mrb[0].mxu0
    %v211 = vadd.f32 0.0, %v210
    %v212 = vpop.f32.mrb[0].mxu0
    %v213 = vadd.f32 0.0, %v212
    %v214 = vpop.f32.mrb[0].mxu0
    %v215 = vadd.f32 0.0, %v214
    %v216 = vpop.f32.mrb[0].mxu0
    %v217 = vadd.f32 0.0, %v216
    %218 = vdwg.mxu0
    %219 = vmatprep.subr.bf16.mxu0 %v130
    %220 = vmatpush1.bf16.msra.mxu0 %v129
    %221 = vmatprep.subr.bf16.mxu0 %v134
    %222 = vmatpush1.bf16.msra.mxu0 %v133
    %223 = vmatprep.subr.bf16.mxu0 %v138
    %224 = vmatpush1.bf16.msra.mxu0 %v137
    %225 = vmatprep.subr.bf16.mxu0 %v142
    %226 = vmatpush1.bf16.msra.mxu0 %v141
    %227 = vmatprep.subr.bf16.mxu0 0
    %228 = vmatpush1.bf16.msra.mxu0 0
    %229 = vmatprep.subr.bf16.mxu0 0
    %230 = vmatpush1.bf16.msra.mxu0 0
    %231 = vmatprep.subr.bf16.mxu0 0
    %232 = vmatpush1.bf16.msra.mxu0 0
    %233 = vmatprep.subr.bf16.mxu0 0
    %234 = vmatpush1.bf16.msra.mxu0 0
    %235 = vmatprep.subr.bf16.mxu0 0
    %236 = vmatpush1.bf16.msra.mxu0 0
    %237 = vmatprep.subr.bf16.mxu0 0
    %238 = vmatpush1.bf16.msra.mxu0 0
    %239 = vmatprep.subr.bf16.mxu0 0
    %240 = vmatpush1.bf16.msra.mxu0 0
    %241 = vmatprep.subr.bf16.mxu0 0
    %242 = vmatpush1.bf16.msra.mxu0 0
    %243 = vmatprep.subr.bf16.mxu0 0
    %244 = vmatpush1.bf16.msra.mxu0 0
    %245 = vmatprep.subr.bf16.mxu0 0
    %246 = vmatpush1.bf16.msra.mxu0 0
    %247 = vmatprep.subr.bf16.mxu0 0
    %248 = vmatpush1.bf16.msra.mxu0 0
    %249 = vmatprep.subr.bf16.mxu0 0
    %250 = vmatpush1.bf16.msra.mxu0 0
    %251 = vmatprep.mubr.bf16.mxu0 0
    %252 = vmatmul.mubr.bf16.gmra.mrb[0].mxu0 %v161
    %v253 = vpop.f32.mrb[0].mxu0
    %v254 = vadd.f32 0.0, %v253
    %v255 = vpop.f32.mrb[0].mxu0
    %v256 = vadd.f32 0.0, %v255
    %v257 = vpop.f32.mrb[0].mxu0
    %v258 = vadd.f32 0.0, %v257
    %v259 = vpop.f32.mrb[0].mxu0
    %v260 = vadd.f32 0.0, %v259
    %261 = vmatprep.mubr.bf16.mxu0 0
    %262 = vmatmul.mubr.bf16.gmra.mrb[0].mxu0 %v164
    %v263 = vpop.f32.mrb[0].mxu0
    %v264 = vadd.f32 0.0, %v263
    %v265 = vpop.f32.mrb[0].mxu0
    %v266 = vadd.f32 0.0, %v265
    %v267 = vpop.f32.mrb[0].mxu0
    %v268 = vadd.f32 0.0, %v267
    %v269 = vpop.f32.mrb[0].mxu0
    %v270 = vadd.f32 0.0, %v269
    %271 = vdwg.mxu0
    %v272 = vadd.f32 %v33, %v201
    %v273 = vadd.f32 %v34, %v203
    %v274 = vadd.f32 %v35, %v254
    %v275 = vadd.f32 %v36, %v256
    %v276 = vadd.f32 %v37, %v205
    %v277 = vadd.f32 %v38, %v207
    %v278 = vadd.f32 %v39, %v258
    %v279 = vadd.f32 %v40, %v260
    %v280 = vadd.f32 %v41, %v211
    %v281 = vadd.f32 %v42, %v213
    %v282 = vadd.f32 %v43, %v264
    %v283 = vadd.f32 %v44, %v266
    %v284 = vadd.f32 %v45, %v215
    %v285 = vadd.f32 %v46, %v217
    %v286 = vadd.f32 %v47, %v268
    %v287 = vadd.f32 %v48, %v270
    %288 = vst [vmem:[#allocation2] sm:$0xff] %v272
    %289 = vst [vmem:[#allocation2 + $0x8] sm:$0xff] %v273
    %290 = vst [vmem:[#allocation2 + $0x10] sm:$0xff] %v274
    %291 = vst [vmem:[#allocation2 + $0x18] sm:$0xff] %v275
    %292 = vst [vmem:[#allocation2 + $0x20] sm:$0xff] %v276
    %293 = vst [vmem:[#allocation2 + $0x28] sm:$0xff] %v277
    %294 = vst [vmem:[#allocation2 + $0x30] sm:$0xff] %v278
    %295 = vst [vmem:[#allocation2 + $0x38] sm:$0xff] %v279
    %296 = vst [vmem:[#allocation2 + $0x40] sm:$0xff] %v280
    %297 = vst [vmem:[#allocation2 + $0x48] sm:$0xff] %v281
    %298 = vst [vmem:[#allocation2 + $0x50] sm:$0xff] %v282
    %299 = vst [vmem:[#allocation2 + $0x58] sm:$0xff] %v283
    %300 = vst [vmem:[#allocation2 + $0x60] sm:$0xff] %v284
    %301 = vst [vmem:[#allocation2 + $0x68] sm:$0xff] %v285
    %302 = vst [vmem:[#allocation2 + $0x70] sm:$0xff] %v286
    %303 = vst [vmem:[#allocation2 + $0x78] sm:$0xff] %v287
    // Predicated region
    $region14: #{gpt2_forward.23} parent=1 // pred_check
      %p304 = pneg %p13
    $region15: #{gpt2_forward.23} parent=1 // pred_check_branch
      %306 = sbr.rel (%p304) target = $region17
    $region16: #{gpt2_forward.23} parent=1 // pred_region
      %v307 = vld [vmem:[#allocation2] sm:$0xff]
      %v308 = vld [vmem:[#allocation2 + $0x8] sm:$0xff]
      %v309 = vld [vmem:[#allocation2 + $0x10] sm:$0xff]
      %v310 = vld [vmem:[#allocation2 + $0x18] sm:$0xff]
      %v311 = vld [vmem:[#allocation2 + $0x20] sm:$0xff]
      %v312 = vld [vmem:[#allocation2 + $0x28] sm:$0xff]
      %v313 = vld [vmem:[#allocation2 + $0x30] sm:$0xff]
      %v314 = vld [vmem:[#allocation2 + $0x38] sm:$0xff]
      %v315 = vld [vmem:[#allocation2 + $0x40] sm:$0xff]
      %v316 = vld [vmem:[#allocation2 + $0x48] sm:$0xff]
      %v317 = vld [vmem:[#allocation2 + $0x50] sm:$0xff]
      %v318 = vld [vmem:[#allocation2 + $0x58] sm:$0xff]
      %v319 = vld [vmem:[#allocation2 + $0x60] sm:$0xff]
      %v320 = vld [vmem:[#allocation2 + $0x68] sm:$0xff]
      %v321 = vld [vmem:[#allocation2 + $0x70] sm:$0xff]
      %v322 = vld [vmem:[#allocation2 + $0x78] sm:$0xff]
      %323 = vst [vmem:[#allocation3] sm:$0xff] %v307
      %324 = vst [vmem:[#allocation3 + $0x8] sm:$0xff] %v308
      %325 = vst [vmem:[#allocation3 + $0x10] sm:$0xff] %v309
      %326 = vst [vmem:[#allocation3 + $0x18] sm:$0xff] %v310
      %327 = vst [vmem:[#allocation3 + $0x20] sm:$0xff] %v311
      %328 = vst [vmem:[#allocation3 + $0x28] sm:$0xff] %v312
      %329 = vst [vmem:[#allocation3 + $0x30] sm:$0xff] %v313
      %330 = vst [vmem:[#allocation3 + $0x38] sm:$0xff] %v314
      %331 = vst [vmem:[#allocation3 + $0x40] sm:$0xff] %v315
      %332 = vst [vmem:[#allocation3 + $0x48] sm:$0xff] %v316
      %333 = vst [vmem:[#allocation3 + $0x50] sm:$0xff] %v317
      %334 = vst [vmem:[#allocation3 + $0x58] sm:$0xff] %v318
      %335 = vst [vmem:[#allocation3 + $0x60] sm:$0xff] %v319
      %336 = vst [vmem:[#allocation3 + $0x68] sm:$0xff] %v320
      %337 = vst [vmem:[#allocation3 + $0x70] sm:$0xff] %v321
      %338 = vst [vmem:[#allocation3 + $0x78] sm:$0xff] %v322
    $region17: #{gpt2_forward.23} parent=1 // pred_fallthru
      _
    // Predicated region
    $region18: #{gpt2_forward.23} parent=1 // pred_check
      _
    $region19: #{gpt2_forward.23} parent=1 // pred_check_branch
      %340 = sbr.rel (0) target = $region21
    $region20: #{gpt2_forward.23} parent=1 // pred_region
      %s342 = ssub.s32 2048, 2048
      %343 = vsyncadd [#allocation4], %s342
      %s344 = sshll.u32 [#allocation3], 4
      %s345 = int_to_ptr.vmem [resolvable:$true] %s344
      %350 = dma.vmem_to_hbm [thread:$0]  %s345, 2048, %s2, [#allocation4], 512, 512, 32
    $region21: #{gpt2_forward.23} parent=1 // pred_fallthru
      _
    // Predicated region
    $region22: #{gpt2_forward.23} parent=1 // pred_check
      _
    $region23: #{gpt2_forward.23} parent=1 // pred_check_branch
      %352 = sbr.rel (0) target = $region25
    $region24: #{gpt2_forward.23} parent=1 // pred_region
      %353 = dma.done [#allocation4], 2048
    $region25: #{gpt2_forward.23} parent=1 // pred_fallthru
      _
    %354 = vsyncpa [#allocation4], 1

</llo_original>
